<compile_context>
chip_gen: v7x
topology: tpu7x:2x2x1
jax: 0.10.0
libtpu: 0.0.40
codegen_flags: <defaults>
</compile_context>

<pallas_src>
import functools

import jax
import jax.numpy as jnp
import numpy as np
from jax.experimental import pallas as pl
from jax.experimental.pallas import tpu as pltpu


def _bert_insertion_kernel(sep_ref, labels_ref, seq_hbm, out_ref,
                           rows_buf, copy_sems, *, n, b_blk, b_real, eps):
    """One grid step handles `b_blk` batch examples.

    sep_ref    : SMEM (b_pad, n) int32    scalar-prefetched [SEP] positions
    labels_ref : VMEM (b_blk, 1) int32    labels for this batch block
    seq_hbm    : HBM  (b, s, d)           raw sequence_output (pl.ANY)
    out_ref    : VMEM (b_blk, n) f32      lanes [0, n-2] = sims, lane n-1 = loss
    rows_buf   : VMEM (b_blk, n, d)       gathered [SEP] rows (native dtype)
    copy_sems  : DMA semaphores (b_blk, n)
    """
    base = pl.program_id(0) * b_blk

    # ---- gather only the n [SEP] rows per example straight from HBM ------
    # All b_blk * n row DMAs are started before any wait so they overlap.
    copies = []
    for bi in range(b_blk):
        # Padded tail examples (base+bi >= b_real) just re-read a valid batch
        # row and are discarded by the wrapper; clamping keeps the DMA in
        # bounds (DMAs are the only accesses that get HW bounds checking).
        b_src = jnp.minimum(base + bi, b_real - 1)
        for j in range(n):
            row = sep_ref[base + bi, j]
            cp = pltpu.make_async_copy(
                seq_hbm.at[b_src, pl.ds(row, 1), :],
                rows_buf.at[bi, pl.ds(j, 1), :],
                copy_sems.at[bi, j])
            cp.start()
            copies.append(cp)
    for cp in copies:
        cp.wait()

    # ---- cosine similarity along the feature axis (torch dim=2) ----------
    utt = rows_buf[...].astype(jnp.float32)          # (b_blk, n, d) upcast here
    spk = utt[:, 0:1, :]                             # (b_blk, 1, d)
    rem = utt[:, 1:, :]                              # (b_blk, n-1, d)

    dots = jnp.sum(rem * spk, axis=2)                # (b_blk, n-1)
    ssq_r = jnp.sum(rem * rem, axis=2)               # (b_blk, n-1)
    ssq_s = jnp.sum(spk * spk, axis=2)               # (b_blk, 1)
    eps2 = jnp.float32(eps * eps)
    # max(||r||,eps)*max(||s||,eps) == sqrt(max(ssq_r,eps^2)*max(ssq_s,eps^2))
    # -> single EUP rsqrt, and matches torch.nn.CosineSimilarity's clamping.
    sim = dots * jax.lax.rsqrt(
        jnp.maximum(ssq_r, eps2) * jnp.maximum(ssq_s, eps2))   # (b_blk, n-1)

    # ---- per-example softmax cross-entropy over the n-1 logits -----------
    labels_col = labels_ref[...]                     # (b_blk, 1) int32
    m = jnp.max(sim, axis=1, keepdims=True)
    lse = m + jnp.log(jnp.sum(jnp.exp(sim - m), axis=1, keepdims=True))
    cls_ids = jax.lax.broadcasted_iota(jnp.int32, (b_blk, n - 1), 1)
    picked = jnp.sum(jnp.where(cls_ids == labels_col, sim, 0.0),
                     axis=1, keepdims=True)
    loss_col = lse - picked                          # (b_blk, 1)

    # Single lane-packed output slab: sims in lanes [0, n-2], loss in lane n-1.
    out_ref[:, 0:n - 1] = sim
    out_ref[:, n - 1:n] = loss_col


def bert_insertion_forward(sequence_output, sep_positions, labels,
                           eps=1e-6, batch_block=8):
    """Pallas implementation of BertInsertion.forward (labels is not None).

    sequence_output is consumed in its native dtype (bf16 or f32) — no
    wrapper-side cast; the kernel upcasts the gathered rows to f32.
    """
    b, s, d = sequence_output.shape
    _, n = sep_positions.shape
    nm1 = n - 1

    # Batch block must be a multiple of 8 (sublane alignment of the outputs).
    b_blk = max(8, 8 * (batch_block // 8))
    b_pad = pl.cdiv(b, b_blk) * b_blk

    sep32 = sep_positions.astype(jnp.int32)
    lab32 = labels.astype(jnp.int32)
    if b_pad != b:
        sep32 = jnp.pad(sep32, ((0, b_pad - b), (0, 0)))   # pad with row 0
        lab32 = jnp.pad(lab32, ((0, b_pad - b),))          # pad with class 0
    lab2d = lab32.reshape(b_pad, 1)

    kernel = functools.partial(_bert_insertion_kernel,
                               n=n, b_blk=b_blk, b_real=b, eps=eps)

    grid_spec = pltpu.PrefetchScalarGridSpec(
        num_scalar_prefetch=1,                    # sep_positions -> SMEM
        grid=(b_pad // b_blk,),
        in_specs=[
            pl.BlockSpec((b_blk, 1), lambda i, sep: (i, 0)),   # labels (VMEM)
            pl.BlockSpec(memory_space=pl.ANY),                 # seq_out (HBM)
        ],
        out_specs=pl.BlockSpec((b_blk, n), lambda i, sep: (i, 0)),
        scratch_shapes=[
            pltpu.VMEM((b_blk, n, d), sequence_output.dtype),  # gathered rows
            pltpu.SemaphoreType.DMA((b_blk, n)),
        ],
    )

    out = pl.pallas_call(
        kernel,
        grid_spec=grid_spec,
        out_shape=jax.ShapeDtypeStruct((b_pad, n), jnp.float32),
        compiler_params=pltpu.CompilerParams(
            dimension_semantics=("parallel",)),    # independent batch blocks
    )(sep32, lab2d, sequence_output)

    sim_scores = out[:b, :nm1]                     # (b, n-1)
    loss = jnp.mean(out[:b, nm1])                  # CrossEntropyLoss 'mean'
    return sim_scores, loss


def _reference_forward(sequence_output, sep_positions, labels, eps=1e-6):
    """Pure-JAX reference mirroring the PyTorch forward (f32 math)."""
    x = sequence_output.astype(jnp.float32)
    b, s, d = x.shape
    _, n = sep_positions.shape
    idx = jnp.broadcast_to(sep_positions[:, :, None].astype(jnp.int32),
                           (b, n, d))
    utt = jnp.take_along_axis(x, idx, axis=1)                 # (b, n, d)
    spk = utt[:, 0:1, :]                                      # (b, 1, d)
    rem = utt[:, 1:, :]                                       # (b, n-1, d)
    dots = jnp.sum(rem * spk, axis=2)
    norm_r = jnp.maximum(jnp.linalg.norm(rem, axis=2), eps)
    norm_s = jnp.maximum(jnp.linalg.norm(spk, axis=2), eps)
    sim = dots / (norm_r * norm_s)                            # (b, n-1)
    m = jnp.max(sim, axis=1, keepdims=True)
    lse = (m + jnp.log(jnp.sum(jnp.exp(sim - m), axis=1, keepdims=True)))[:, 0]
    picked = jnp.take_along_axis(sim, labels[:, None], axis=1)[:, 0]
    loss = jnp.mean(lse - picked)
    return sim, loss


if __name__ == "__main__":
    key = jax.random.PRNGKey(0)
    b, s, d, n = 5, 16, 128, 4          # batch, seq_len, hidden dim, #choices
                                        # (b=5 also exercises batch padding)

    # Native-dtype activations (f32 here; bf16 is passed through the same
    # path with no wrapper cast — the kernel upcasts after the row gather).
    sequence_output = jax.random.normal(key, (b, s, d), dtype=jnp.float32)
    sep_positions = jnp.array([[0, 3, 7, 12],
                               [2, 5, 9, 15],
                               [1, 4, 8, 11],
                               [0, 2, 6, 10],
                               [3, 6, 9, 13]], dtype=jnp.int32)   # (b, n)
    labels = jnp.array([1, 2, 0, 1, 2], dtype=jnp.int32)          # (b,)

    sim_scores, loss = bert_insertion_forward(sequence_output,
                                              sep_positions, labels)
    sim_scores = jax.block_until_ready(sim_scores)
    loss = jax.block_until_ready(loss)

    ref_sim, ref_loss = _reference_forward(sequence_output, sep_positions,
                                           labels)
    np.testing.assert_allclose(np.asarray(sim_scores), np.asarray(ref_sim),
                               rtol=1e-5, atol=2e-5)
    np.testing.assert_allclose(np.asarray(loss), np.asarray(ref_loss),
                               rtol=1e-5, atol=2e-5)

    print("KERNEL_OK")
</pallas_src>

<mosaic_0001>
module attributes {stable_mosaic.version = 11 : i64} {
  func.func @_bert_insertion_kernel(%arg0: i32, %arg1: memref<8x4xi32, #tpu.memory_space<smem>>, %arg2: memref<8x1xi32, #tpu.memory_space<vmem>>, %arg3: memref<5x16x128xf32, #tpu.memory_space<any>>, %arg4: memref<8x4xf32, #tpu.memory_space<vmem>>, %arg5: memref<8x4x128xf32, #tpu.memory_space<vmem>>, %arg6: memref<8x4x!tpu.dma_semaphore, #tpu.memory_space<semaphore_mem>>) attributes {dimension_semantics = [#tpu.dimension_semantics<parallel>], iteration_bounds = array<i64: 1>, scalar_prefetch = 1 : i64, scratch_operands = 2 : i64, tpu.core_type = #tpu.core_type<tc>, window_params = [{transform_indices = @transform_0, window_bounds = array<i64: 8, 1>}, {}, {transform_indices = @transform_2, window_bounds = array<i64: 8, 4>}]} {
    %c8_i32 = arith.constant 8 : i32
    %0 = arith.muli %arg0, %c8_i32 : i32
    %c0_i32 = arith.constant 0 : i32
    %1 = arith.addi %0, %c0_i32 : i32
    %c4_i32 = arith.constant 4 : i32
    %2 = arith.minsi %1, %c4_i32 : i32
    %c0_i32_0 = arith.constant 0 : i32
    %3 = arith.addi %0, %c0_i32_0 : i32
    %4 = arith.index_cast %3 : i32 to index
    %c0 = arith.constant 0 : index
    %5 = memref.load %arg1[%4, %c0] : memref<8x4xi32, #tpu.memory_space<smem>>
    %c0_i32_1 = arith.constant 0 : i32
    %c0_i32_2 = arith.constant 0 : i32
    %c0_i32_3 = arith.constant 0 : i32
    %c0_i32_4 = arith.constant 0 : i32
    %6 = tpu.memref_slice %arg3[%2, %5, %c0_i32_4] : memref<5x16x128xf32, #tpu.memory_space<any>> -> memref<1x1x128xf32, #tpu.memory_space<any>>
    %7 = tpu.memref_squeeze %6 : memref<1x1x128xf32, #tpu.memory_space<any>> -> memref<1x128xf32, #tpu.memory_space<any>>
    %c0_i32_5 = arith.constant 0 : i32
    %c0_i32_6 = arith.constant 0 : i32
    %8 = tpu.memref_slice %arg5[%c0_i32_1, %c0_i32_5, %c0_i32_6] : memref<8x4x128xf32, #tpu.memory_space<vmem>> -> memref<1x1x128xf32, #tpu.memory_space<vmem>>
    %9 = tpu.memref_squeeze %8 : memref<1x1x128xf32, #tpu.memory_space<vmem>> -> memref<1x128xf32, #tpu.memory_space<vmem>>
    %10 = tpu.memref_slice %arg6[%c0_i32_2, %c0_i32_3] : memref<8x4x!tpu.dma_semaphore, #tpu.memory_space<semaphore_mem>> -> memref<1x1x!tpu.dma_semaphore, #tpu.memory_space<semaphore_mem>>
    %11 = tpu.memref_squeeze %10 : memref<1x1x!tpu.dma_semaphore, #tpu.memory_space<semaphore_mem>> -> memref<!tpu.dma_semaphore, #tpu.memory_space<semaphore_mem>>
    tpu.enqueue_dma source(%7 : memref<1x128xf32, #tpu.memory_space<any>>) target(%9 : memref<1x128xf32, #tpu.memory_space<vmem>>) target_semaphore(%11 : memref<!tpu.dma_semaphore, #tpu.memory_space<semaphore_mem>>)
    %c0_i32_7 = arith.constant 0 : i32
    %12 = arith.addi %0, %c0_i32_7 : i32
    %13 = arith.index_cast %12 : i32 to index
    %c1 = arith.constant 1 : index
    %14 = memref.load %arg1[%13, %c1] : memref<8x4xi32, #tpu.memory_space<smem>>
    %c0_i32_8 = arith.constant 0 : i32
    %c0_i32_9 = arith.constant 0 : i32
    %c1_i32 = arith.constant 1 : i32
    %c0_i32_10 = arith.constant 0 : i32
    %15 = tpu.memref_slice %arg3[%2, %14, %c0_i32_10] : memref<5x16x128xf32, #tpu.memory_space<any>> -> memref<1x1x128xf32, #tpu.memory_space<any>>
    %16 = tpu.memref_squeeze %15 : memref<1x1x128xf32, #tpu.memory_space<any>> -> memref<1x128xf32, #tpu.memory_space<any>>
    %c1_i32_11 = arith.constant 1 : i32
    %c0_i32_12 = arith.constant 0 : i32
    %17 = tpu.memref_slice %arg5[%c0_i32_8, %c1_i32_11, %c0_i32_12] : memref<8x4x128xf32, #tpu.memory_space<vmem>> -> memref<1x1x128xf32, #tpu.memory_space<vmem>>
    %18 = tpu.memref_squeeze %17 : memref<1x1x128xf32, #tpu.memory_space<vmem>> -> memref<1x128xf32, #tpu.memory_space<vmem>>
    %19 = tpu.memref_slice %arg6[%c0_i32_9, %c1_i32] : memref<8x4x!tpu.dma_semaphore, #tpu.memory_space<semaphore_mem>> -> memref<1x1x!tpu.dma_semaphore, #tpu.memory_space<semaphore_mem>>
    %20 = tpu.memref_squeeze %19 : memref<1x1x!tpu.dma_semaphore, #tpu.memory_space<semaphore_mem>> -> memref<!tpu.dma_semaphore, #tpu.memory_space<semaphore_mem>>
    tpu.enqueue_dma source(%16 : memref<1x128xf32, #tpu.memory_space<any>>) target(%18 : memref<1x128xf32, #tpu.memory_space<vmem>>) target_semaphore(%20 : memref<!tpu.dma_semaphore, #tpu.memory_space<semaphore_mem>>)
    %c0_i32_13 = arith.constant 0 : i32
    %21 = arith.addi %0, %c0_i32_13 : i32
    %22 = arith.index_cast %21 : i32 to index
    %c2 = arith.constant 2 : index
    %23 = memref.load %arg1[%22, %c2] : memref<8x4xi32, #tpu.memory_space<smem>>
    %c0_i32_14 = arith.constant 0 : i32
    %c0_i32_15 = arith.constant 0 : i32
    %c2_i32 = arith.constant 2 : i32
    %c0_i32_16 = arith.constant 0 : i32
    %24 = tpu.memref_slice %arg3[%2, %23, %c0_i32_16] : memref<5x16x128xf32, #tpu.memory_space<any>> -> memref<1x1x128xf32, #tpu.memory_space<any>>
    %25 = tpu.memref_squeeze %24 : memref<1x1x128xf32, #tpu.memory_space<any>> -> memref<1x128xf32, #tpu.memory_space<any>>
    %c2_i32_17 = arith.constant 2 : i32
    %c0_i32_18 = arith.constant 0 : i32
    %26 = tpu.memref_slice %arg5[%c0_i32_14, %c2_i32_17, %c0_i32_18] : memref<8x4x128xf32, #tpu.memory_space<vmem>> -> memref<1x1x128xf32, #tpu.memory_space<vmem>>
    %27 = tpu.memref_squeeze %26 : memref<1x1x128xf32, #tpu.memory_space<vmem>> -> memref<1x128xf32, #tpu.memory_space<vmem>>
    %28 = tpu.memref_slice %arg6[%c0_i32_15, %c2_i32] : memref<8x4x!tpu.dma_semaphore, #tpu.memory_space<semaphore_mem>> -> memref<1x1x!tpu.dma_semaphore, #tpu.memory_space<semaphore_mem>>
    %29 = tpu.memref_squeeze %28 : memref<1x1x!tpu.dma_semaphore, #tpu.memory_space<semaphore_mem>> -> memref<!tpu.dma_semaphore, #tpu.memory_space<semaphore_mem>>
    tpu.enqueue_dma source(%25 : memref<1x128xf32, #tpu.memory_space<any>>) target(%27 : memref<1x128xf32, #tpu.memory_space<vmem>>) target_semaphore(%29 : memref<!tpu.dma_semaphore, #tpu.memory_space<semaphore_mem>>)
    %c0_i32_19 = arith.constant 0 : i32
    %30 = arith.addi %0, %c0_i32_19 : i32
    %31 = arith.index_cast %30 : i32 to index
    %c3 = arith.constant 3 : index
    %32 = memref.load %arg1[%31, %c3] : memref<8x4xi32, #tpu.memory_space<smem>>
    %c0_i32_20 = arith.constant 0 : i32
    %c0_i32_21 = arith.constant 0 : i32
    %c3_i32 = arith.constant 3 : i32
    %c0_i32_22 = arith.constant 0 : i32
    %33 = tpu.memref_slice %arg3[%2, %32, %c0_i32_22] : memref<5x16x128xf32, #tpu.memory_space<any>> -> memref<1x1x128xf32, #tpu.memory_space<any>>
    %34 = tpu.memref_squeeze %33 : memref<1x1x128xf32, #tpu.memory_space<any>> -> memref<1x128xf32, #tpu.memory_space<any>>
    %c3_i32_23 = arith.constant 3 : i32
    %c0_i32_24 = arith.constant 0 : i32
    %35 = tpu.memref_slice %arg5[%c0_i32_20, %c3_i32_23, %c0_i32_24] : memref<8x4x128xf32, #tpu.memory_space<vmem>> -> memref<1x1x128xf32, #tpu.memory_space<vmem>>
    %36 = tpu.memref_squeeze %35 : memref<1x1x128xf32, #tpu.memory_space<vmem>> -> memref<1x128xf32, #tpu.memory_space<vmem>>
    %37 = tpu.memref_slice %arg6[%c0_i32_21, %c3_i32] : memref<8x4x!tpu.dma_semaphore, #tpu.memory_space<semaphore_mem>> -> memref<1x1x!tpu.dma_semaphore, #tpu.memory_space<semaphore_mem>>
    %38 = tpu.memref_squeeze %37 : memref<1x1x!tpu.dma_semaphore, #tpu.memory_space<semaphore_mem>> -> memref<!tpu.dma_semaphore, #tpu.memory_space<semaphore_mem>>
    tpu.enqueue_dma source(%34 : memref<1x128xf32, #tpu.memory_space<any>>) target(%36 : memref<1x128xf32, #tpu.memory_space<vmem>>) target_semaphore(%38 : memref<!tpu.dma_semaphore, #tpu.memory_space<semaphore_mem>>)
    %c1_i32_25 = arith.constant 1 : i32
    %39 = arith.addi %0, %c1_i32_25 : i32
    %c4_i32_26 = arith.constant 4 : i32
    %40 = arith.minsi %39, %c4_i32_26 : i32
    %c1_i32_27 = arith.constant 1 : i32
    %41 = arith.addi %0, %c1_i32_27 : i32
    %42 = arith.index_cast %41 : i32 to index
    %c0_28 = arith.constant 0 : index
    %43 = memref.load %arg1[%42, %c0_28] : memref<8x4xi32, #tpu.memory_space<smem>>
    %c1_i32_29 = arith.constant 1 : i32
    %c1_i32_30 = arith.constant 1 : i32
    %c0_i32_31 = arith.constant 0 : i32
    %c0_i32_32 = arith.constant 0 : i32
    %44 = tpu.memref_slice %arg3[%40, %43, %c0_i32_32] : memref<5x16x128xf32, #tpu.memory_space<any>> -> memref<1x1x128xf32, #tpu.memory_space<any>>
    %45 = tpu.memref_squeeze %44 : memref<1x1x128xf32, #tpu.memory_space<any>> -> memref<1x128xf32, #tpu.memory_space<any>>
    %c0_i32_33 = arith.constant 0 : i32
    %c0_i32_34 = arith.constant 0 : i32
    %46 = tpu.memref_slice %arg5[%c1_i32_29, %c0_i32_33, %c0_i32_34] : memref<8x4x128xf32, #tpu.memory_space<vmem>> -> memref<1x1x128xf32, #tpu.memory_space<vmem>>
    %47 = tpu.memref_squeeze %46 : memref<1x1x128xf32, #tpu.memory_space<vmem>> -> memref<1x128xf32, #tpu.memory_space<vmem>>
    %48 = tpu.memref_slice %arg6[%c1_i32_30, %c0_i32_31] : memref<8x4x!tpu.dma_semaphore, #tpu.memory_space<semaphore_mem>> -> memref<1x1x!tpu.dma_semaphore, #tpu.memory_space<semaphore_mem>>
    %49 = tpu.memref_squeeze %48 : memref<1x1x!tpu.dma_semaphore, #tpu.memory_space<semaphore_mem>> -> memref<!tpu.dma_semaphore, #tpu.memory_space<semaphore_mem>>
    tpu.enqueue_dma source(%45 : memref<1x128xf32, #tpu.memory_space<any>>) target(%47 : memref<1x128xf32, #tpu.memory_space<vmem>>) target_semaphore(%49 : memref<!tpu.dma_semaphore, #tpu.memory_space<semaphore_mem>>)
    %c1_i32_35 = arith.constant 1 : i32
    %50 = arith.addi %0, %c1_i32_35 : i32
    %51 = arith.index_cast %50 : i32 to index
    %c1_36 = arith.constant 1 : index
    %52 = memref.load %arg1[%51, %c1_36] : memref<8x4xi32, #tpu.memory_space<smem>>
    %c1_i32_37 = arith.constant 1 : i32
    %c1_i32_38 = arith.constant 1 : i32
    %c1_i32_39 = arith.constant 1 : i32
    %c0_i32_40 = arith.constant 0 : i32
    %53 = tpu.memref_slice %arg3[%40, %52, %c0_i32_40] : memref<5x16x128xf32, #tpu.memory_space<any>> -> memref<1x1x128xf32, #tpu.memory_space<any>>
    %54 = tpu.memref_squeeze %53 : memref<1x1x128xf32, #tpu.memory_space<any>> -> memref<1x128xf32, #tpu.memory_space<any>>
    %c1_i32_41 = arith.constant 1 : i32
    %c0_i32_42 = arith.constant 0 : i32
    %55 = tpu.memref_slice %arg5[%c1_i32_37, %c1_i32_41, %c0_i32_42] : memref<8x4x128xf32, #tpu.memory_space<vmem>> -> memref<1x1x128xf32, #tpu.memory_space<vmem>>
    %56 = tpu.memref_squeeze %55 : memref<1x1x128xf32, #tpu.memory_space<vmem>> -> memref<1x128xf32, #tpu.memory_space<vmem>>
    %57 = tpu.memref_slice %arg6[%c1_i32_38, %c1_i32_39] : memref<8x4x!tpu.dma_semaphore, #tpu.memory_space<semaphore_mem>> -> memref<1x1x!tpu.dma_semaphore, #tpu.memory_space<semaphore_mem>>
    %58 = tpu.memref_squeeze %57 : memref<1x1x!tpu.dma_semaphore, #tpu.memory_space<semaphore_mem>> -> memref<!tpu.dma_semaphore, #tpu.memory_space<semaphore_mem>>
    tpu.enqueue_dma source(%54 : memref<1x128xf32, #tpu.memory_space<any>>) target(%56 : memref<1x128xf32, #tpu.memory_space<vmem>>) target_semaphore(%58 : memref<!tpu.dma_semaphore, #tpu.memory_space<semaphore_mem>>)
    %c1_i32_43 = arith.constant 1 : i32
    %59 = arith.addi %0, %c1_i32_43 : i32
    %60 = arith.index_cast %59 : i32 to index
    %c2_44 = arith.constant 2 : index
    %61 = memref.load %arg1[%60, %c2_44] : memref<8x4xi32, #tpu.memory_space<smem>>
    %c1_i32_45 = arith.constant 1 : i32
    %c1_i32_46 = arith.constant 1 : i32
    %c2_i32_47 = arith.constant 2 : i32
    %c0_i32_48 = arith.constant 0 : i32
    %62 = tpu.memref_slice %arg3[%40, %61, %c0_i32_48] : memref<5x16x128xf32, #tpu.memory_space<any>> -> memref<1x1x128xf32, #tpu.memory_space<any>>
    %63 = tpu.memref_squeeze %62 : memref<1x1x128xf32, #tpu.memory_space<any>> -> memref<1x128xf32, #tpu.memory_space<any>>
    %c2_i32_49 = arith.constant 2 : i32
    %c0_i32_50 = arith.constant 0 : i32
    %64 = tpu.memref_slice %arg5[%c1_i32_45, %c2_i32_49, %c0_i32_50] : memref<8x4x128xf32, #tpu.memory_space<vmem>> -> memref<1x1x128xf32, #tpu.memory_space<vmem>>
    %65 = tpu.memref_squeeze %64 : memref<1x1x128xf32, #tpu.memory_space<vmem>> -> memref<1x128xf32, #tpu.memory_space<vmem>>
    %66 = tpu.memref_slice %arg6[%c1_i32_46, %c2_i32_47] : memref<8x4x!tpu.dma_semaphore, #tpu.memory_space<semaphore_mem>> -> memref<1x1x!tpu.dma_semaphore, #tpu.memory_space<semaphore_mem>>
    %67 = tpu.memref_squeeze %66 : memref<1x1x!tpu.dma_semaphore, #tpu.memory_space<semaphore_mem>> -> memref<!tpu.dma_semaphore, #tpu.memory_space<semaphore_mem>>
    tpu.enqueue_dma source(%63 : memref<1x128xf32, #tpu.memory_space<any>>) target(%65 : memref<1x128xf32, #tpu.memory_space<vmem>>) target_semaphore(%67 : memref<!tpu.dma_semaphore, #tpu.memory_space<semaphore_mem>>)
    %c1_i32_51 = arith.constant 1 : i32
    %68 = arith.addi %0, %c1_i32_51 : i32
    %69 = arith.index_cast %68 : i32 to index
    %c3_52 = arith.constant 3 : index
    %70 = memref.load %arg1[%69, %c3_52] : memref<8x4xi32, #tpu.memory_space<smem>>
    %c1_i32_53 = arith.constant 1 : i32
    %c1_i32_54 = arith.constant 1 : i32
    %c3_i32_55 = arith.constant 3 : i32
    %c0_i32_56 = arith.constant 0 : i32
    %71 = tpu.memref_slice %arg3[%40, %70, %c0_i32_56] : memref<5x16x128xf32, #tpu.memory_space<any>> -> memref<1x1x128xf32, #tpu.memory_space<any>>
    %72 = tpu.memref_squeeze %71 : memref<1x1x128xf32, #tpu.memory_space<any>> -> memref<1x128xf32, #tpu.memory_space<any>>
    %c3_i32_57 = arith.constant 3 : i32
    %c0_i32_58 = arith.constant 0 : i32
    %73 = tpu.memref_slice %arg5[%c1_i32_53, %c3_i32_57, %c0_i32_58] : memref<8x4x128xf32, #tpu.memory_space<vmem>> -> memref<1x1x128xf32, #tpu.memory_space<vmem>>
    %74 = tpu.memref_squeeze %73 : memref<1x1x128xf32, #tpu.memory_space<vmem>> -> memref<1x128xf32, #tpu.memory_space<vmem>>
    %75 = tpu.memref_slice %arg6[%c1_i32_54, %c3_i32_55] : memref<8x4x!tpu.dma_semaphore, #tpu.memory_space<semaphore_mem>> -> memref<1x1x!tpu.dma_semaphore, #tpu.memory_space<semaphore_mem>>
    %76 = tpu.memref_squeeze %75 : memref<1x1x!tpu.dma_semaphore, #tpu.memory_space<semaphore_mem>> -> memref<!tpu.dma_semaphore, #tpu.memory_space<semaphore_mem>>
    tpu.enqueue_dma source(%72 : memref<1x128xf32, #tpu.memory_space<any>>) target(%74 : memref<1x128xf32, #tpu.memory_space<vmem>>) target_semaphore(%76 : memref<!tpu.dma_semaphore, #tpu.memory_space<semaphore_mem>>)
    %c2_i32_59 = arith.constant 2 : i32
    %77 = arith.addi %0, %c2_i32_59 : i32
    %c4_i32_60 = arith.constant 4 : i32
    %78 = arith.minsi %77, %c4_i32_60 : i32
    %c2_i32_61 = arith.constant 2 : i32
    %79 = arith.addi %0, %c2_i32_61 : i32
    %80 = arith.index_cast %79 : i32 to index
    %c0_62 = arith.constant 0 : index
    %81 = memref.load %arg1[%80, %c0_62] : memref<8x4xi32, #tpu.memory_space<smem>>
    %c2_i32_63 = arith.constant 2 : i32
    %c2_i32_64 = arith.constant 2 : i32
    %c0_i32_65 = arith.constant 0 : i32
    %c0_i32_66 = arith.constant 0 : i32
    %82 = tpu.memref_slice %arg3[%78, %81, %c0_i32_66] : memref<5x16x128xf32, #tpu.memory_space<any>> -> memref<1x1x128xf32, #tpu.memory_space<any>>
    %83 = tpu.memref_squeeze %82 : memref<1x1x128xf32, #tpu.memory_space<any>> -> memref<1x128xf32, #tpu.memory_space<any>>
    %c0_i32_67 = arith.constant 0 : i32
    %c0_i32_68 = arith.constant 0 : i32
    %84 = tpu.memref_slice %arg5[%c2_i32_63, %c0_i32_67, %c0_i32_68] : memref<8x4x128xf32, #tpu.memory_space<vmem>> -> memref<1x1x128xf32, #tpu.memory_space<vmem>>
    %85 = tpu.memref_squeeze %84 : memref<1x1x128xf32, #tpu.memory_space<vmem>> -> memref<1x128xf32, #tpu.memory_space<vmem>>
    %86 = tpu.memref_slice %arg6[%c2_i32_64, %c0_i32_65] : memref<8x4x!tpu.dma_semaphore, #tpu.memory_space<semaphore_mem>> -> memref<1x1x!tpu.dma_semaphore, #tpu.memory_space<semaphore_mem>>
    %87 = tpu.memref_squeeze %86 : memref<1x1x!tpu.dma_semaphore, #tpu.memory_space<semaphore_mem>> -> memref<!tpu.dma_semaphore, #tpu.memory_space<semaphore_mem>>
    tpu.enqueue_dma source(%83 : memref<1x128xf32, #tpu.memory_space<any>>) target(%85 : memref<1x128xf32, #tpu.memory_space<vmem>>) target_semaphore(%87 : memref<!tpu.dma_semaphore, #tpu.memory_space<semaphore_mem>>)
    %c2_i32_69 = arith.constant 2 : i32
    %88 = arith.addi %0, %c2_i32_69 : i32
    %89 = arith.index_cast %88 : i32 to index
    %c1_70 = arith.constant 1 : index
    %90 = memref.load %arg1[%89, %c1_70] : memref<8x4xi32, #tpu.memory_space<smem>>
    %c2_i32_71 = arith.constant 2 : i32
    %c2_i32_72 = arith.constant 2 : i32
    %c1_i32_73 = arith.constant 1 : i32
    %c0_i32_74 = arith.constant 0 : i32
    %91 = tpu.memref_slice %arg3[%78, %90, %c0_i32_74] : memref<5x16x128xf32, #tpu.memory_space<any>> -> memref<1x1x128xf32, #tpu.memory_space<any>>
    %92 = tpu.memref_squeeze %91 : memref<1x1x128xf32, #tpu.memory_space<any>> -> memref<1x128xf32, #tpu.memory_space<any>>
    %c1_i32_75 = arith.constant 1 : i32
    %c0_i32_76 = arith.constant 0 : i32
    %93 = tpu.memref_slice %arg5[%c2_i32_71, %c1_i32_75, %c0_i32_76] : memref<8x4x128xf32, #tpu.memory_space<vmem>> -> memref<1x1x128xf32, #tpu.memory_space<vmem>>
    %94 = tpu.memref_squeeze %93 : memref<1x1x128xf32, #tpu.memory_space<vmem>> -> memref<1x128xf32, #tpu.memory_space<vmem>>
    %95 = tpu.memref_slice %arg6[%c2_i32_72, %c1_i32_73] : memref<8x4x!tpu.dma_semaphore, #tpu.memory_space<semaphore_mem>> -> memref<1x1x!tpu.dma_semaphore, #tpu.memory_space<semaphore_mem>>
    %96 = tpu.memref_squeeze %95 : memref<1x1x!tpu.dma_semaphore, #tpu.memory_space<semaphore_mem>> -> memref<!tpu.dma_semaphore, #tpu.memory_space<semaphore_mem>>
    tpu.enqueue_dma source(%92 : memref<1x128xf32, #tpu.memory_space<any>>) target(%94 : memref<1x128xf32, #tpu.memory_space<vmem>>) target_semaphore(%96 : memref<!tpu.dma_semaphore, #tpu.memory_space<semaphore_mem>>)
    %c2_i32_77 = arith.constant 2 : i32
    %97 = arith.addi %0, %c2_i32_77 : i32
    %98 = arith.index_cast %97 : i32 to index
    %c2_78 = arith.constant 2 : index
    %99 = memref.load %arg1[%98, %c2_78] : memref<8x4xi32, #tpu.memory_space<smem>>
    %c2_i32_79 = arith.constant 2 : i32
    %c2_i32_80 = arith.constant 2 : i32
    %c2_i32_81 = arith.constant 2 : i32
    %c0_i32_82 = arith.constant 0 : i32
    %100 = tpu.memref_slice %arg3[%78, %99, %c0_i32_82] : memref<5x16x128xf32, #tpu.memory_space<any>> -> memref<1x1x128xf32, #tpu.memory_space<any>>
    %101 = tpu.memref_squeeze %100 : memref<1x1x128xf32, #tpu.memory_space<any>> -> memref<1x128xf32, #tpu.memory_space<any>>
    %c2_i32_83 = arith.constant 2 : i32
    %c0_i32_84 = arith.constant 0 : i32
    %102 = tpu.memref_slice %arg5[%c2_i32_79, %c2_i32_83, %c0_i32_84] : memref<8x4x128xf32, #tpu.memory_space<vmem>> -> memref<1x1x128xf32, #tpu.memory_space<vmem>>
    %103 = tpu.memref_squeeze %102 : memref<1x1x128xf32, #tpu.memory_space<vmem>> -> memref<1x128xf32, #tpu.memory_space<vmem>>
    %104 = tpu.memref_slice %arg6[%c2_i32_80, %c2_i32_81] : memref<8x4x!tpu.dma_semaphore, #tpu.memory_space<semaphore_mem>> -> memref<1x1x!tpu.dma_semaphore, #tpu.memory_space<semaphore_mem>>
    %105 = tpu.memref_squeeze %104 : memref<1x1x!tpu.dma_semaphore, #tpu.memory_space<semaphore_mem>> -> memref<!tpu.dma_semaphore, #tpu.memory_space<semaphore_mem>>
    tpu.enqueue_dma source(%101 : memref<1x128xf32, #tpu.memory_space<any>>) target(%103 : memref<1x128xf32, #tpu.memory_space<vmem>>) target_semaphore(%105 : memref<!tpu.dma_semaphore, #tpu.memory_space<semaphore_mem>>)
    %c2_i32_85 = arith.constant 2 : i32
    %106 = arith.addi %0, %c2_i32_85 : i32
    %107 = arith.index_cast %106 : i32 to index
    %c3_86 = arith.constant 3 : index
    %108 = memref.load %arg1[%107, %c3_86] : memref<8x4xi32, #tpu.memory_space<smem>>
    %c2_i32_87 = arith.constant 2 : i32
    %c2_i32_88 = arith.constant 2 : i32
    %c3_i32_89 = arith.constant 3 : i32
    %c0_i32_90 = arith.constant 0 : i32
    %109 = tpu.memref_slice %arg3[%78, %108, %c0_i32_90] : memref<5x16x128xf32, #tpu.memory_space<any>> -> memref<1x1x128xf32, #tpu.memory_space<any>>
    %110 = tpu.memref_squeeze %109 : memref<1x1x128xf32, #tpu.memory_space<any>> -> memref<1x128xf32, #tpu.memory_space<any>>
    %c3_i32_91 = arith.constant 3 : i32
    %c0_i32_92 = arith.constant 0 : i32
    %111 = tpu.memref_slice %arg5[%c2_i32_87, %c3_i32_91, %c0_i32_92] : memref<8x4x128xf32, #tpu.memory_space<vmem>> -> memref<1x1x128xf32, #tpu.memory_space<vmem>>
    %112 = tpu.memref_squeeze %111 : memref<1x1x128xf32, #tpu.memory_space<vmem>> -> memref<1x128xf32, #tpu.memory_space<vmem>>
    %113 = tpu.memref_slice %arg6[%c2_i32_88, %c3_i32_89] : memref<8x4x!tpu.dma_semaphore, #tpu.memory_space<semaphore_mem>> -> memref<1x1x!tpu.dma_semaphore, #tpu.memory_space<semaphore_mem>>
    %114 = tpu.memref_squeeze %113 : memref<1x1x!tpu.dma_semaphore, #tpu.memory_space<semaphore_mem>> -> memref<!tpu.dma_semaphore, #tpu.memory_space<semaphore_mem>>
    tpu.enqueue_dma source(%110 : memref<1x128xf32, #tpu.memory_space<any>>) target(%112 : memref<1x128xf32, #tpu.memory_space<vmem>>) target_semaphore(%114 : memref<!tpu.dma_semaphore, #tpu.memory_space<semaphore_mem>>)
    %c3_i32_93 = arith.constant 3 : i32
    %115 = arith.addi %0, %c3_i32_93 : i32
    %c4_i32_94 = arith.constant 4 : i32
    %116 = arith.minsi %115, %c4_i32_94 : i32
    %c3_i32_95 = arith.constant 3 : i32
    %117 = arith.addi %0, %c3_i32_95 : i32
    %118 = arith.index_cast %117 : i32 to index
    %c0_96 = arith.constant 0 : index
    %119 = memref.load %arg1[%118, %c0_96] : memref<8x4xi32, #tpu.memory_space<smem>>
    %c3_i32_97 = arith.constant 3 : i32
    %c3_i32_98 = arith.constant 3 : i32
    %c0_i32_99 = arith.constant 0 : i32
    %c0_i32_100 = arith.constant 0 : i32
    %120 = tpu.memref_slice %arg3[%116, %119, %c0_i32_100] : memref<5x16x128xf32, #tpu.memory_space<any>> -> memref<1x1x128xf32, #tpu.memory_space<any>>
    %121 = tpu.memref_squeeze %120 : memref<1x1x128xf32, #tpu.memory_space<any>> -> memref<1x128xf32, #tpu.memory_space<any>>
    %c0_i32_101 = arith.constant 0 : i32
    %c0_i32_102 = arith.constant 0 : i32
    %122 = tpu.memref_slice %arg5[%c3_i32_97, %c0_i32_101, %c0_i32_102] : memref<8x4x128xf32, #tpu.memory_space<vmem>> -> memref<1x1x128xf32, #tpu.memory_space<vmem>>
    %123 = tpu.memref_squeeze %122 : memref<1x1x128xf32, #tpu.memory_space<vmem>> -> memref<1x128xf32, #tpu.memory_space<vmem>>
    %124 = tpu.memref_slice %arg6[%c3_i32_98, %c0_i32_99] : memref<8x4x!tpu.dma_semaphore, #tpu.memory_space<semaphore_mem>> -> memref<1x1x!tpu.dma_semaphore, #tpu.memory_space<semaphore_mem>>
    %125 = tpu.memref_squeeze %124 : memref<1x1x!tpu.dma_semaphore, #tpu.memory_space<semaphore_mem>> -> memref<!tpu.dma_semaphore, #tpu.memory_space<semaphore_mem>>
    tpu.enqueue_dma source(%121 : memref<1x128xf32, #tpu.memory_space<any>>) target(%123 : memref<1x128xf32, #tpu.memory_space<vmem>>) target_semaphore(%125 : memref<!tpu.dma_semaphore, #tpu.memory_space<semaphore_mem>>)
    %c3_i32_103 = arith.constant 3 : i32
    %126 = arith.addi %0, %c3_i32_103 : i32
    %127 = arith.index_cast %126 : i32 to index
    %c1_104 = arith.constant 1 : index
    %128 = memref.load %arg1[%127, %c1_104] : memref<8x4xi32, #tpu.memory_space<smem>>
    %c3_i32_105 = arith.constant 3 : i32
    %c3_i32_106 = arith.constant 3 : i32
    %c1_i32_107 = arith.constant 1 : i32
    %c0_i32_108 = arith.constant 0 : i32
    %129 = tpu.memref_slice %arg3[%116, %128, %c0_i32_108] : memref<5x16x128xf32, #tpu.memory_space<any>> -> memref<1x1x128xf32, #tpu.memory_space<any>>
    %130 = tpu.memref_squeeze %129 : memref<1x1x128xf32, #tpu.memory_space<any>> -> memref<1x128xf32, #tpu.memory_space<any>>
    %c1_i32_109 = arith.constant 1 : i32
    %c0_i32_110 = arith.constant 0 : i32
    %131 = tpu.memref_slice %arg5[%c3_i32_105, %c1_i32_109, %c0_i32_110] : memref<8x4x128xf32, #tpu.memory_space<vmem>> -> memref<1x1x128xf32, #tpu.memory_space<vmem>>
    %132 = tpu.memref_squeeze %131 : memref<1x1x128xf32, #tpu.memory_space<vmem>> -> memref<1x128xf32, #tpu.memory_space<vmem>>
    %133 = tpu.memref_slice %arg6[%c3_i32_106, %c1_i32_107] : memref<8x4x!tpu.dma_semaphore, #tpu.memory_space<semaphore_mem>> -> memref<1x1x!tpu.dma_semaphore, #tpu.memory_space<semaphore_mem>>
    %134 = tpu.memref_squeeze %133 : memref<1x1x!tpu.dma_semaphore, #tpu.memory_space<semaphore_mem>> -> memref<!tpu.dma_semaphore, #tpu.memory_space<semaphore_mem>>
    tpu.enqueue_dma source(%130 : memref<1x128xf32, #tpu.memory_space<any>>) target(%132 : memref<1x128xf32, #tpu.memory_space<vmem>>) target_semaphore(%134 : memref<!tpu.dma_semaphore, #tpu.memory_space<semaphore_mem>>)
    %c3_i32_111 = arith.constant 3 : i32
    %135 = arith.addi %0, %c3_i32_111 : i32
    %136 = arith.index_cast %135 : i32 to index
    %c2_112 = arith.constant 2 : index
    %137 = memref.load %arg1[%136, %c2_112] : memref<8x4xi32, #tpu.memory_space<smem>>
    %c3_i32_113 = arith.constant 3 : i32
    %c3_i32_114 = arith.constant 3 : i32
    %c2_i32_115 = arith.constant 2 : i32
    %c0_i32_116 = arith.constant 0 : i32
    %138 = tpu.memref_slice %arg3[%116, %137, %c0_i32_116] : memref<5x16x128xf32, #tpu.memory_space<any>> -> memref<1x1x128xf32, #tpu.memory_space<any>>
    %139 = tpu.memref_squeeze %138 : memref<1x1x128xf32, #tpu.memory_space<any>> -> memref<1x128xf32, #tpu.memory_space<any>>
    %c2_i32_117 = arith.constant 2 : i32
    %c0_i32_118 = arith.constant 0 : i32
    %140 = tpu.memref_slice %arg5[%c3_i32_113, %c2_i32_117, %c0_i32_118] : memref<8x4x128xf32, #tpu.memory_space<vmem>> -> memref<1x1x128xf32, #tpu.memory_space<vmem>>
    %141 = tpu.memref_squeeze %140 : memref<1x1x128xf32, #tpu.memory_space<vmem>> -> memref<1x128xf32, #tpu.memory_space<vmem>>
    %142 = tpu.memref_slice %arg6[%c3_i32_114, %c2_i32_115] : memref<8x4x!tpu.dma_semaphore, #tpu.memory_space<semaphore_mem>> -> memref<1x1x!tpu.dma_semaphore, #tpu.memory_space<semaphore_mem>>
    %143 = tpu.memref_squeeze %142 : memref<1x1x!tpu.dma_semaphore, #tpu.memory_space<semaphore_mem>> -> memref<!tpu.dma_semaphore, #tpu.memory_space<semaphore_mem>>
    tpu.enqueue_dma source(%139 : memref<1x128xf32, #tpu.memory_space<any>>) target(%141 : memref<1x128xf32, #tpu.memory_space<vmem>>) target_semaphore(%143 : memref<!tpu.dma_semaphore, #tpu.memory_space<semaphore_mem>>)
    %c3_i32_119 = arith.constant 3 : i32
    %144 = arith.addi %0, %c3_i32_119 : i32
    %145 = arith.index_cast %144 : i32 to index
    %c3_120 = arith.constant 3 : index
    %146 = memref.load %arg1[%145, %c3_120] : memref<8x4xi32, #tpu.memory_space<smem>>
    %c3_i32_121 = arith.constant 3 : i32
    %c3_i32_122 = arith.constant 3 : i32
    %c3_i32_123 = arith.constant 3 : i32
    %c0_i32_124 = arith.constant 0 : i32
    %147 = tpu.memref_slice %arg3[%116, %146, %c0_i32_124] : memref<5x16x128xf32, #tpu.memory_space<any>> -> memref<1x1x128xf32, #tpu.memory_space<any>>
    %148 = tpu.memref_squeeze %147 : memref<1x1x128xf32, #tpu.memory_space<any>> -> memref<1x128xf32, #tpu.memory_space<any>>
    %c3_i32_125 = arith.constant 3 : i32
    %c0_i32_126 = arith.constant 0 : i32
    %149 = tpu.memref_slice %arg5[%c3_i32_121, %c3_i32_125, %c0_i32_126] : memref<8x4x128xf32, #tpu.memory_space<vmem>> -> memref<1x1x128xf32, #tpu.memory_space<vmem>>
    %150 = tpu.memref_squeeze %149 : memref<1x1x128xf32, #tpu.memory_space<vmem>> -> memref<1x128xf32, #tpu.memory_space<vmem>>
    %151 = tpu.memref_slice %arg6[%c3_i32_122, %c3_i32_123] : memref<8x4x!tpu.dma_semaphore, #tpu.memory_space<semaphore_mem>> -> memref<1x1x!tpu.dma_semaphore, #tpu.memory_space<semaphore_mem>>
    %152 = tpu.memref_squeeze %151 : memref<1x1x!tpu.dma_semaphore, #tpu.memory_space<semaphore_mem>> -> memref<!tpu.dma_semaphore, #tpu.memory_space<semaphore_mem>>
    tpu.enqueue_dma source(%148 : memref<1x128xf32, #tpu.memory_space<any>>) target(%150 : memref<1x128xf32, #tpu.memory_space<vmem>>) target_semaphore(%152 : memref<!tpu.dma_semaphore, #tpu.memory_space<semaphore_mem>>)
    %c4_i32_127 = arith.constant 4 : i32
    %153 = arith.addi %0, %c4_i32_127 : i32
    %c4_i32_128 = arith.constant 4 : i32
    %154 = arith.minsi %153, %c4_i32_128 : i32
    %c4_i32_129 = arith.constant 4 : i32
    %155 = arith.addi %0, %c4_i32_129 : i32
    %156 = arith.index_cast %155 : i32 to index
    %c0_130 = arith.constant 0 : index
    %157 = memref.load %arg1[%156, %c0_130] : memref<8x4xi32, #tpu.memory_space<smem>>
    %c4_i32_131 = arith.constant 4 : i32
    %c4_i32_132 = arith.constant 4 : i32
    %c0_i32_133 = arith.constant 0 : i32
    %c0_i32_134 = arith.constant 0 : i32
    %158 = tpu.memref_slice %arg3[%154, %157, %c0_i32_134] : memref<5x16x128xf32, #tpu.memory_space<any>> -> memref<1x1x128xf32, #tpu.memory_space<any>>
    %159 = tpu.memref_squeeze %158 : memref<1x1x128xf32, #tpu.memory_space<any>> -> memref<1x128xf32, #tpu.memory_space<any>>
    %c0_i32_135 = arith.constant 0 : i32
    %c0_i32_136 = arith.constant 0 : i32
    %160 = tpu.memref_slice %arg5[%c4_i32_131, %c0_i32_135, %c0_i32_136] : memref<8x4x128xf32, #tpu.memory_space<vmem>> -> memref<1x1x128xf32, #tpu.memory_space<vmem>>
    %161 = tpu.memref_squeeze %160 : memref<1x1x128xf32, #tpu.memory_space<vmem>> -> memref<1x128xf32, #tpu.memory_space<vmem>>
    %162 = tpu.memref_slice %arg6[%c4_i32_132, %c0_i32_133] : memref<8x4x!tpu.dma_semaphore, #tpu.memory_space<semaphore_mem>> -> memref<1x1x!tpu.dma_semaphore, #tpu.memory_space<semaphore_mem>>
    %163 = tpu.memref_squeeze %162 : memref<1x1x!tpu.dma_semaphore, #tpu.memory_space<semaphore_mem>> -> memref<!tpu.dma_semaphore, #tpu.memory_space<semaphore_mem>>
    tpu.enqueue_dma source(%159 : memref<1x128xf32, #tpu.memory_space<any>>) target(%161 : memref<1x128xf32, #tpu.memory_space<vmem>>) target_semaphore(%163 : memref<!tpu.dma_semaphore, #tpu.memory_space<semaphore_mem>>)
    %c4_i32_137 = arith.constant 4 : i32
    %164 = arith.addi %0, %c4_i32_137 : i32
    %165 = arith.index_cast %164 : i32 to index
    %c1_138 = arith.constant 1 : index
    %166 = memref.load %arg1[%165, %c1_138] : memref<8x4xi32, #tpu.memory_space<smem>>
    %c4_i32_139 = arith.constant 4 : i32
    %c4_i32_140 = arith.constant 4 : i32
    %c1_i32_141 = arith.constant 1 : i32
    %c0_i32_142 = arith.constant 0 : i32
    %167 = tpu.memref_slice %arg3[%154, %166, %c0_i32_142] : memref<5x16x128xf32, #tpu.memory_space<any>> -> memref<1x1x128xf32, #tpu.memory_space<any>>
    %168 = tpu.memref_squeeze %167 : memref<1x1x128xf32, #tpu.memory_space<any>> -> memref<1x128xf32, #tpu.memory_space<any>>
    %c1_i32_143 = arith.constant 1 : i32
    %c0_i32_144 = arith.constant 0 : i32
    %169 = tpu.memref_slice %arg5[%c4_i32_139, %c1_i32_143, %c0_i32_144] : memref<8x4x128xf32, #tpu.memory_space<vmem>> -> memref<1x1x128xf32, #tpu.memory_space<vmem>>
    %170 = tpu.memref_squeeze %169 : memref<1x1x128xf32, #tpu.memory_space<vmem>> -> memref<1x128xf32, #tpu.memory_space<vmem>>
    %171 = tpu.memref_slice %arg6[%c4_i32_140, %c1_i32_141] : memref<8x4x!tpu.dma_semaphore, #tpu.memory_space<semaphore_mem>> -> memref<1x1x!tpu.dma_semaphore, #tpu.memory_space<semaphore_mem>>
    %172 = tpu.memref_squeeze %171 : memref<1x1x!tpu.dma_semaphore, #tpu.memory_space<semaphore_mem>> -> memref<!tpu.dma_semaphore, #tpu.memory_space<semaphore_mem>>
    tpu.enqueue_dma source(%168 : memref<1x128xf32, #tpu.memory_space<any>>) target(%170 : memref<1x128xf32, #tpu.memory_space<vmem>>) target_semaphore(%172 : memref<!tpu.dma_semaphore, #tpu.memory_space<semaphore_mem>>)
    %c4_i32_145 = arith.constant 4 : i32
    %173 = arith.addi %0, %c4_i32_145 : i32
    %174 = arith.index_cast %173 : i32 to index
    %c2_146 = arith.constant 2 : index
    %175 = memref.load %arg1[%174, %c2_146] : memref<8x4xi32, #tpu.memory_space<smem>>
    %c4_i32_147 = arith.constant 4 : i32
    %c4_i32_148 = arith.constant 4 : i32
    %c2_i32_149 = arith.constant 2 : i32
    %c0_i32_150 = arith.constant 0 : i32
    %176 = tpu.memref_slice %arg3[%154, %175, %c0_i32_150] : memref<5x16x128xf32, #tpu.memory_space<any>> -> memref<1x1x128xf32, #tpu.memory_space<any>>
    %177 = tpu.memref_squeeze %176 : memref<1x1x128xf32, #tpu.memory_space<any>> -> memref<1x128xf32, #tpu.memory_space<any>>
    %c2_i32_151 = arith.constant 2 : i32
    %c0_i32_152 = arith.constant 0 : i32
    %178 = tpu.memref_slice %arg5[%c4_i32_147, %c2_i32_151, %c0_i32_152] : memref<8x4x128xf32, #tpu.memory_space<vmem>> -> memref<1x1x128xf32, #tpu.memory_space<vmem>>
    %179 = tpu.memref_squeeze %178 : memref<1x1x128xf32, #tpu.memory_space<vmem>> -> memref<1x128xf32, #tpu.memory_space<vmem>>
    %180 = tpu.memref_slice %arg6[%c4_i32_148, %c2_i32_149] : memref<8x4x!tpu.dma_semaphore, #tpu.memory_space<semaphore_mem>> -> memref<1x1x!tpu.dma_semaphore, #tpu.memory_space<semaphore_mem>>
    %181 = tpu.memref_squeeze %180 : memref<1x1x!tpu.dma_semaphore, #tpu.memory_space<semaphore_mem>> -> memref<!tpu.dma_semaphore, #tpu.memory_space<semaphore_mem>>
    tpu.enqueue_dma source(%177 : memref<1x128xf32, #tpu.memory_space<any>>) target(%179 : memref<1x128xf32, #tpu.memory_space<vmem>>) target_semaphore(%181 : memref<!tpu.dma_semaphore, #tpu.memory_space<semaphore_mem>>)
    %c4_i32_153 = arith.constant 4 : i32
    %182 = arith.addi %0, %c4_i32_153 : i32
    %183 = arith.index_cast %182 : i32 to index
    %c3_154 = arith.constant 3 : index
    %184 = memref.load %arg1[%183, %c3_154] : memref<8x4xi32, #tpu.memory_space<smem>>
    %c4_i32_155 = arith.constant 4 : i32
    %c4_i32_156 = arith.constant 4 : i32
    %c3_i32_157 = arith.constant 3 : i32
    %c0_i32_158 = arith.constant 0 : i32
    %185 = tpu.memref_slice %arg3[%154, %184, %c0_i32_158] : memref<5x16x128xf32, #tpu.memory_space<any>> -> memref<1x1x128xf32, #tpu.memory_space<any>>
    %186 = tpu.memref_squeeze %185 : memref<1x1x128xf32, #tpu.memory_space<any>> -> memref<1x128xf32, #tpu.memory_space<any>>
    %c3_i32_159 = arith.constant 3 : i32
    %c0_i32_160 = arith.constant 0 : i32
    %187 = tpu.memref_slice %arg5[%c4_i32_155, %c3_i32_159, %c0_i32_160] : memref<8x4x128xf32, #tpu.memory_space<vmem>> -> memref<1x1x128xf32, #tpu.memory_space<vmem>>
    %188 = tpu.memref_squeeze %187 : memref<1x1x128xf32, #tpu.memory_space<vmem>> -> memref<1x128xf32, #tpu.memory_space<vmem>>
    %189 = tpu.memref_slice %arg6[%c4_i32_156, %c3_i32_157] : memref<8x4x!tpu.dma_semaphore, #tpu.memory_space<semaphore_mem>> -> memref<1x1x!tpu.dma_semaphore, #tpu.memory_space<semaphore_mem>>
    %190 = tpu.memref_squeeze %189 : memref<1x1x!tpu.dma_semaphore, #tpu.memory_space<semaphore_mem>> -> memref<!tpu.dma_semaphore, #tpu.memory_space<semaphore_mem>>
    tpu.enqueue_dma source(%186 : memref<1x128xf32, #tpu.memory_space<any>>) target(%188 : memref<1x128xf32, #tpu.memory_space<vmem>>) target_semaphore(%190 : memref<!tpu.dma_semaphore, #tpu.memory_space<semaphore_mem>>)
    %c5_i32 = arith.constant 5 : i32
    %191 = arith.addi %0, %c5_i32 : i32
    %c4_i32_161 = arith.constant 4 : i32
    %192 = arith.minsi %191, %c4_i32_161 : i32
    %c5_i32_162 = arith.constant 5 : i32
    %193 = arith.addi %0, %c5_i32_162 : i32
    %194 = arith.index_cast %193 : i32 to index
    %c0_163 = arith.constant 0 : index
    %195 = memref.load %arg1[%194, %c0_163] : memref<8x4xi32, #tpu.memory_space<smem>>
    %c5_i32_164 = arith.constant 5 : i32
    %c5_i32_165 = arith.constant 5 : i32
    %c0_i32_166 = arith.constant 0 : i32
    %c0_i32_167 = arith.constant 0 : i32
    %196 = tpu.memref_slice %arg3[%192, %195, %c0_i32_167] : memref<5x16x128xf32, #tpu.memory_space<any>> -> memref<1x1x128xf32, #tpu.memory_space<any>>
    %197 = tpu.memref_squeeze %196 : memref<1x1x128xf32, #tpu.memory_space<any>> -> memref<1x128xf32, #tpu.memory_space<any>>
    %c0_i32_168 = arith.constant 0 : i32
    %c0_i32_169 = arith.constant 0 : i32
    %198 = tpu.memref_slice %arg5[%c5_i32_164, %c0_i32_168, %c0_i32_169] : memref<8x4x128xf32, #tpu.memory_space<vmem>> -> memref<1x1x128xf32, #tpu.memory_space<vmem>>
    %199 = tpu.memref_squeeze %198 : memref<1x1x128xf32, #tpu.memory_space<vmem>> -> memref<1x128xf32, #tpu.memory_space<vmem>>
    %200 = tpu.memref_slice %arg6[%c5_i32_165, %c0_i32_166] : memref<8x4x!tpu.dma_semaphore, #tpu.memory_space<semaphore_mem>> -> memref<1x1x!tpu.dma_semaphore, #tpu.memory_space<semaphore_mem>>
    %201 = tpu.memref_squeeze %200 : memref<1x1x!tpu.dma_semaphore, #tpu.memory_space<semaphore_mem>> -> memref<!tpu.dma_semaphore, #tpu.memory_space<semaphore_mem>>
    tpu.enqueue_dma source(%197 : memref<1x128xf32, #tpu.memory_space<any>>) target(%199 : memref<1x128xf32, #tpu.memory_space<vmem>>) target_semaphore(%201 : memref<!tpu.dma_semaphore, #tpu.memory_space<semaphore_mem>>)
    %c5_i32_170 = arith.constant 5 : i32
    %202 = arith.addi %0, %c5_i32_170 : i32
    %203 = arith.index_cast %202 : i32 to index
    %c1_171 = arith.constant 1 : index
    %204 = memref.load %arg1[%203, %c1_171] : memref<8x4xi32, #tpu.memory_space<smem>>
    %c5_i32_172 = arith.constant 5 : i32
    %c5_i32_173 = arith.constant 5 : i32
    %c1_i32_174 = arith.constant 1 : i32
    %c0_i32_175 = arith.constant 0 : i32
    %205 = tpu.memref_slice %arg3[%192, %204, %c0_i32_175] : memref<5x16x128xf32, #tpu.memory_space<any>> -> memref<1x1x128xf32, #tpu.memory_space<any>>
    %206 = tpu.memref_squeeze %205 : memref<1x1x128xf32, #tpu.memory_space<any>> -> memref<1x128xf32, #tpu.memory_space<any>>
    %c1_i32_176 = arith.constant 1 : i32
    %c0_i32_177 = arith.constant 0 : i32
    %207 = tpu.memref_slice %arg5[%c5_i32_172, %c1_i32_176, %c0_i32_177] : memref<8x4x128xf32, #tpu.memory_space<vmem>> -> memref<1x1x128xf32, #tpu.memory_space<vmem>>
    %208 = tpu.memref_squeeze %207 : memref<1x1x128xf32, #tpu.memory_space<vmem>> -> memref<1x128xf32, #tpu.memory_space<vmem>>
    %209 = tpu.memref_slice %arg6[%c5_i32_173, %c1_i32_174] : memref<8x4x!tpu.dma_semaphore, #tpu.memory_space<semaphore_mem>> -> memref<1x1x!tpu.dma_semaphore, #tpu.memory_space<semaphore_mem>>
    %210 = tpu.memref_squeeze %209 : memref<1x1x!tpu.dma_semaphore, #tpu.memory_space<semaphore_mem>> -> memref<!tpu.dma_semaphore, #tpu.memory_space<semaphore_mem>>
    tpu.enqueue_dma source(%206 : memref<1x128xf32, #tpu.memory_space<any>>) target(%208 : memref<1x128xf32, #tpu.memory_space<vmem>>) target_semaphore(%210 : memref<!tpu.dma_semaphore, #tpu.memory_space<semaphore_mem>>)
    %c5_i32_178 = arith.constant 5 : i32
    %211 = arith.addi %0, %c5_i32_178 : i32
    %212 = arith.index_cast %211 : i32 to index
    %c2_179 = arith.constant 2 : index
    %213 = memref.load %arg1[%212, %c2_179] : memref<8x4xi32, #tpu.memory_space<smem>>
    %c5_i32_180 = arith.constant 5 : i32
    %c5_i32_181 = arith.constant 5 : i32
    %c2_i32_182 = arith.constant 2 : i32
    %c0_i32_183 = arith.constant 0 : i32
    %214 = tpu.memref_slice %arg3[%192, %213, %c0_i32_183] : memref<5x16x128xf32, #tpu.memory_space<any>> -> memref<1x1x128xf32, #tpu.memory_space<any>>
    %215 = tpu.memref_squeeze %214 : memref<1x1x128xf32, #tpu.memory_space<any>> -> memref<1x128xf32, #tpu.memory_space<any>>
    %c2_i32_184 = arith.constant 2 : i32
    %c0_i32_185 = arith.constant 0 : i32
    %216 = tpu.memref_slice %arg5[%c5_i32_180, %c2_i32_184, %c0_i32_185] : memref<8x4x128xf32, #tpu.memory_space<vmem>> -> memref<1x1x128xf32, #tpu.memory_space<vmem>>
    %217 = tpu.memref_squeeze %216 : memref<1x1x128xf32, #tpu.memory_space<vmem>> -> memref<1x128xf32, #tpu.memory_space<vmem>>
    %218 = tpu.memref_slice %arg6[%c5_i32_181, %c2_i32_182] : memref<8x4x!tpu.dma_semaphore, #tpu.memory_space<semaphore_mem>> -> memref<1x1x!tpu.dma_semaphore, #tpu.memory_space<semaphore_mem>>
    %219 = tpu.memref_squeeze %218 : memref<1x1x!tpu.dma_semaphore, #tpu.memory_space<semaphore_mem>> -> memref<!tpu.dma_semaphore, #tpu.memory_space<semaphore_mem>>
    tpu.enqueue_dma source(%215 : memref<1x128xf32, #tpu.memory_space<any>>) target(%217 : memref<1x128xf32, #tpu.memory_space<vmem>>) target_semaphore(%219 : memref<!tpu.dma_semaphore, #tpu.memory_space<semaphore_mem>>)
    %c5_i32_186 = arith.constant 5 : i32
    %220 = arith.addi %0, %c5_i32_186 : i32
    %221 = arith.index_cast %220 : i32 to index
    %c3_187 = arith.constant 3 : index
    %222 = memref.load %arg1[%221, %c3_187] : memref<8x4xi32, #tpu.memory_space<smem>>
    %c5_i32_188 = arith.constant 5 : i32
    %c5_i32_189 = arith.constant 5 : i32
    %c3_i32_190 = arith.constant 3 : i32
    %c0_i32_191 = arith.constant 0 : i32
    %223 = tpu.memref_slice %arg3[%192, %222, %c0_i32_191] : memref<5x16x128xf32, #tpu.memory_space<any>> -> memref<1x1x128xf32, #tpu.memory_space<any>>
    %224 = tpu.memref_squeeze %223 : memref<1x1x128xf32, #tpu.memory_space<any>> -> memref<1x128xf32, #tpu.memory_space<any>>
    %c3_i32_192 = arith.constant 3 : i32
    %c0_i32_193 = arith.constant 0 : i32
    %225 = tpu.memref_slice %arg5[%c5_i32_188, %c3_i32_192, %c0_i32_193] : memref<8x4x128xf32, #tpu.memory_space<vmem>> -> memref<1x1x128xf32, #tpu.memory_space<vmem>>
    %226 = tpu.memref_squeeze %225 : memref<1x1x128xf32, #tpu.memory_space<vmem>> -> memref<1x128xf32, #tpu.memory_space<vmem>>
    %227 = tpu.memref_slice %arg6[%c5_i32_189, %c3_i32_190] : memref<8x4x!tpu.dma_semaphore, #tpu.memory_space<semaphore_mem>> -> memref<1x1x!tpu.dma_semaphore, #tpu.memory_space<semaphore_mem>>
    %228 = tpu.memref_squeeze %227 : memref<1x1x!tpu.dma_semaphore, #tpu.memory_space<semaphore_mem>> -> memref<!tpu.dma_semaphore, #tpu.memory_space<semaphore_mem>>
    tpu.enqueue_dma source(%224 : memref<1x128xf32, #tpu.memory_space<any>>) target(%226 : memref<1x128xf32, #tpu.memory_space<vmem>>) target_semaphore(%228 : memref<!tpu.dma_semaphore, #tpu.memory_space<semaphore_mem>>)
    %c6_i32 = arith.constant 6 : i32
    %229 = arith.addi %0, %c6_i32 : i32
    %c4_i32_194 = arith.constant 4 : i32
    %230 = arith.minsi %229, %c4_i32_194 : i32
    %c6_i32_195 = arith.constant 6 : i32
    %231 = arith.addi %0, %c6_i32_195 : i32
    %232 = arith.index_cast %231 : i32 to index
    %c0_196 = arith.constant 0 : index
    %233 = memref.load %arg1[%232, %c0_196] : memref<8x4xi32, #tpu.memory_space<smem>>
    %c6_i32_197 = arith.constant 6 : i32
    %c6_i32_198 = arith.constant 6 : i32
    %c0_i32_199 = arith.constant 0 : i32
    %c0_i32_200 = arith.constant 0 : i32
    %234 = tpu.memref_slice %arg3[%230, %233, %c0_i32_200] : memref<5x16x128xf32, #tpu.memory_space<any>> -> memref<1x1x128xf32, #tpu.memory_space<any>>
    %235 = tpu.memref_squeeze %234 : memref<1x1x128xf32, #tpu.memory_space<any>> -> memref<1x128xf32, #tpu.memory_space<any>>
    %c0_i32_201 = arith.constant 0 : i32
    %c0_i32_202 = arith.constant 0 : i32
    %236 = tpu.memref_slice %arg5[%c6_i32_197, %c0_i32_201, %c0_i32_202] : memref<8x4x128xf32, #tpu.memory_space<vmem>> -> memref<1x1x128xf32, #tpu.memory_space<vmem>>
    %237 = tpu.memref_squeeze %236 : memref<1x1x128xf32, #tpu.memory_space<vmem>> -> memref<1x128xf32, #tpu.memory_space<vmem>>
    %238 = tpu.memref_slice %arg6[%c6_i32_198, %c0_i32_199] : memref<8x4x!tpu.dma_semaphore, #tpu.memory_space<semaphore_mem>> -> memref<1x1x!tpu.dma_semaphore, #tpu.memory_space<semaphore_mem>>
    %239 = tpu.memref_squeeze %238 : memref<1x1x!tpu.dma_semaphore, #tpu.memory_space<semaphore_mem>> -> memref<!tpu.dma_semaphore, #tpu.memory_space<semaphore_mem>>
    tpu.enqueue_dma source(%235 : memref<1x128xf32, #tpu.memory_space<any>>) target(%237 : memref<1x128xf32, #tpu.memory_space<vmem>>) target_semaphore(%239 : memref<!tpu.dma_semaphore, #tpu.memory_space<semaphore_mem>>)
    %c6_i32_203 = arith.constant 6 : i32
    %240 = arith.addi %0, %c6_i32_203 : i32
    %241 = arith.index_cast %240 : i32 to index
    %c1_204 = arith.constant 1 : index
    %242 = memref.load %arg1[%241, %c1_204] : memref<8x4xi32, #tpu.memory_space<smem>>
    %c6_i32_205 = arith.constant 6 : i32
    %c6_i32_206 = arith.constant 6 : i32
    %c1_i32_207 = arith.constant 1 : i32
    %c0_i32_208 = arith.constant 0 : i32
    %243 = tpu.memref_slice %arg3[%230, %242, %c0_i32_208] : memref<5x16x128xf32, #tpu.memory_space<any>> -> memref<1x1x128xf32, #tpu.memory_space<any>>
    %244 = tpu.memref_squeeze %243 : memref<1x1x128xf32, #tpu.memory_space<any>> -> memref<1x128xf32, #tpu.memory_space<any>>
    %c1_i32_209 = arith.constant 1 : i32
    %c0_i32_210 = arith.constant 0 : i32
    %245 = tpu.memref_slice %arg5[%c6_i32_205, %c1_i32_209, %c0_i32_210] : memref<8x4x128xf32, #tpu.memory_space<vmem>> -> memref<1x1x128xf32, #tpu.memory_space<vmem>>
    %246 = tpu.memref_squeeze %245 : memref<1x1x128xf32, #tpu.memory_space<vmem>> -> memref<1x128xf32, #tpu.memory_space<vmem>>
    %247 = tpu.memref_slice %arg6[%c6_i32_206, %c1_i32_207] : memref<8x4x!tpu.dma_semaphore, #tpu.memory_space<semaphore_mem>> -> memref<1x1x!tpu.dma_semaphore, #tpu.memory_space<semaphore_mem>>
    %248 = tpu.memref_squeeze %247 : memref<1x1x!tpu.dma_semaphore, #tpu.memory_space<semaphore_mem>> -> memref<!tpu.dma_semaphore, #tpu.memory_space<semaphore_mem>>
    tpu.enqueue_dma source(%244 : memref<1x128xf32, #tpu.memory_space<any>>) target(%246 : memref<1x128xf32, #tpu.memory_space<vmem>>) target_semaphore(%248 : memref<!tpu.dma_semaphore, #tpu.memory_space<semaphore_mem>>)
    %c6_i32_211 = arith.constant 6 : i32
    %249 = arith.addi %0, %c6_i32_211 : i32
    %250 = arith.index_cast %249 : i32 to index
    %c2_212 = arith.constant 2 : index
    %251 = memref.load %arg1[%250, %c2_212] : memref<8x4xi32, #tpu.memory_space<smem>>
    %c6_i32_213 = arith.constant 6 : i32
    %c6_i32_214 = arith.constant 6 : i32
    %c2_i32_215 = arith.constant 2 : i32
    %c0_i32_216 = arith.constant 0 : i32
    %252 = tpu.memref_slice %arg3[%230, %251, %c0_i32_216] : memref<5x16x128xf32, #tpu.memory_space<any>> -> memref<1x1x128xf32, #tpu.memory_space<any>>
    %253 = tpu.memref_squeeze %252 : memref<1x1x128xf32, #tpu.memory_space<any>> -> memref<1x128xf32, #tpu.memory_space<any>>
    %c2_i32_217 = arith.constant 2 : i32
    %c0_i32_218 = arith.constant 0 : i32
    %254 = tpu.memref_slice %arg5[%c6_i32_213, %c2_i32_217, %c0_i32_218] : memref<8x4x128xf32, #tpu.memory_space<vmem>> -> memref<1x1x128xf32, #tpu.memory_space<vmem>>
    %255 = tpu.memref_squeeze %254 : memref<1x1x128xf32, #tpu.memory_space<vmem>> -> memref<1x128xf32, #tpu.memory_space<vmem>>
    %256 = tpu.memref_slice %arg6[%c6_i32_214, %c2_i32_215] : memref<8x4x!tpu.dma_semaphore, #tpu.memory_space<semaphore_mem>> -> memref<1x1x!tpu.dma_semaphore, #tpu.memory_space<semaphore_mem>>
    %257 = tpu.memref_squeeze %256 : memref<1x1x!tpu.dma_semaphore, #tpu.memory_space<semaphore_mem>> -> memref<!tpu.dma_semaphore, #tpu.memory_space<semaphore_mem>>
    tpu.enqueue_dma source(%253 : memref<1x128xf32, #tpu.memory_space<any>>) target(%255 : memref<1x128xf32, #tpu.memory_space<vmem>>) target_semaphore(%257 : memref<!tpu.dma_semaphore, #tpu.memory_space<semaphore_mem>>)
    %c6_i32_219 = arith.constant 6 : i32
    %258 = arith.addi %0, %c6_i32_219 : i32
    %259 = arith.index_cast %258 : i32 to index
    %c3_220 = arith.constant 3 : index
    %260 = memref.load %arg1[%259, %c3_220] : memref<8x4xi32, #tpu.memory_space<smem>>
    %c6_i32_221 = arith.constant 6 : i32
    %c6_i32_222 = arith.constant 6 : i32
    %c3_i32_223 = arith.constant 3 : i32
    %c0_i32_224 = arith.constant 0 : i32
    %261 = tpu.memref_slice %arg3[%230, %260, %c0_i32_224] : memref<5x16x128xf32, #tpu.memory_space<any>> -> memref<1x1x128xf32, #tpu.memory_space<any>>
    %262 = tpu.memref_squeeze %261 : memref<1x1x128xf32, #tpu.memory_space<any>> -> memref<1x128xf32, #tpu.memory_space<any>>
    %c3_i32_225 = arith.constant 3 : i32
    %c0_i32_226 = arith.constant 0 : i32
    %263 = tpu.memref_slice %arg5[%c6_i32_221, %c3_i32_225, %c0_i32_226] : memref<8x4x128xf32, #tpu.memory_space<vmem>> -> memref<1x1x128xf32, #tpu.memory_space<vmem>>
    %264 = tpu.memref_squeeze %263 : memref<1x1x128xf32, #tpu.memory_space<vmem>> -> memref<1x128xf32, #tpu.memory_space<vmem>>
    %265 = tpu.memref_slice %arg6[%c6_i32_222, %c3_i32_223] : memref<8x4x!tpu.dma_semaphore, #tpu.memory_space<semaphore_mem>> -> memref<1x1x!tpu.dma_semaphore, #tpu.memory_space<semaphore_mem>>
    %266 = tpu.memref_squeeze %265 : memref<1x1x!tpu.dma_semaphore, #tpu.memory_space<semaphore_mem>> -> memref<!tpu.dma_semaphore, #tpu.memory_space<semaphore_mem>>
    tpu.enqueue_dma source(%262 : memref<1x128xf32, #tpu.memory_space<any>>) target(%264 : memref<1x128xf32, #tpu.memory_space<vmem>>) target_semaphore(%266 : memref<!tpu.dma_semaphore, #tpu.memory_space<semaphore_mem>>)
    %c7_i32 = arith.constant 7 : i32
    %267 = arith.addi %0, %c7_i32 : i32
    %c4_i32_227 = arith.constant 4 : i32
    %268 = arith.minsi %267, %c4_i32_227 : i32
    %c7_i32_228 = arith.constant 7 : i32
    %269 = arith.addi %0, %c7_i32_228 : i32
    %270 = arith.index_cast %269 : i32 to index
    %c0_229 = arith.constant 0 : index
    %271 = memref.load %arg1[%270, %c0_229] : memref<8x4xi32, #tpu.memory_space<smem>>
    %c7_i32_230 = arith.constant 7 : i32
    %c7_i32_231 = arith.constant 7 : i32
    %c0_i32_232 = arith.constant 0 : i32
    %c0_i32_233 = arith.constant 0 : i32
    %272 = tpu.memref_slice %arg3[%268, %271, %c0_i32_233] : memref<5x16x128xf32, #tpu.memory_space<any>> -> memref<1x1x128xf32, #tpu.memory_space<any>>
    %273 = tpu.memref_squeeze %272 : memref<1x1x128xf32, #tpu.memory_space<any>> -> memref<1x128xf32, #tpu.memory_space<any>>
    %c0_i32_234 = arith.constant 0 : i32
    %c0_i32_235 = arith.constant 0 : i32
    %274 = tpu.memref_slice %arg5[%c7_i32_230, %c0_i32_234, %c0_i32_235] : memref<8x4x128xf32, #tpu.memory_space<vmem>> -> memref<1x1x128xf32, #tpu.memory_space<vmem>>
    %275 = tpu.memref_squeeze %274 : memref<1x1x128xf32, #tpu.memory_space<vmem>> -> memref<1x128xf32, #tpu.memory_space<vmem>>
    %276 = tpu.memref_slice %arg6[%c7_i32_231, %c0_i32_232] : memref<8x4x!tpu.dma_semaphore, #tpu.memory_space<semaphore_mem>> -> memref<1x1x!tpu.dma_semaphore, #tpu.memory_space<semaphore_mem>>
    %277 = tpu.memref_squeeze %276 : memref<1x1x!tpu.dma_semaphore, #tpu.memory_space<semaphore_mem>> -> memref<!tpu.dma_semaphore, #tpu.memory_space<semaphore_mem>>
    tpu.enqueue_dma source(%273 : memref<1x128xf32, #tpu.memory_space<any>>) target(%275 : memref<1x128xf32, #tpu.memory_space<vmem>>) target_semaphore(%277 : memref<!tpu.dma_semaphore, #tpu.memory_space<semaphore_mem>>)
    %c7_i32_236 = arith.constant 7 : i32
    %278 = arith.addi %0, %c7_i32_236 : i32
    %279 = arith.index_cast %278 : i32 to index
    %c1_237 = arith.constant 1 : index
    %280 = memref.load %arg1[%279, %c1_237] : memref<8x4xi32, #tpu.memory_space<smem>>
    %c7_i32_238 = arith.constant 7 : i32
    %c7_i32_239 = arith.constant 7 : i32
    %c1_i32_240 = arith.constant 1 : i32
    %c0_i32_241 = arith.constant 0 : i32
    %281 = tpu.memref_slice %arg3[%268, %280, %c0_i32_241] : memref<5x16x128xf32, #tpu.memory_space<any>> -> memref<1x1x128xf32, #tpu.memory_space<any>>
    %282 = tpu.memref_squeeze %281 : memref<1x1x128xf32, #tpu.memory_space<any>> -> memref<1x128xf32, #tpu.memory_space<any>>
    %c1_i32_242 = arith.constant 1 : i32
    %c0_i32_243 = arith.constant 0 : i32
    %283 = tpu.memref_slice %arg5[%c7_i32_238, %c1_i32_242, %c0_i32_243] : memref<8x4x128xf32, #tpu.memory_space<vmem>> -> memref<1x1x128xf32, #tpu.memory_space<vmem>>
    %284 = tpu.memref_squeeze %283 : memref<1x1x128xf32, #tpu.memory_space<vmem>> -> memref<1x128xf32, #tpu.memory_space<vmem>>
    %285 = tpu.memref_slice %arg6[%c7_i32_239, %c1_i32_240] : memref<8x4x!tpu.dma_semaphore, #tpu.memory_space<semaphore_mem>> -> memref<1x1x!tpu.dma_semaphore, #tpu.memory_space<semaphore_mem>>
    %286 = tpu.memref_squeeze %285 : memref<1x1x!tpu.dma_semaphore, #tpu.memory_space<semaphore_mem>> -> memref<!tpu.dma_semaphore, #tpu.memory_space<semaphore_mem>>
    tpu.enqueue_dma source(%282 : memref<1x128xf32, #tpu.memory_space<any>>) target(%284 : memref<1x128xf32, #tpu.memory_space<vmem>>) target_semaphore(%286 : memref<!tpu.dma_semaphore, #tpu.memory_space<semaphore_mem>>)
    %c7_i32_244 = arith.constant 7 : i32
    %287 = arith.addi %0, %c7_i32_244 : i32
    %288 = arith.index_cast %287 : i32 to index
    %c2_245 = arith.constant 2 : index
    %289 = memref.load %arg1[%288, %c2_245] : memref<8x4xi32, #tpu.memory_space<smem>>
    %c7_i32_246 = arith.constant 7 : i32
    %c7_i32_247 = arith.constant 7 : i32
    %c2_i32_248 = arith.constant 2 : i32
    %c0_i32_249 = arith.constant 0 : i32
    %290 = tpu.memref_slice %arg3[%268, %289, %c0_i32_249] : memref<5x16x128xf32, #tpu.memory_space<any>> -> memref<1x1x128xf32, #tpu.memory_space<any>>
    %291 = tpu.memref_squeeze %290 : memref<1x1x128xf32, #tpu.memory_space<any>> -> memref<1x128xf32, #tpu.memory_space<any>>
    %c2_i32_250 = arith.constant 2 : i32
    %c0_i32_251 = arith.constant 0 : i32
    %292 = tpu.memref_slice %arg5[%c7_i32_246, %c2_i32_250, %c0_i32_251] : memref<8x4x128xf32, #tpu.memory_space<vmem>> -> memref<1x1x128xf32, #tpu.memory_space<vmem>>
    %293 = tpu.memref_squeeze %292 : memref<1x1x128xf32, #tpu.memory_space<vmem>> -> memref<1x128xf32, #tpu.memory_space<vmem>>
    %294 = tpu.memref_slice %arg6[%c7_i32_247, %c2_i32_248] : memref<8x4x!tpu.dma_semaphore, #tpu.memory_space<semaphore_mem>> -> memref<1x1x!tpu.dma_semaphore, #tpu.memory_space<semaphore_mem>>
    %295 = tpu.memref_squeeze %294 : memref<1x1x!tpu.dma_semaphore, #tpu.memory_space<semaphore_mem>> -> memref<!tpu.dma_semaphore, #tpu.memory_space<semaphore_mem>>
    tpu.enqueue_dma source(%291 : memref<1x128xf32, #tpu.memory_space<any>>) target(%293 : memref<1x128xf32, #tpu.memory_space<vmem>>) target_semaphore(%295 : memref<!tpu.dma_semaphore, #tpu.memory_space<semaphore_mem>>)
    %c7_i32_252 = arith.constant 7 : i32
    %296 = arith.addi %0, %c7_i32_252 : i32
    %297 = arith.index_cast %296 : i32 to index
    %c3_253 = arith.constant 3 : index
    %298 = memref.load %arg1[%297, %c3_253] : memref<8x4xi32, #tpu.memory_space<smem>>
    %c7_i32_254 = arith.constant 7 : i32
    %c7_i32_255 = arith.constant 7 : i32
    %c3_i32_256 = arith.constant 3 : i32
    %c0_i32_257 = arith.constant 0 : i32
    %299 = tpu.memref_slice %arg3[%268, %298, %c0_i32_257] : memref<5x16x128xf32, #tpu.memory_space<any>> -> memref<1x1x128xf32, #tpu.memory_space<any>>
    %300 = tpu.memref_squeeze %299 : memref<1x1x128xf32, #tpu.memory_space<any>> -> memref<1x128xf32, #tpu.memory_space<any>>
    %c3_i32_258 = arith.constant 3 : i32
    %c0_i32_259 = arith.constant 0 : i32
    %301 = tpu.memref_slice %arg5[%c7_i32_254, %c3_i32_258, %c0_i32_259] : memref<8x4x128xf32, #tpu.memory_space<vmem>> -> memref<1x1x128xf32, #tpu.memory_space<vmem>>
    %302 = tpu.memref_squeeze %301 : memref<1x1x128xf32, #tpu.memory_space<vmem>> -> memref<1x128xf32, #tpu.memory_space<vmem>>
    %303 = tpu.memref_slice %arg6[%c7_i32_255, %c3_i32_256] : memref<8x4x!tpu.dma_semaphore, #tpu.memory_space<semaphore_mem>> -> memref<1x1x!tpu.dma_semaphore, #tpu.memory_space<semaphore_mem>>
    %304 = tpu.memref_squeeze %303 : memref<1x1x!tpu.dma_semaphore, #tpu.memory_space<semaphore_mem>> -> memref<!tpu.dma_semaphore, #tpu.memory_space<semaphore_mem>>
    tpu.enqueue_dma source(%300 : memref<1x128xf32, #tpu.memory_space<any>>) target(%302 : memref<1x128xf32, #tpu.memory_space<vmem>>) target_semaphore(%304 : memref<!tpu.dma_semaphore, #tpu.memory_space<semaphore_mem>>)
    %c0_i32_260 = arith.constant 0 : i32
    %c0_i32_261 = arith.constant 0 : i32
    %c0_i32_262 = arith.constant 0 : i32
    %c0_i32_263 = arith.constant 0 : i32
    %305 = tpu.memref_slice %arg3[%2, %5, %c0_i32_263] : memref<5x16x128xf32, #tpu.memory_space<any>> -> memref<1x1x128xf32, #tpu.memory_space<any>>
    %306 = tpu.memref_squeeze %305 : memref<1x1x128xf32, #tpu.memory_space<any>> -> memref<1x128xf32, #tpu.memory_space<any>>
    %c0_i32_264 = arith.constant 0 : i32
    %c0_i32_265 = arith.constant 0 : i32
    %307 = tpu.memref_slice %arg5[%c0_i32_260, %c0_i32_264, %c0_i32_265] : memref<8x4x128xf32, #tpu.memory_space<vmem>> -> memref<1x1x128xf32, #tpu.memory_space<vmem>>
    %308 = tpu.memref_squeeze %307 : memref<1x1x128xf32, #tpu.memory_space<vmem>> -> memref<1x128xf32, #tpu.memory_space<vmem>>
    %309 = tpu.memref_slice %arg6[%c0_i32_261, %c0_i32_262] : memref<8x4x!tpu.dma_semaphore, #tpu.memory_space<semaphore_mem>> -> memref<1x1x!tpu.dma_semaphore, #tpu.memory_space<semaphore_mem>>
    %310 = tpu.memref_squeeze %309 : memref<1x1x!tpu.dma_semaphore, #tpu.memory_space<semaphore_mem>> -> memref<!tpu.dma_semaphore, #tpu.memory_space<semaphore_mem>>
    tpu.wait_dma2 semaphore(%310 : memref<!tpu.dma_semaphore, #tpu.memory_space<semaphore_mem>>) src(%306 : memref<1x128xf32, #tpu.memory_space<any>>) dst(%308 : memref<1x128xf32, #tpu.memory_space<vmem>>)
    %c0_i32_266 = arith.constant 0 : i32
    %c0_i32_267 = arith.constant 0 : i32
    %c1_i32_268 = arith.constant 1 : i32
    %c0_i32_269 = arith.constant 0 : i32
    %311 = tpu.memref_slice %arg3[%2, %14, %c0_i32_269] : memref<5x16x128xf32, #tpu.memory_space<any>> -> memref<1x1x128xf32, #tpu.memory_space<any>>
    %312 = tpu.memref_squeeze %311 : memref<1x1x128xf32, #tpu.memory_space<any>> -> memref<1x128xf32, #tpu.memory_space<any>>
    %c1_i32_270 = arith.constant 1 : i32
    %c0_i32_271 = arith.constant 0 : i32
    %313 = tpu.memref_slice %arg5[%c0_i32_266, %c1_i32_270, %c0_i32_271] : memref<8x4x128xf32, #tpu.memory_space<vmem>> -> memref<1x1x128xf32, #tpu.memory_space<vmem>>
    %314 = tpu.memref_squeeze %313 : memref<1x1x128xf32, #tpu.memory_space<vmem>> -> memref<1x128xf32, #tpu.memory_space<vmem>>
    %315 = tpu.memref_slice %arg6[%c0_i32_267, %c1_i32_268] : memref<8x4x!tpu.dma_semaphore, #tpu.memory_space<semaphore_mem>> -> memref<1x1x!tpu.dma_semaphore, #tpu.memory_space<semaphore_mem>>
    %316 = tpu.memref_squeeze %315 : memref<1x1x!tpu.dma_semaphore, #tpu.memory_space<semaphore_mem>> -> memref<!tpu.dma_semaphore, #tpu.memory_space<semaphore_mem>>
    tpu.wait_dma2 semaphore(%316 : memref<!tpu.dma_semaphore, #tpu.memory_space<semaphore_mem>>) src(%312 : memref<1x128xf32, #tpu.memory_space<any>>) dst(%314 : memref<1x128xf32, #tpu.memory_space<vmem>>)
    %c0_i32_272 = arith.constant 0 : i32
    %c0_i32_273 = arith.constant 0 : i32
    %c2_i32_274 = arith.constant 2 : i32
    %c0_i32_275 = arith.constant 0 : i32
    %317 = tpu.memref_slice %arg3[%2, %23, %c0_i32_275] : memref<5x16x128xf32, #tpu.memory_space<any>> -> memref<1x1x128xf32, #tpu.memory_space<any>>
    %318 = tpu.memref_squeeze %317 : memref<1x1x128xf32, #tpu.memory_space<any>> -> memref<1x128xf32, #tpu.memory_space<any>>
    %c2_i32_276 = arith.constant 2 : i32
    %c0_i32_277 = arith.constant 0 : i32
    %319 = tpu.memref_slice %arg5[%c0_i32_272, %c2_i32_276, %c0_i32_277] : memref<8x4x128xf32, #tpu.memory_space<vmem>> -> memref<1x1x128xf32, #tpu.memory_space<vmem>>
    %320 = tpu.memref_squeeze %319 : memref<1x1x128xf32, #tpu.memory_space<vmem>> -> memref<1x128xf32, #tpu.memory_space<vmem>>
    %321 = tpu.memref_slice %arg6[%c0_i32_273, %c2_i32_274] : memref<8x4x!tpu.dma_semaphore, #tpu.memory_space<semaphore_mem>> -> memref<1x1x!tpu.dma_semaphore, #tpu.memory_space<semaphore_mem>>
    %322 = tpu.memref_squeeze %321 : memref<1x1x!tpu.dma_semaphore, #tpu.memory_space<semaphore_mem>> -> memref<!tpu.dma_semaphore, #tpu.memory_space<semaphore_mem>>
    tpu.wait_dma2 semaphore(%322 : memref<!tpu.dma_semaphore, #tpu.memory_space<semaphore_mem>>) src(%318 : memref<1x128xf32, #tpu.memory_space<any>>) dst(%320 : memref<1x128xf32, #tpu.memory_space<vmem>>)
    %c0_i32_278 = arith.constant 0 : i32
    %c0_i32_279 = arith.constant 0 : i32
    %c3_i32_280 = arith.constant 3 : i32
    %c0_i32_281 = arith.constant 0 : i32
    %323 = tpu.memref_slice %arg3[%2, %32, %c0_i32_281] : memref<5x16x128xf32, #tpu.memory_space<any>> -> memref<1x1x128xf32, #tpu.memory_space<any>>
    %324 = tpu.memref_squeeze %323 : memref<1x1x128xf32, #tpu.memory_space<any>> -> memref<1x128xf32, #tpu.memory_space<any>>
    %c3_i32_282 = arith.constant 3 : i32
    %c0_i32_283 = arith.constant 0 : i32
    %325 = tpu.memref_slice %arg5[%c0_i32_278, %c3_i32_282, %c0_i32_283] : memref<8x4x128xf32, #tpu.memory_space<vmem>> -> memref<1x1x128xf32, #tpu.memory_space<vmem>>
    %326 = tpu.memref_squeeze %325 : memref<1x1x128xf32, #tpu.memory_space<vmem>> -> memref<1x128xf32, #tpu.memory_space<vmem>>
    %327 = tpu.memref_slice %arg6[%c0_i32_279, %c3_i32_280] : memref<8x4x!tpu.dma_semaphore, #tpu.memory_space<semaphore_mem>> -> memref<1x1x!tpu.dma_semaphore, #tpu.memory_space<semaphore_mem>>
    %328 = tpu.memref_squeeze %327 : memref<1x1x!tpu.dma_semaphore, #tpu.memory_space<semaphore_mem>> -> memref<!tpu.dma_semaphore, #tpu.memory_space<semaphore_mem>>
    tpu.wait_dma2 semaphore(%328 : memref<!tpu.dma_semaphore, #tpu.memory_space<semaphore_mem>>) src(%324 : memref<1x128xf32, #tpu.memory_space<any>>) dst(%326 : memref<1x128xf32, #tpu.memory_space<vmem>>)
    %c1_i32_284 = arith.constant 1 : i32
    %c1_i32_285 = arith.constant 1 : i32
    %c0_i32_286 = arith.constant 0 : i32
    %c0_i32_287 = arith.constant 0 : i32
    %329 = tpu.memref_slice %arg3[%40, %43, %c0_i32_287] : memref<5x16x128xf32, #tpu.memory_space<any>> -> memref<1x1x128xf32, #tpu.memory_space<any>>
    %330 = tpu.memref_squeeze %329 : memref<1x1x128xf32, #tpu.memory_space<any>> -> memref<1x128xf32, #tpu.memory_space<any>>
    %c0_i32_288 = arith.constant 0 : i32
    %c0_i32_289 = arith.constant 0 : i32
    %331 = tpu.memref_slice %arg5[%c1_i32_284, %c0_i32_288, %c0_i32_289] : memref<8x4x128xf32, #tpu.memory_space<vmem>> -> memref<1x1x128xf32, #tpu.memory_space<vmem>>
    %332 = tpu.memref_squeeze %331 : memref<1x1x128xf32, #tpu.memory_space<vmem>> -> memref<1x128xf32, #tpu.memory_space<vmem>>
    %333 = tpu.memref_slice %arg6[%c1_i32_285, %c0_i32_286] : memref<8x4x!tpu.dma_semaphore, #tpu.memory_space<semaphore_mem>> -> memref<1x1x!tpu.dma_semaphore, #tpu.memory_space<semaphore_mem>>
    %334 = tpu.memref_squeeze %333 : memref<1x1x!tpu.dma_semaphore, #tpu.memory_space<semaphore_mem>> -> memref<!tpu.dma_semaphore, #tpu.memory_space<semaphore_mem>>
    tpu.wait_dma2 semaphore(%334 : memref<!tpu.dma_semaphore, #tpu.memory_space<semaphore_mem>>) src(%330 : memref<1x128xf32, #tpu.memory_space<any>>) dst(%332 : memref<1x128xf32, #tpu.memory_space<vmem>>)
    %c1_i32_290 = arith.constant 1 : i32
    %c1_i32_291 = arith.constant 1 : i32
    %c1_i32_292 = arith.constant 1 : i32
    %c0_i32_293 = arith.constant 0 : i32
    %335 = tpu.memref_slice %arg3[%40, %52, %c0_i32_293] : memref<5x16x128xf32, #tpu.memory_space<any>> -> memref<1x1x128xf32, #tpu.memory_space<any>>
    %336 = tpu.memref_squeeze %335 : memref<1x1x128xf32, #tpu.memory_space<any>> -> memref<1x128xf32, #tpu.memory_space<any>>
    %c1_i32_294 = arith.constant 1 : i32
    %c0_i32_295 = arith.constant 0 : i32
    %337 = tpu.memref_slice %arg5[%c1_i32_290, %c1_i32_294, %c0_i32_295] : memref<8x4x128xf32, #tpu.memory_space<vmem>> -> memref<1x1x128xf32, #tpu.memory_space<vmem>>
    %338 = tpu.memref_squeeze %337 : memref<1x1x128xf32, #tpu.memory_space<vmem>> -> memref<1x128xf32, #tpu.memory_space<vmem>>
    %339 = tpu.memref_slice %arg6[%c1_i32_291, %c1_i32_292] : memref<8x4x!tpu.dma_semaphore, #tpu.memory_space<semaphore_mem>> -> memref<1x1x!tpu.dma_semaphore, #tpu.memory_space<semaphore_mem>>
    %340 = tpu.memref_squeeze %339 : memref<1x1x!tpu.dma_semaphore, #tpu.memory_space<semaphore_mem>> -> memref<!tpu.dma_semaphore, #tpu.memory_space<semaphore_mem>>
    tpu.wait_dma2 semaphore(%340 : memref<!tpu.dma_semaphore, #tpu.memory_space<semaphore_mem>>) src(%336 : memref<1x128xf32, #tpu.memory_space<any>>) dst(%338 : memref<1x128xf32, #tpu.memory_space<vmem>>)
    %c1_i32_296 = arith.constant 1 : i32
    %c1_i32_297 = arith.constant 1 : i32
    %c2_i32_298 = arith.constant 2 : i32
    %c0_i32_299 = arith.constant 0 : i32
    %341 = tpu.memref_slice %arg3[%40, %61, %c0_i32_299] : memref<5x16x128xf32, #tpu.memory_space<any>> -> memref<1x1x128xf32, #tpu.memory_space<any>>
    %342 = tpu.memref_squeeze %341 : memref<1x1x128xf32, #tpu.memory_space<any>> -> memref<1x128xf32, #tpu.memory_space<any>>
    %c2_i32_300 = arith.constant 2 : i32
    %c0_i32_301 = arith.constant 0 : i32
    %343 = tpu.memref_slice %arg5[%c1_i32_296, %c2_i32_300, %c0_i32_301] : memref<8x4x128xf32, #tpu.memory_space<vmem>> -> memref<1x1x128xf32, #tpu.memory_space<vmem>>
    %344 = tpu.memref_squeeze %343 : memref<1x1x128xf32, #tpu.memory_space<vmem>> -> memref<1x128xf32, #tpu.memory_space<vmem>>
    %345 = tpu.memref_slice %arg6[%c1_i32_297, %c2_i32_298] : memref<8x4x!tpu.dma_semaphore, #tpu.memory_space<semaphore_mem>> -> memref<1x1x!tpu.dma_semaphore, #tpu.memory_space<semaphore_mem>>
    %346 = tpu.memref_squeeze %345 : memref<1x1x!tpu.dma_semaphore, #tpu.memory_space<semaphore_mem>> -> memref<!tpu.dma_semaphore, #tpu.memory_space<semaphore_mem>>
    tpu.wait_dma2 semaphore(%346 : memref<!tpu.dma_semaphore, #tpu.memory_space<semaphore_mem>>) src(%342 : memref<1x128xf32, #tpu.memory_space<any>>) dst(%344 : memref<1x128xf32, #tpu.memory_space<vmem>>)
    %c1_i32_302 = arith.constant 1 : i32
    %c1_i32_303 = arith.constant 1 : i32
    %c3_i32_304 = arith.constant 3 : i32
    %c0_i32_305 = arith.constant 0 : i32
    %347 = tpu.memref_slice %arg3[%40, %70, %c0_i32_305] : memref<5x16x128xf32, #tpu.memory_space<any>> -> memref<1x1x128xf32, #tpu.memory_space<any>>
    %348 = tpu.memref_squeeze %347 : memref<1x1x128xf32, #tpu.memory_space<any>> -> memref<1x128xf32, #tpu.memory_space<any>>
    %c3_i32_306 = arith.constant 3 : i32
    %c0_i32_307 = arith.constant 0 : i32
    %349 = tpu.memref_slice %arg5[%c1_i32_302, %c3_i32_306, %c0_i32_307] : memref<8x4x128xf32, #tpu.memory_space<vmem>> -> memref<1x1x128xf32, #tpu.memory_space<vmem>>
    %350 = tpu.memref_squeeze %349 : memref<1x1x128xf32, #tpu.memory_space<vmem>> -> memref<1x128xf32, #tpu.memory_space<vmem>>
    %351 = tpu.memref_slice %arg6[%c1_i32_303, %c3_i32_304] : memref<8x4x!tpu.dma_semaphore, #tpu.memory_space<semaphore_mem>> -> memref<1x1x!tpu.dma_semaphore, #tpu.memory_space<semaphore_mem>>
    %352 = tpu.memref_squeeze %351 : memref<1x1x!tpu.dma_semaphore, #tpu.memory_space<semaphore_mem>> -> memref<!tpu.dma_semaphore, #tpu.memory_space<semaphore_mem>>
    tpu.wait_dma2 semaphore(%352 : memref<!tpu.dma_semaphore, #tpu.memory_space<semaphore_mem>>) src(%348 : memref<1x128xf32, #tpu.memory_space<any>>) dst(%350 : memref<1x128xf32, #tpu.memory_space<vmem>>)
    %c2_i32_308 = arith.constant 2 : i32
    %c2_i32_309 = arith.constant 2 : i32
    %c0_i32_310 = arith.constant 0 : i32
    %c0_i32_311 = arith.constant 0 : i32
    %353 = tpu.memref_slice %arg3[%78, %81, %c0_i32_311] : memref<5x16x128xf32, #tpu.memory_space<any>> -> memref<1x1x128xf32, #tpu.memory_space<any>>
    %354 = tpu.memref_squeeze %353 : memref<1x1x128xf32, #tpu.memory_space<any>> -> memref<1x128xf32, #tpu.memory_space<any>>
    %c0_i32_312 = arith.constant 0 : i32
    %c0_i32_313 = arith.constant 0 : i32
    %355 = tpu.memref_slice %arg5[%c2_i32_308, %c0_i32_312, %c0_i32_313] : memref<8x4x128xf32, #tpu.memory_space<vmem>> -> memref<1x1x128xf32, #tpu.memory_space<vmem>>
    %356 = tpu.memref_squeeze %355 : memref<1x1x128xf32, #tpu.memory_space<vmem>> -> memref<1x128xf32, #tpu.memory_space<vmem>>
    %357 = tpu.memref_slice %arg6[%c2_i32_309, %c0_i32_310] : memref<8x4x!tpu.dma_semaphore, #tpu.memory_space<semaphore_mem>> -> memref<1x1x!tpu.dma_semaphore, #tpu.memory_space<semaphore_mem>>
    %358 = tpu.memref_squeeze %357 : memref<1x1x!tpu.dma_semaphore, #tpu.memory_space<semaphore_mem>> -> memref<!tpu.dma_semaphore, #tpu.memory_space<semaphore_mem>>
    tpu.wait_dma2 semaphore(%358 : memref<!tpu.dma_semaphore, #tpu.memory_space<semaphore_mem>>) src(%354 : memref<1x128xf32, #tpu.memory_space<any>>) dst(%356 : memref<1x128xf32, #tpu.memory_space<vmem>>)
    %c2_i32_314 = arith.constant 2 : i32
    %c2_i32_315 = arith.constant 2 : i32
    %c1_i32_316 = arith.constant 1 : i32
    %c0_i32_317 = arith.constant 0 : i32
    %359 = tpu.memref_slice %arg3[%78, %90, %c0_i32_317] : memref<5x16x128xf32, #tpu.memory_space<any>> -> memref<1x1x128xf32, #tpu.memory_space<any>>
    %360 = tpu.memref_squeeze %359 : memref<1x1x128xf32, #tpu.memory_space<any>> -> memref<1x128xf32, #tpu.memory_space<any>>
    %c1_i32_318 = arith.constant 1 : i32
    %c0_i32_319 = arith.constant 0 : i32
    %361 = tpu.memref_slice %arg5[%c2_i32_314, %c1_i32_318, %c0_i32_319] : memref<8x4x128xf32, #tpu.memory_space<vmem>> -> memref<1x1x128xf32, #tpu.memory_space<vmem>>
    %362 = tpu.memref_squeeze %361 : memref<1x1x128xf32, #tpu.memory_space<vmem>> -> memref<1x128xf32, #tpu.memory_space<vmem>>
    %363 = tpu.memref_slice %arg6[%c2_i32_315, %c1_i32_316] : memref<8x4x!tpu.dma_semaphore, #tpu.memory_space<semaphore_mem>> -> memref<1x1x!tpu.dma_semaphore, #tpu.memory_space<semaphore_mem>>
    %364 = tpu.memref_squeeze %363 : memref<1x1x!tpu.dma_semaphore, #tpu.memory_space<semaphore_mem>> -> memref<!tpu.dma_semaphore, #tpu.memory_space<semaphore_mem>>
    tpu.wait_dma2 semaphore(%364 : memref<!tpu.dma_semaphore, #tpu.memory_space<semaphore_mem>>) src(%360 : memref<1x128xf32, #tpu.memory_space<any>>) dst(%362 : memref<1x128xf32, #tpu.memory_space<vmem>>)
    %c2_i32_320 = arith.constant 2 : i32
    %c2_i32_321 = arith.constant 2 : i32
    %c2_i32_322 = arith.constant 2 : i32
    %c0_i32_323 = arith.constant 0 : i32
    %365 = tpu.memref_slice %arg3[%78, %99, %c0_i32_323] : memref<5x16x128xf32, #tpu.memory_space<any>> -> memref<1x1x128xf32, #tpu.memory_space<any>>
    %366 = tpu.memref_squeeze %365 : memref<1x1x128xf32, #tpu.memory_space<any>> -> memref<1x128xf32, #tpu.memory_space<any>>
    %c2_i32_324 = arith.constant 2 : i32
    %c0_i32_325 = arith.constant 0 : i32
    %367 = tpu.memref_slice %arg5[%c2_i32_320, %c2_i32_324, %c0_i32_325] : memref<8x4x128xf32, #tpu.memory_space<vmem>> -> memref<1x1x128xf32, #tpu.memory_space<vmem>>
    %368 = tpu.memref_squeeze %367 : memref<1x1x128xf32, #tpu.memory_space<vmem>> -> memref<1x128xf32, #tpu.memory_space<vmem>>
    %369 = tpu.memref_slice %arg6[%c2_i32_321, %c2_i32_322] : memref<8x4x!tpu.dma_semaphore, #tpu.memory_space<semaphore_mem>> -> memref<1x1x!tpu.dma_semaphore, #tpu.memory_space<semaphore_mem>>
    %370 = tpu.memref_squeeze %369 : memref<1x1x!tpu.dma_semaphore, #tpu.memory_space<semaphore_mem>> -> memref<!tpu.dma_semaphore, #tpu.memory_space<semaphore_mem>>
    tpu.wait_dma2 semaphore(%370 : memref<!tpu.dma_semaphore, #tpu.memory_space<semaphore_mem>>) src(%366 : memref<1x128xf32, #tpu.memory_space<any>>) dst(%368 : memref<1x128xf32, #tpu.memory_space<vmem>>)
    %c2_i32_326 = arith.constant 2 : i32
    %c2_i32_327 = arith.constant 2 : i32
    %c3_i32_328 = arith.constant 3 : i32
    %c0_i32_329 = arith.constant 0 : i32
    %371 = tpu.memref_slice %arg3[%78, %108, %c0_i32_329] : memref<5x16x128xf32, #tpu.memory_space<any>> -> memref<1x1x128xf32, #tpu.memory_space<any>>
    %372 = tpu.memref_squeeze %371 : memref<1x1x128xf32, #tpu.memory_space<any>> -> memref<1x128xf32, #tpu.memory_space<any>>
    %c3_i32_330 = arith.constant 3 : i32
    %c0_i32_331 = arith.constant 0 : i32
    %373 = tpu.memref_slice %arg5[%c2_i32_326, %c3_i32_330, %c0_i32_331] : memref<8x4x128xf32, #tpu.memory_space<vmem>> -> memref<1x1x128xf32, #tpu.memory_space<vmem>>
    %374 = tpu.memref_squeeze %373 : memref<1x1x128xf32, #tpu.memory_space<vmem>> -> memref<1x128xf32, #tpu.memory_space<vmem>>
    %375 = tpu.memref_slice %arg6[%c2_i32_327, %c3_i32_328] : memref<8x4x!tpu.dma_semaphore, #tpu.memory_space<semaphore_mem>> -> memref<1x1x!tpu.dma_semaphore, #tpu.memory_space<semaphore_mem>>
    %376 = tpu.memref_squeeze %375 : memref<1x1x!tpu.dma_semaphore, #tpu.memory_space<semaphore_mem>> -> memref<!tpu.dma_semaphore, #tpu.memory_space<semaphore_mem>>
    tpu.wait_dma2 semaphore(%376 : memref<!tpu.dma_semaphore, #tpu.memory_space<semaphore_mem>>) src(%372 : memref<1x128xf32, #tpu.memory_space<any>>) dst(%374 : memref<1x128xf32, #tpu.memory_space<vmem>>)
    %c3_i32_332 = arith.constant 3 : i32
    %c3_i32_333 = arith.constant 3 : i32
    %c0_i32_334 = arith.constant 0 : i32
    %c0_i32_335 = arith.constant 0 : i32
    %377 = tpu.memref_slice %arg3[%116, %119, %c0_i32_335] : memref<5x16x128xf32, #tpu.memory_space<any>> -> memref<1x1x128xf32, #tpu.memory_space<any>>
    %378 = tpu.memref_squeeze %377 : memref<1x1x128xf32, #tpu.memory_space<any>> -> memref<1x128xf32, #tpu.memory_space<any>>
    %c0_i32_336 = arith.constant 0 : i32
    %c0_i32_337 = arith.constant 0 : i32
    %379 = tpu.memref_slice %arg5[%c3_i32_332, %c0_i32_336, %c0_i32_337] : memref<8x4x128xf32, #tpu.memory_space<vmem>> -> memref<1x1x128xf32, #tpu.memory_space<vmem>>
    %380 = tpu.memref_squeeze %379 : memref<1x1x128xf32, #tpu.memory_space<vmem>> -> memref<1x128xf32, #tpu.memory_space<vmem>>
    %381 = tpu.memref_slice %arg6[%c3_i32_333, %c0_i32_334] : memref<8x4x!tpu.dma_semaphore, #tpu.memory_space<semaphore_mem>> -> memref<1x1x!tpu.dma_semaphore, #tpu.memory_space<semaphore_mem>>
    %382 = tpu.memref_squeeze %381 : memref<1x1x!tpu.dma_semaphore, #tpu.memory_space<semaphore_mem>> -> memref<!tpu.dma_semaphore, #tpu.memory_space<semaphore_mem>>
    tpu.wait_dma2 semaphore(%382 : memref<!tpu.dma_semaphore, #tpu.memory_space<semaphore_mem>>) src(%378 : memref<1x128xf32, #tpu.memory_space<any>>) dst(%380 : memref<1x128xf32, #tpu.memory_space<vmem>>)
    %c3_i32_338 = arith.constant 3 : i32
    %c3_i32_339 = arith.constant 3 : i32
    %c1_i32_340 = arith.constant 1 : i32
    %c0_i32_341 = arith.constant 0 : i32
    %383 = tpu.memref_slice %arg3[%116, %128, %c0_i32_341] : memref<5x16x128xf32, #tpu.memory_space<any>> -> memref<1x1x128xf32, #tpu.memory_space<any>>
    %384 = tpu.memref_squeeze %383 : memref<1x1x128xf32, #tpu.memory_space<any>> -> memref<1x128xf32, #tpu.memory_space<any>>
    %c1_i32_342 = arith.constant 1 : i32
    %c0_i32_343 = arith.constant 0 : i32
    %385 = tpu.memref_slice %arg5[%c3_i32_338, %c1_i32_342, %c0_i32_343] : memref<8x4x128xf32, #tpu.memory_space<vmem>> -> memref<1x1x128xf32, #tpu.memory_space<vmem>>
    %386 = tpu.memref_squeeze %385 : memref<1x1x128xf32, #tpu.memory_space<vmem>> -> memref<1x128xf32, #tpu.memory_space<vmem>>
    %387 = tpu.memref_slice %arg6[%c3_i32_339, %c1_i32_340] : memref<8x4x!tpu.dma_semaphore, #tpu.memory_space<semaphore_mem>> -> memref<1x1x!tpu.dma_semaphore, #tpu.memory_space<semaphore_mem>>
    %388 = tpu.memref_squeeze %387 : memref<1x1x!tpu.dma_semaphore, #tpu.memory_space<semaphore_mem>> -> memref<!tpu.dma_semaphore, #tpu.memory_space<semaphore_mem>>
    tpu.wait_dma2 semaphore(%388 : memref<!tpu.dma_semaphore, #tpu.memory_space<semaphore_mem>>) src(%384 : memref<1x128xf32, #tpu.memory_space<any>>) dst(%386 : memref<1x128xf32, #tpu.memory_space<vmem>>)
    %c3_i32_344 = arith.constant 3 : i32
    %c3_i32_345 = arith.constant 3 : i32
    %c2_i32_346 = arith.constant 2 : i32
    %c0_i32_347 = arith.constant 0 : i32
    %389 = tpu.memref_slice %arg3[%116, %137, %c0_i32_347] : memref<5x16x128xf32, #tpu.memory_space<any>> -> memref<1x1x128xf32, #tpu.memory_space<any>>
    %390 = tpu.memref_squeeze %389 : memref<1x1x128xf32, #tpu.memory_space<any>> -> memref<1x128xf32, #tpu.memory_space<any>>
    %c2_i32_348 = arith.constant 2 : i32
    %c0_i32_349 = arith.constant 0 : i32
    %391 = tpu.memref_slice %arg5[%c3_i32_344, %c2_i32_348, %c0_i32_349] : memref<8x4x128xf32, #tpu.memory_space<vmem>> -> memref<1x1x128xf32, #tpu.memory_space<vmem>>
    %392 = tpu.memref_squeeze %391 : memref<1x1x128xf32, #tpu.memory_space<vmem>> -> memref<1x128xf32, #tpu.memory_space<vmem>>
    %393 = tpu.memref_slice %arg6[%c3_i32_345, %c2_i32_346] : memref<8x4x!tpu.dma_semaphore, #tpu.memory_space<semaphore_mem>> -> memref<1x1x!tpu.dma_semaphore, #tpu.memory_space<semaphore_mem>>
    %394 = tpu.memref_squeeze %393 : memref<1x1x!tpu.dma_semaphore, #tpu.memory_space<semaphore_mem>> -> memref<!tpu.dma_semaphore, #tpu.memory_space<semaphore_mem>>
    tpu.wait_dma2 semaphore(%394 : memref<!tpu.dma_semaphore, #tpu.memory_space<semaphore_mem>>) src(%390 : memref<1x128xf32, #tpu.memory_space<any>>) dst(%392 : memref<1x128xf32, #tpu.memory_space<vmem>>)
    %c3_i32_350 = arith.constant 3 : i32
    %c3_i32_351 = arith.constant 3 : i32
    %c3_i32_352 = arith.constant 3 : i32
    %c0_i32_353 = arith.constant 0 : i32
    %395 = tpu.memref_slice %arg3[%116, %146, %c0_i32_353] : memref<5x16x128xf32, #tpu.memory_space<any>> -> memref<1x1x128xf32, #tpu.memory_space<any>>
    %396 = tpu.memref_squeeze %395 : memref<1x1x128xf32, #tpu.memory_space<any>> -> memref<1x128xf32, #tpu.memory_space<any>>
    %c3_i32_354 = arith.constant 3 : i32
    %c0_i32_355 = arith.constant 0 : i32
    %397 = tpu.memref_slice %arg5[%c3_i32_350, %c3_i32_354, %c0_i32_355] : memref<8x4x128xf32, #tpu.memory_space<vmem>> -> memref<1x1x128xf32, #tpu.memory_space<vmem>>
    %398 = tpu.memref_squeeze %397 : memref<1x1x128xf32, #tpu.memory_space<vmem>> -> memref<1x128xf32, #tpu.memory_space<vmem>>
    %399 = tpu.memref_slice %arg6[%c3_i32_351, %c3_i32_352] : memref<8x4x!tpu.dma_semaphore, #tpu.memory_space<semaphore_mem>> -> memref<1x1x!tpu.dma_semaphore, #tpu.memory_space<semaphore_mem>>
    %400 = tpu.memref_squeeze %399 : memref<1x1x!tpu.dma_semaphore, #tpu.memory_space<semaphore_mem>> -> memref<!tpu.dma_semaphore, #tpu.memory_space<semaphore_mem>>
    tpu.wait_dma2 semaphore(%400 : memref<!tpu.dma_semaphore, #tpu.memory_space<semaphore_mem>>) src(%396 : memref<1x128xf32, #tpu.memory_space<any>>) dst(%398 : memref<1x128xf32, #tpu.memory_space<vmem>>)
    %c4_i32_356 = arith.constant 4 : i32
    %c4_i32_357 = arith.constant 4 : i32
    %c0_i32_358 = arith.constant 0 : i32
    %c0_i32_359 = arith.constant 0 : i32
    %401 = tpu.memref_slice %arg3[%154, %157, %c0_i32_359] : memref<5x16x128xf32, #tpu.memory_space<any>> -> memref<1x1x128xf32, #tpu.memory_space<any>>
    %402 = tpu.memref_squeeze %401 : memref<1x1x128xf32, #tpu.memory_space<any>> -> memref<1x128xf32, #tpu.memory_space<any>>
    %c0_i32_360 = arith.constant 0 : i32
    %c0_i32_361 = arith.constant 0 : i32
    %403 = tpu.memref_slice %arg5[%c4_i32_356, %c0_i32_360, %c0_i32_361] : memref<8x4x128xf32, #tpu.memory_space<vmem>> -> memref<1x1x128xf32, #tpu.memory_space<vmem>>
    %404 = tpu.memref_squeeze %403 : memref<1x1x128xf32, #tpu.memory_space<vmem>> -> memref<1x128xf32, #tpu.memory_space<vmem>>
    %405 = tpu.memref_slice %arg6[%c4_i32_357, %c0_i32_358] : memref<8x4x!tpu.dma_semaphore, #tpu.memory_space<semaphore_mem>> -> memref<1x1x!tpu.dma_semaphore, #tpu.memory_space<semaphore_mem>>
    %406 = tpu.memref_squeeze %405 : memref<1x1x!tpu.dma_semaphore, #tpu.memory_space<semaphore_mem>> -> memref<!tpu.dma_semaphore, #tpu.memory_space<semaphore_mem>>
    tpu.wait_dma2 semaphore(%406 : memref<!tpu.dma_semaphore, #tpu.memory_space<semaphore_mem>>) src(%402 : memref<1x128xf32, #tpu.memory_space<any>>) dst(%404 : memref<1x128xf32, #tpu.memory_space<vmem>>)
    %c4_i32_362 = arith.constant 4 : i32
    %c4_i32_363 = arith.constant 4 : i32
    %c1_i32_364 = arith.constant 1 : i32
    %c0_i32_365 = arith.constant 0 : i32
    %407 = tpu.memref_slice %arg3[%154, %166, %c0_i32_365] : memref<5x16x128xf32, #tpu.memory_space<any>> -> memref<1x1x128xf32, #tpu.memory_space<any>>
    %408 = tpu.memref_squeeze %407 : memref<1x1x128xf32, #tpu.memory_space<any>> -> memref<1x128xf32, #tpu.memory_space<any>>
    %c1_i32_366 = arith.constant 1 : i32
    %c0_i32_367 = arith.constant 0 : i32
    %409 = tpu.memref_slice %arg5[%c4_i32_362, %c1_i32_366, %c0_i32_367] : memref<8x4x128xf32, #tpu.memory_space<vmem>> -> memref<1x1x128xf32, #tpu.memory_space<vmem>>
    %410 = tpu.memref_squeeze %409 : memref<1x1x128xf32, #tpu.memory_space<vmem>> -> memref<1x128xf32, #tpu.memory_space<vmem>>
    %411 = tpu.memref_slice %arg6[%c4_i32_363, %c1_i32_364] : memref<8x4x!tpu.dma_semaphore, #tpu.memory_space<semaphore_mem>> -> memref<1x1x!tpu.dma_semaphore, #tpu.memory_space<semaphore_mem>>
    %412 = tpu.memref_squeeze %411 : memref<1x1x!tpu.dma_semaphore, #tpu.memory_space<semaphore_mem>> -> memref<!tpu.dma_semaphore, #tpu.memory_space<semaphore_mem>>
    tpu.wait_dma2 semaphore(%412 : memref<!tpu.dma_semaphore, #tpu.memory_space<semaphore_mem>>) src(%408 : memref<1x128xf32, #tpu.memory_space<any>>) dst(%410 : memref<1x128xf32, #tpu.memory_space<vmem>>)
    %c4_i32_368 = arith.constant 4 : i32
    %c4_i32_369 = arith.constant 4 : i32
    %c2_i32_370 = arith.constant 2 : i32
    %c0_i32_371 = arith.constant 0 : i32
    %413 = tpu.memref_slice %arg3[%154, %175, %c0_i32_371] : memref<5x16x128xf32, #tpu.memory_space<any>> -> memref<1x1x128xf32, #tpu.memory_space<any>>
    %414 = tpu.memref_squeeze %413 : memref<1x1x128xf32, #tpu.memory_space<any>> -> memref<1x128xf32, #tpu.memory_space<any>>
    %c2_i32_372 = arith.constant 2 : i32
    %c0_i32_373 = arith.constant 0 : i32
    %415 = tpu.memref_slice %arg5[%c4_i32_368, %c2_i32_372, %c0_i32_373] : memref<8x4x128xf32, #tpu.memory_space<vmem>> -> memref<1x1x128xf32, #tpu.memory_space<vmem>>
    %416 = tpu.memref_squeeze %415 : memref<1x1x128xf32, #tpu.memory_space<vmem>> -> memref<1x128xf32, #tpu.memory_space<vmem>>
    %417 = tpu.memref_slice %arg6[%c4_i32_369, %c2_i32_370] : memref<8x4x!tpu.dma_semaphore, #tpu.memory_space<semaphore_mem>> -> memref<1x1x!tpu.dma_semaphore, #tpu.memory_space<semaphore_mem>>
    %418 = tpu.memref_squeeze %417 : memref<1x1x!tpu.dma_semaphore, #tpu.memory_space<semaphore_mem>> -> memref<!tpu.dma_semaphore, #tpu.memory_space<semaphore_mem>>
    tpu.wait_dma2 semaphore(%418 : memref<!tpu.dma_semaphore, #tpu.memory_space<semaphore_mem>>) src(%414 : memref<1x128xf32, #tpu.memory_space<any>>) dst(%416 : memref<1x128xf32, #tpu.memory_space<vmem>>)
    %c4_i32_374 = arith.constant 4 : i32
    %c4_i32_375 = arith.constant 4 : i32
    %c3_i32_376 = arith.constant 3 : i32
    %c0_i32_377 = arith.constant 0 : i32
    %419 = tpu.memref_slice %arg3[%154, %184, %c0_i32_377] : memref<5x16x128xf32, #tpu.memory_space<any>> -> memref<1x1x128xf32, #tpu.memory_space<any>>
    %420 = tpu.memref_squeeze %419 : memref<1x1x128xf32, #tpu.memory_space<any>> -> memref<1x128xf32, #tpu.memory_space<any>>
    %c3_i32_378 = arith.constant 3 : i32
    %c0_i32_379 = arith.constant 0 : i32
    %421 = tpu.memref_slice %arg5[%c4_i32_374, %c3_i32_378, %c0_i32_379] : memref<8x4x128xf32, #tpu.memory_space<vmem>> -> memref<1x1x128xf32, #tpu.memory_space<vmem>>
    %422 = tpu.memref_squeeze %421 : memref<1x1x128xf32, #tpu.memory_space<vmem>> -> memref<1x128xf32, #tpu.memory_space<vmem>>
    %423 = tpu.memref_slice %arg6[%c4_i32_375, %c3_i32_376] : memref<8x4x!tpu.dma_semaphore, #tpu.memory_space<semaphore_mem>> -> memref<1x1x!tpu.dma_semaphore, #tpu.memory_space<semaphore_mem>>
    %424 = tpu.memref_squeeze %423 : memref<1x1x!tpu.dma_semaphore, #tpu.memory_space<semaphore_mem>> -> memref<!tpu.dma_semaphore, #tpu.memory_space<semaphore_mem>>
    tpu.wait_dma2 semaphore(%424 : memref<!tpu.dma_semaphore, #tpu.memory_space<semaphore_mem>>) src(%420 : memref<1x128xf32, #tpu.memory_space<any>>) dst(%422 : memref<1x128xf32, #tpu.memory_space<vmem>>)
    %c5_i32_380 = arith.constant 5 : i32
    %c5_i32_381 = arith.constant 5 : i32
    %c0_i32_382 = arith.constant 0 : i32
    %c0_i32_383 = arith.constant 0 : i32
    %425 = tpu.memref_slice %arg3[%192, %195, %c0_i32_383] : memref<5x16x128xf32, #tpu.memory_space<any>> -> memref<1x1x128xf32, #tpu.memory_space<any>>
    %426 = tpu.memref_squeeze %425 : memref<1x1x128xf32, #tpu.memory_space<any>> -> memref<1x128xf32, #tpu.memory_space<any>>
    %c0_i32_384 = arith.constant 0 : i32
    %c0_i32_385 = arith.constant 0 : i32
    %427 = tpu.memref_slice %arg5[%c5_i32_380, %c0_i32_384, %c0_i32_385] : memref<8x4x128xf32, #tpu.memory_space<vmem>> -> memref<1x1x128xf32, #tpu.memory_space<vmem>>
    %428 = tpu.memref_squeeze %427 : memref<1x1x128xf32, #tpu.memory_space<vmem>> -> memref<1x128xf32, #tpu.memory_space<vmem>>
    %429 = tpu.memref_slice %arg6[%c5_i32_381, %c0_i32_382] : memref<8x4x!tpu.dma_semaphore, #tpu.memory_space<semaphore_mem>> -> memref<1x1x!tpu.dma_semaphore, #tpu.memory_space<semaphore_mem>>
    %430 = tpu.memref_squeeze %429 : memref<1x1x!tpu.dma_semaphore, #tpu.memory_space<semaphore_mem>> -> memref<!tpu.dma_semaphore, #tpu.memory_space<semaphore_mem>>
    tpu.wait_dma2 semaphore(%430 : memref<!tpu.dma_semaphore, #tpu.memory_space<semaphore_mem>>) src(%426 : memref<1x128xf32, #tpu.memory_space<any>>) dst(%428 : memref<1x128xf32, #tpu.memory_space<vmem>>)
    %c5_i32_386 = arith.constant 5 : i32
    %c5_i32_387 = arith.constant 5 : i32
    %c1_i32_388 = arith.constant 1 : i32
    %c0_i32_389 = arith.constant 0 : i32
    %431 = tpu.memref_slice %arg3[%192, %204, %c0_i32_389] : memref<5x16x128xf32, #tpu.memory_space<any>> -> memref<1x1x128xf32, #tpu.memory_space<any>>
    %432 = tpu.memref_squeeze %431 : memref<1x1x128xf32, #tpu.memory_space<any>> -> memref<1x128xf32, #tpu.memory_space<any>>
    %c1_i32_390 = arith.constant 1 : i32
    %c0_i32_391 = arith.constant 0 : i32
    %433 = tpu.memref_slice %arg5[%c5_i32_386, %c1_i32_390, %c0_i32_391] : memref<8x4x128xf32, #tpu.memory_space<vmem>> -> memref<1x1x128xf32, #tpu.memory_space<vmem>>
    %434 = tpu.memref_squeeze %433 : memref<1x1x128xf32, #tpu.memory_space<vmem>> -> memref<1x128xf32, #tpu.memory_space<vmem>>
    %435 = tpu.memref_slice %arg6[%c5_i32_387, %c1_i32_388] : memref<8x4x!tpu.dma_semaphore, #tpu.memory_space<semaphore_mem>> -> memref<1x1x!tpu.dma_semaphore, #tpu.memory_space<semaphore_mem>>
    %436 = tpu.memref_squeeze %435 : memref<1x1x!tpu.dma_semaphore, #tpu.memory_space<semaphore_mem>> -> memref<!tpu.dma_semaphore, #tpu.memory_space<semaphore_mem>>
    tpu.wait_dma2 semaphore(%436 : memref<!tpu.dma_semaphore, #tpu.memory_space<semaphore_mem>>) src(%432 : memref<1x128xf32, #tpu.memory_space<any>>) dst(%434 : memref<1x128xf32, #tpu.memory_space<vmem>>)
    %c5_i32_392 = arith.constant 5 : i32
    %c5_i32_393 = arith.constant 5 : i32
    %c2_i32_394 = arith.constant 2 : i32
    %c0_i32_395 = arith.constant 0 : i32
    %437 = tpu.memref_slice %arg3[%192, %213, %c0_i32_395] : memref<5x16x128xf32, #tpu.memory_space<any>> -> memref<1x1x128xf32, #tpu.memory_space<any>>
    %438 = tpu.memref_squeeze %437 : memref<1x1x128xf32, #tpu.memory_space<any>> -> memref<1x128xf32, #tpu.memory_space<any>>
    %c2_i32_396 = arith.constant 2 : i32
    %c0_i32_397 = arith.constant 0 : i32
    %439 = tpu.memref_slice %arg5[%c5_i32_392, %c2_i32_396, %c0_i32_397] : memref<8x4x128xf32, #tpu.memory_space<vmem>> -> memref<1x1x128xf32, #tpu.memory_space<vmem>>
    %440 = tpu.memref_squeeze %439 : memref<1x1x128xf32, #tpu.memory_space<vmem>> -> memref<1x128xf32, #tpu.memory_space<vmem>>
    %441 = tpu.memref_slice %arg6[%c5_i32_393, %c2_i32_394] : memref<8x4x!tpu.dma_semaphore, #tpu.memory_space<semaphore_mem>> -> memref<1x1x!tpu.dma_semaphore, #tpu.memory_space<semaphore_mem>>
    %442 = tpu.memref_squeeze %441 : memref<1x1x!tpu.dma_semaphore, #tpu.memory_space<semaphore_mem>> -> memref<!tpu.dma_semaphore, #tpu.memory_space<semaphore_mem>>
    tpu.wait_dma2 semaphore(%442 : memref<!tpu.dma_semaphore, #tpu.memory_space<semaphore_mem>>) src(%438 : memref<1x128xf32, #tpu.memory_space<any>>) dst(%440 : memref<1x128xf32, #tpu.memory_space<vmem>>)
    %c5_i32_398 = arith.constant 5 : i32
    %c5_i32_399 = arith.constant 5 : i32
    %c3_i32_400 = arith.constant 3 : i32
    %c0_i32_401 = arith.constant 0 : i32
    %443 = tpu.memref_slice %arg3[%192, %222, %c0_i32_401] : memref<5x16x128xf32, #tpu.memory_space<any>> -> memref<1x1x128xf32, #tpu.memory_space<any>>
    %444 = tpu.memref_squeeze %443 : memref<1x1x128xf32, #tpu.memory_space<any>> -> memref<1x128xf32, #tpu.memory_space<any>>
    %c3_i32_402 = arith.constant 3 : i32
    %c0_i32_403 = arith.constant 0 : i32
    %445 = tpu.memref_slice %arg5[%c5_i32_398, %c3_i32_402, %c0_i32_403] : memref<8x4x128xf32, #tpu.memory_space<vmem>> -> memref<1x1x128xf32, #tpu.memory_space<vmem>>
    %446 = tpu.memref_squeeze %445 : memref<1x1x128xf32, #tpu.memory_space<vmem>> -> memref<1x128xf32, #tpu.memory_space<vmem>>
    %447 = tpu.memref_slice %arg6[%c5_i32_399, %c3_i32_400] : memref<8x4x!tpu.dma_semaphore, #tpu.memory_space<semaphore_mem>> -> memref<1x1x!tpu.dma_semaphore, #tpu.memory_space<semaphore_mem>>
    %448 = tpu.memref_squeeze %447 : memref<1x1x!tpu.dma_semaphore, #tpu.memory_space<semaphore_mem>> -> memref<!tpu.dma_semaphore, #tpu.memory_space<semaphore_mem>>
    tpu.wait_dma2 semaphore(%448 : memref<!tpu.dma_semaphore, #tpu.memory_space<semaphore_mem>>) src(%444 : memref<1x128xf32, #tpu.memory_space<any>>) dst(%446 : memref<1x128xf32, #tpu.memory_space<vmem>>)
    %c6_i32_404 = arith.constant 6 : i32
    %c6_i32_405 = arith.constant 6 : i32
    %c0_i32_406 = arith.constant 0 : i32
    %c0_i32_407 = arith.constant 0 : i32
    %449 = tpu.memref_slice %arg3[%230, %233, %c0_i32_407] : memref<5x16x128xf32, #tpu.memory_space<any>> -> memref<1x1x128xf32, #tpu.memory_space<any>>
    %450 = tpu.memref_squeeze %449 : memref<1x1x128xf32, #tpu.memory_space<any>> -> memref<1x128xf32, #tpu.memory_space<any>>
    %c0_i32_408 = arith.constant 0 : i32
    %c0_i32_409 = arith.constant 0 : i32
    %451 = tpu.memref_slice %arg5[%c6_i32_404, %c0_i32_408, %c0_i32_409] : memref<8x4x128xf32, #tpu.memory_space<vmem>> -> memref<1x1x128xf32, #tpu.memory_space<vmem>>
    %452 = tpu.memref_squeeze %451 : memref<1x1x128xf32, #tpu.memory_space<vmem>> -> memref<1x128xf32, #tpu.memory_space<vmem>>
    %453 = tpu.memref_slice %arg6[%c6_i32_405, %c0_i32_406] : memref<8x4x!tpu.dma_semaphore, #tpu.memory_space<semaphore_mem>> -> memref<1x1x!tpu.dma_semaphore, #tpu.memory_space<semaphore_mem>>
    %454 = tpu.memref_squeeze %453 : memref<1x1x!tpu.dma_semaphore, #tpu.memory_space<semaphore_mem>> -> memref<!tpu.dma_semaphore, #tpu.memory_space<semaphore_mem>>
    tpu.wait_dma2 semaphore(%454 : memref<!tpu.dma_semaphore, #tpu.memory_space<semaphore_mem>>) src(%450 : memref<1x128xf32, #tpu.memory_space<any>>) dst(%452 : memref<1x128xf32, #tpu.memory_space<vmem>>)
    %c6_i32_410 = arith.constant 6 : i32
    %c6_i32_411 = arith.constant 6 : i32
    %c1_i32_412 = arith.constant 1 : i32
    %c0_i32_413 = arith.constant 0 : i32
    %455 = tpu.memref_slice %arg3[%230, %242, %c0_i32_413] : memref<5x16x128xf32, #tpu.memory_space<any>> -> memref<1x1x128xf32, #tpu.memory_space<any>>
    %456 = tpu.memref_squeeze %455 : memref<1x1x128xf32, #tpu.memory_space<any>> -> memref<1x128xf32, #tpu.memory_space<any>>
    %c1_i32_414 = arith.constant 1 : i32
    %c0_i32_415 = arith.constant 0 : i32
    %457 = tpu.memref_slice %arg5[%c6_i32_410, %c1_i32_414, %c0_i32_415] : memref<8x4x128xf32, #tpu.memory_space<vmem>> -> memref<1x1x128xf32, #tpu.memory_space<vmem>>
    %458 = tpu.memref_squeeze %457 : memref<1x1x128xf32, #tpu.memory_space<vmem>> -> memref<1x128xf32, #tpu.memory_space<vmem>>
    %459 = tpu.memref_slice %arg6[%c6_i32_411, %c1_i32_412] : memref<8x4x!tpu.dma_semaphore, #tpu.memory_space<semaphore_mem>> -> memref<1x1x!tpu.dma_semaphore, #tpu.memory_space<semaphore_mem>>
    %460 = tpu.memref_squeeze %459 : memref<1x1x!tpu.dma_semaphore, #tpu.memory_space<semaphore_mem>> -> memref<!tpu.dma_semaphore, #tpu.memory_space<semaphore_mem>>
    tpu.wait_dma2 semaphore(%460 : memref<!tpu.dma_semaphore, #tpu.memory_space<semaphore_mem>>) src(%456 : memref<1x128xf32, #tpu.memory_space<any>>) dst(%458 : memref<1x128xf32, #tpu.memory_space<vmem>>)
    %c6_i32_416 = arith.constant 6 : i32
    %c6_i32_417 = arith.constant 6 : i32
    %c2_i32_418 = arith.constant 2 : i32
    %c0_i32_419 = arith.constant 0 : i32
    %461 = tpu.memref_slice %arg3[%230, %251, %c0_i32_419] : memref<5x16x128xf32, #tpu.memory_space<any>> -> memref<1x1x128xf32, #tpu.memory_space<any>>
    %462 = tpu.memref_squeeze %461 : memref<1x1x128xf32, #tpu.memory_space<any>> -> memref<1x128xf32, #tpu.memory_space<any>>
    %c2_i32_420 = arith.constant 2 : i32
    %c0_i32_421 = arith.constant 0 : i32
    %463 = tpu.memref_slice %arg5[%c6_i32_416, %c2_i32_420, %c0_i32_421] : memref<8x4x128xf32, #tpu.memory_space<vmem>> -> memref<1x1x128xf32, #tpu.memory_space<vmem>>
    %464 = tpu.memref_squeeze %463 : memref<1x1x128xf32, #tpu.memory_space<vmem>> -> memref<1x128xf32, #tpu.memory_space<vmem>>
    %465 = tpu.memref_slice %arg6[%c6_i32_417, %c2_i32_418] : memref<8x4x!tpu.dma_semaphore, #tpu.memory_space<semaphore_mem>> -> memref<1x1x!tpu.dma_semaphore, #tpu.memory_space<semaphore_mem>>
    %466 = tpu.memref_squeeze %465 : memref<1x1x!tpu.dma_semaphore, #tpu.memory_space<semaphore_mem>> -> memref<!tpu.dma_semaphore, #tpu.memory_space<semaphore_mem>>
    tpu.wait_dma2 semaphore(%466 : memref<!tpu.dma_semaphore, #tpu.memory_space<semaphore_mem>>) src(%462 : memref<1x128xf32, #tpu.memory_space<any>>) dst(%464 : memref<1x128xf32, #tpu.memory_space<vmem>>)
    %c6_i32_422 = arith.constant 6 : i32
    %c6_i32_423 = arith.constant 6 : i32
    %c3_i32_424 = arith.constant 3 : i32
    %c0_i32_425 = arith.constant 0 : i32
    %467 = tpu.memref_slice %arg3[%230, %260, %c0_i32_425] : memref<5x16x128xf32, #tpu.memory_space<any>> -> memref<1x1x128xf32, #tpu.memory_space<any>>
    %468 = tpu.memref_squeeze %467 : memref<1x1x128xf32, #tpu.memory_space<any>> -> memref<1x128xf32, #tpu.memory_space<any>>
    %c3_i32_426 = arith.constant 3 : i32
    %c0_i32_427 = arith.constant 0 : i32
    %469 = tpu.memref_slice %arg5[%c6_i32_422, %c3_i32_426, %c0_i32_427] : memref<8x4x128xf32, #tpu.memory_space<vmem>> -> memref<1x1x128xf32, #tpu.memory_space<vmem>>
    %470 = tpu.memref_squeeze %469 : memref<1x1x128xf32, #tpu.memory_space<vmem>> -> memref<1x128xf32, #tpu.memory_space<vmem>>
    %471 = tpu.memref_slice %arg6[%c6_i32_423, %c3_i32_424] : memref<8x4x!tpu.dma_semaphore, #tpu.memory_space<semaphore_mem>> -> memref<1x1x!tpu.dma_semaphore, #tpu.memory_space<semaphore_mem>>
    %472 = tpu.memref_squeeze %471 : memref<1x1x!tpu.dma_semaphore, #tpu.memory_space<semaphore_mem>> -> memref<!tpu.dma_semaphore, #tpu.memory_space<semaphore_mem>>
    tpu.wait_dma2 semaphore(%472 : memref<!tpu.dma_semaphore, #tpu.memory_space<semaphore_mem>>) src(%468 : memref<1x128xf32, #tpu.memory_space<any>>) dst(%470 : memref<1x128xf32, #tpu.memory_space<vmem>>)
    %c7_i32_428 = arith.constant 7 : i32
    %c7_i32_429 = arith.constant 7 : i32
    %c0_i32_430 = arith.constant 0 : i32
    %c0_i32_431 = arith.constant 0 : i32
    %473 = tpu.memref_slice %arg3[%268, %271, %c0_i32_431] : memref<5x16x128xf32, #tpu.memory_space<any>> -> memref<1x1x128xf32, #tpu.memory_space<any>>
    %474 = tpu.memref_squeeze %473 : memref<1x1x128xf32, #tpu.memory_space<any>> -> memref<1x128xf32, #tpu.memory_space<any>>
    %c0_i32_432 = arith.constant 0 : i32
    %c0_i32_433 = arith.constant 0 : i32
    %475 = tpu.memref_slice %arg5[%c7_i32_428, %c0_i32_432, %c0_i32_433] : memref<8x4x128xf32, #tpu.memory_space<vmem>> -> memref<1x1x128xf32, #tpu.memory_space<vmem>>
    %476 = tpu.memref_squeeze %475 : memref<1x1x128xf32, #tpu.memory_space<vmem>> -> memref<1x128xf32, #tpu.memory_space<vmem>>
    %477 = tpu.memref_slice %arg6[%c7_i32_429, %c0_i32_430] : memref<8x4x!tpu.dma_semaphore, #tpu.memory_space<semaphore_mem>> -> memref<1x1x!tpu.dma_semaphore, #tpu.memory_space<semaphore_mem>>
    %478 = tpu.memref_squeeze %477 : memref<1x1x!tpu.dma_semaphore, #tpu.memory_space<semaphore_mem>> -> memref<!tpu.dma_semaphore, #tpu.memory_space<semaphore_mem>>
    tpu.wait_dma2 semaphore(%478 : memref<!tpu.dma_semaphore, #tpu.memory_space<semaphore_mem>>) src(%474 : memref<1x128xf32, #tpu.memory_space<any>>) dst(%476 : memref<1x128xf32, #tpu.memory_space<vmem>>)
    %c7_i32_434 = arith.constant 7 : i32
    %c7_i32_435 = arith.constant 7 : i32
    %c1_i32_436 = arith.constant 1 : i32
    %c0_i32_437 = arith.constant 0 : i32
    %479 = tpu.memref_slice %arg3[%268, %280, %c0_i32_437] : memref<5x16x128xf32, #tpu.memory_space<any>> -> memref<1x1x128xf32, #tpu.memory_space<any>>
    %480 = tpu.memref_squeeze %479 : memref<1x1x128xf32, #tpu.memory_space<any>> -> memref<1x128xf32, #tpu.memory_space<any>>
    %c1_i32_438 = arith.constant 1 : i32
    %c0_i32_439 = arith.constant 0 : i32
    %481 = tpu.memref_slice %arg5[%c7_i32_434, %c1_i32_438, %c0_i32_439] : memref<8x4x128xf32, #tpu.memory_space<vmem>> -> memref<1x1x128xf32, #tpu.memory_space<vmem>>
    %482 = tpu.memref_squeeze %481 : memref<1x1x128xf32, #tpu.memory_space<vmem>> -> memref<1x128xf32, #tpu.memory_space<vmem>>
    %483 = tpu.memref_slice %arg6[%c7_i32_435, %c1_i32_436] : memref<8x4x!tpu.dma_semaphore, #tpu.memory_space<semaphore_mem>> -> memref<1x1x!tpu.dma_semaphore, #tpu.memory_space<semaphore_mem>>
    %484 = tpu.memref_squeeze %483 : memref<1x1x!tpu.dma_semaphore, #tpu.memory_space<semaphore_mem>> -> memref<!tpu.dma_semaphore, #tpu.memory_space<semaphore_mem>>
    tpu.wait_dma2 semaphore(%484 : memref<!tpu.dma_semaphore, #tpu.memory_space<semaphore_mem>>) src(%480 : memref<1x128xf32, #tpu.memory_space<any>>) dst(%482 : memref<1x128xf32, #tpu.memory_space<vmem>>)
    %c7_i32_440 = arith.constant 7 : i32
    %c7_i32_441 = arith.constant 7 : i32
    %c2_i32_442 = arith.constant 2 : i32
    %c0_i32_443 = arith.constant 0 : i32
    %485 = tpu.memref_slice %arg3[%268, %289, %c0_i32_443] : memref<5x16x128xf32, #tpu.memory_space<any>> -> memref<1x1x128xf32, #tpu.memory_space<any>>
    %486 = tpu.memref_squeeze %485 : memref<1x1x128xf32, #tpu.memory_space<any>> -> memref<1x128xf32, #tpu.memory_space<any>>
    %c2_i32_444 = arith.constant 2 : i32
    %c0_i32_445 = arith.constant 0 : i32
    %487 = tpu.memref_slice %arg5[%c7_i32_440, %c2_i32_444, %c0_i32_445] : memref<8x4x128xf32, #tpu.memory_space<vmem>> -> memref<1x1x128xf32, #tpu.memory_space<vmem>>
    %488 = tpu.memref_squeeze %487 : memref<1x1x128xf32, #tpu.memory_space<vmem>> -> memref<1x128xf32, #tpu.memory_space<vmem>>
    %489 = tpu.memref_slice %arg6[%c7_i32_441, %c2_i32_442] : memref<8x4x!tpu.dma_semaphore, #tpu.memory_space<semaphore_mem>> -> memref<1x1x!tpu.dma_semaphore, #tpu.memory_space<semaphore_mem>>
    %490 = tpu.memref_squeeze %489 : memref<1x1x!tpu.dma_semaphore, #tpu.memory_space<semaphore_mem>> -> memref<!tpu.dma_semaphore, #tpu.memory_space<semaphore_mem>>
    tpu.wait_dma2 semaphore(%490 : memref<!tpu.dma_semaphore, #tpu.memory_space<semaphore_mem>>) src(%486 : memref<1x128xf32, #tpu.memory_space<any>>) dst(%488 : memref<1x128xf32, #tpu.memory_space<vmem>>)
    %c7_i32_446 = arith.constant 7 : i32
    %c7_i32_447 = arith.constant 7 : i32
    %c3_i32_448 = arith.constant 3 : i32
    %c0_i32_449 = arith.constant 0 : i32
    %491 = tpu.memref_slice %arg3[%268, %298, %c0_i32_449] : memref<5x16x128xf32, #tpu.memory_space<any>> -> memref<1x1x128xf32, #tpu.memory_space<any>>
    %492 = tpu.memref_squeeze %491 : memref<1x1x128xf32, #tpu.memory_space<any>> -> memref<1x128xf32, #tpu.memory_space<any>>
    %c3_i32_450 = arith.constant 3 : i32
    %c0_i32_451 = arith.constant 0 : i32
    %493 = tpu.memref_slice %arg5[%c7_i32_446, %c3_i32_450, %c0_i32_451] : memref<8x4x128xf32, #tpu.memory_space<vmem>> -> memref<1x1x128xf32, #tpu.memory_space<vmem>>
    %494 = tpu.memref_squeeze %493 : memref<1x1x128xf32, #tpu.memory_space<vmem>> -> memref<1x128xf32, #tpu.memory_space<vmem>>
    %495 = tpu.memref_slice %arg6[%c7_i32_447, %c3_i32_448] : memref<8x4x!tpu.dma_semaphore, #tpu.memory_space<semaphore_mem>> -> memref<1x1x!tpu.dma_semaphore, #tpu.memory_space<semaphore_mem>>
    %496 = tpu.memref_squeeze %495 : memref<1x1x!tpu.dma_semaphore, #tpu.memory_space<semaphore_mem>> -> memref<!tpu.dma_semaphore, #tpu.memory_space<semaphore_mem>>
    tpu.wait_dma2 semaphore(%496 : memref<!tpu.dma_semaphore, #tpu.memory_space<semaphore_mem>>) src(%492 : memref<1x128xf32, #tpu.memory_space<any>>) dst(%494 : memref<1x128xf32, #tpu.memory_space<vmem>>)
    %c0_452 = arith.constant 0 : index
    %c0_453 = arith.constant 0 : index
    %c0_454 = arith.constant 0 : index
    %497 = vector.load %arg5[%c0_452, %c0_453, %c0_454] : memref<8x4x128xf32, #tpu.memory_space<vmem>>, vector<8x4x128xf32>
    %498 = vector.extract_strided_slice %497 {offsets = [0, 0, 0], sizes = [8, 1, 128], strides = [1, 1, 1]} : vector<8x4x128xf32> to vector<8x1x128xf32>
    %499 = vector.extract_strided_slice %497 {offsets = [0, 1, 0], sizes = [8, 3, 128], strides = [1, 1, 1]} : vector<8x4x128xf32> to vector<8x3x128xf32>
    %500 = vector.broadcast %498 : vector<8x1x128xf32> to vector<8x3x128xf32>
    %501 = arith.mulf %499, %500 : vector<8x3x128xf32>
    %cst = arith.constant dense<0.000000e+00> : vector<8x3xf32>
    %502 = vector.multi_reduction <add>, %501, %cst [2] : vector<8x3x128xf32> to vector<8x3xf32>
    %503 = arith.mulf %499, %499 : vector<8x3x128xf32>
    %cst_455 = arith.constant dense<0.000000e+00> : vector<8x3xf32>
    %504 = vector.multi_reduction <add>, %503, %cst_455 [2] : vector<8x3x128xf32> to vector<8x3xf32>
    %505 = arith.mulf %498, %498 : vector<8x1x128xf32>
    %cst_456 = arith.constant dense<0.000000e+00> : vector<8x1xf32>
    %506 = vector.multi_reduction <add>, %505, %cst_456 [2] : vector<8x1x128xf32> to vector<8x1xf32>
    %cst_457 = arith.constant 9.99999996E-13 : f32
    %507 = vector.broadcast %cst_457 : f32 to vector<8x3xf32>
    %508 = arith.maximumf %504, %507 : vector<8x3xf32>
    %cst_458 = arith.constant 9.99999996E-13 : f32
    %509 = vector.broadcast %cst_458 : f32 to vector<8x1xf32>
    %510 = arith.maximumf %506, %509 : vector<8x1xf32>
    %511 = vector.broadcast %510 : vector<8x1xf32> to vector<8x3xf32>
    %512 = arith.mulf %508, %511 : vector<8x3xf32>
    %513 = math.rsqrt %512 : vector<8x3xf32>
    %514 = arith.mulf %502, %513 : vector<8x3xf32>
    %c0_459 = arith.constant 0 : index
    %c0_460 = arith.constant 0 : index
    %515 = vector.load %arg2[%c0_459, %c0_460] : memref<8x1xi32, #tpu.memory_space<vmem>>, vector<8x1xi32>
    %cst_461 = arith.constant dense<0xFF800000> : vector<8xf32>
    %516 = vector.multi_reduction <maximumf>, %514, %cst_461 [1] : vector<8x3xf32> to vector<8xf32>
    %517 = vector.shape_cast %516 : vector<8xf32> to vector<8x1xf32>
    %518 = vector.broadcast %517 : vector<8x1xf32> to vector<8x3xf32>
    %519 = arith.subf %514, %518 : vector<8x3xf32>
    %520 = math.exp %519 : vector<8x3xf32>
    %cst_462 = arith.constant dense<0.000000e+00> : vector<8xf32>
    %521 = vector.multi_reduction <add>, %520, %cst_462 [1] : vector<8x3xf32> to vector<8xf32>
    %522 = vector.shape_cast %521 : vector<8xf32> to vector<8x1xf32>
    %523 = math.log %522 : vector<8x1xf32>
    %524 = arith.addf %517, %523 : vector<8x1xf32>
    %525 = tpu.iota {dimensions = array<i32: 1>} : vector<8x3xi32>
    %526 = vector.broadcast %515 : vector<8x1xi32> to vector<8x3xi32>
    %527 = arith.cmpi eq, %525, %526 : vector<8x3xi32>
    %cst_463 = arith.constant 0.000000e+00 : f32
    %528 = vector.broadcast %cst_463 : f32 to vector<8x3xf32>
    %529 = arith.select %527, %514, %528 : vector<8x3xi1>, vector<8x3xf32>
    %cst_464 = arith.constant dense<0.000000e+00> : vector<8xf32>
    %530 = vector.multi_reduction <add>, %529, %cst_464 [1] : vector<8x3xf32> to vector<8xf32>
    %531 = vector.shape_cast %530 : vector<8xf32> to vector<8x1xf32>
    %532 = arith.subf %524, %531 : vector<8x1xf32>
    %c0_465 = arith.constant 0 : index
    %c0_466 = arith.constant 0 : index
    %533 = vector.load %arg4[%c0_465, %c0_466] : memref<8x4xf32, #tpu.memory_space<vmem>>, vector<8x3xf32>
    tpu.vector_store %arg4[%c0_465, %c0_466], %514 {strides = array<i32>} : memref<8x4xf32, #tpu.memory_space<vmem>>, vector<8x3xf32>,
    %c0_467 = arith.constant 0 : index
    %c3_468 = arith.constant 3 : index
    %534 = vector.load %arg4[%c0_467, %c3_468] : memref<8x4xf32, #tpu.memory_space<vmem>>, vector<8x1xf32>
    tpu.vector_store %arg4[%c0_467, %c3_468], %532 {strides = array<i32>} : memref<8x4xf32, #tpu.memory_space<vmem>>, vector<8x1xf32>,
    return
  }
  func.func @transform_0(%arg0: i32, %arg1: memref<8x4xi32, #tpu.memory_space<smem>>) -> (i32, i32) {
    %c0_i32 = arith.constant 0 : i32
    %c0_i32_0 = arith.constant 0 : i32
    return %arg0, %c0_i32 : i32, i32
  }
  func.func @transform_2(%arg0: i32, %arg1: memref<8x4xi32, #tpu.memory_space<smem>>) -> (i32, i32) {
    %c0_i32 = arith.constant 0 : i32
    %c0_i32_0 = arith.constant 0 : i32
    return %arg0, %c0_i32 : i32, i32
  }
}

</mosaic_0001>

<llo_original>
// kernel: tpu_custom_call.1
$region0: #{tpu_custom_call.1}
  #allocation0 [shape = 'u32[]', space=smem, size = 0x4, offset = 0x4, fixed_abs, tag = 'smem constant byte address 0x4 - core index']
  #allocation1 [shape = 'u32[144,128]{1,0:T(1,128)}', space=vmem, size = 0x12000, scoped, tag = 'internal scratch']
  #allocation2 [shape = 'f32[8,4,128]{2,1,0:T(4,128)}', space=vmem, size = 0x4000, scoped, tag = 'scratch operand']
  #allocation3 [shape = 's32[32]{0}', space=sflag, size = 0x80, scoped, tag = 'scratch operand']
  #allocation4 [shape = 's32[1]{0}', space=sflag, size = 0x4, scoped, tag = 'scoped memory for tpu_custom_call.1']
  #allocation5 [shape = 'u8[4096]{0}', space=smem, size = 0x1000, scoped, tag = 'prefetched SMEM operand 0']
  #allocation6 [shape = 's32[]', space=sflag, size = 0x4, offset = 0, fixed_abs, tag = 'sflag constant byte address 0x0 - dummy sync flag']
  #allocation7 [shape = 's32[]', space=sflag, size = 0x4, offset = 0, fixed_abs, tag = 'sflag constant byte address 0x0 - dummy sync flag']
  #allocation8 [shape = 'u32[]', space=smem, size = 0x4, offset = 0x44, fixed_abs, tag = 'smem constant byte address 0x44 - assertion arg 0']
  #allocation9 [shape = 'u32[]', space=smem, size = 0x4, offset = 0x48, fixed_abs, tag = 'smem constant byte address 0x48 - assertion arg 1']
  #allocation10 [shape = 's32[]', space=sflag, size = 0x4, offset = 0, fixed_abs, tag = 'sflag constant byte address 0x0 - dummy sync flag']
  #allocation11 [shape = 's32[]', space=sflag, size = 0x4, offset = 0, fixed_abs, tag = 'sflag constant byte address 0x0 - dummy sync flag']
  #allocation12 [shape = 's32[]', space=sflag, size = 0x4, offset = 0, fixed_abs, tag = 'sflag constant byte address 0x0 - dummy sync flag']
  #allocation13 [shape = 's32[]', space=sflag, size = 0x4, offset = 0, fixed_abs, tag = 'sflag constant byte address 0x0 - dummy sync flag']
  #allocation14 [shape = 's32[]', space=sflag, size = 0x4, offset = 0, fixed_abs, tag = 'sflag constant byte address 0x0 - dummy sync flag']
  #allocation15 [shape = 's32[]', space=sflag, size = 0x4, offset = 0, fixed_abs, tag = 'sflag constant byte address 0x0 - dummy sync flag']
  #allocation16 [shape = 's32[]', space=sflag, size = 0x4, offset = 0, fixed_abs, tag = 'sflag constant byte address 0x0 - dummy sync flag']
  #allocation17 [shape = 's32[]', space=sflag, size = 0x4, offset = 0, fixed_abs, tag = 'sflag constant byte address 0x0 - dummy sync flag']
  #allocation18 [shape = 's32[]', space=sflag, size = 0x4, offset = 0, fixed_abs, tag = 'sflag constant byte address 0x0 - dummy sync flag']
  #allocation19 [shape = 's32[]', space=sflag, size = 0x4, offset = 0, fixed_abs, tag = 'sflag constant byte address 0x0 - dummy sync flag']
  #allocation20 [shape = 's32[]', space=sflag, size = 0x4, offset = 0, fixed_abs, tag = 'sflag constant byte address 0x0 - dummy sync flag']
  #allocation21 [shape = 's32[]', space=sflag, size = 0x4, offset = 0, fixed_abs, tag = 'sflag constant byte address 0x0 - dummy sync flag']
  #allocation22 [shape = 's32[]', space=sflag, size = 0x4, offset = 0, fixed_abs, tag = 'sflag constant byte address 0x0 - dummy sync flag']
  #allocation23 [shape = 's32[]', space=sflag, size = 0x4, offset = 0, fixed_abs, tag = 'sflag constant byte address 0x0 - dummy sync flag']
  #allocation24 [shape = 's32[]', space=sflag, size = 0x4, offset = 0, fixed_abs, tag = 'sflag constant byte address 0x0 - dummy sync flag']
  #allocation25 [shape = 's32[]', space=sflag, size = 0x4, offset = 0, fixed_abs, tag = 'sflag constant byte address 0x0 - dummy sync flag']
  #allocation26 [shape = 's32[]', space=sflag, size = 0x4, offset = 0, fixed_abs, tag = 'sflag constant byte address 0x0 - dummy sync flag']
  #allocation27 [shape = 's32[]', space=sflag, size = 0x4, offset = 0, fixed_abs, tag = 'sflag constant byte address 0x0 - dummy sync flag']
  #allocation28 [shape = 's32[]', space=sflag, size = 0x4, offset = 0, fixed_abs, tag = 'sflag constant byte address 0x0 - dummy sync flag']
  #allocation29 [shape = 's32[]', space=sflag, size = 0x4, offset = 0, fixed_abs, tag = 'sflag constant byte address 0x0 - dummy sync flag']
  #allocation30 [shape = 's32[]', space=sflag, size = 0x4, offset = 0, fixed_abs, tag = 'sflag constant byte address 0x0 - dummy sync flag']
  #allocation31 [shape = 's32[]', space=sflag, size = 0x4, offset = 0, fixed_abs, tag = 'sflag constant byte address 0x0 - dummy sync flag']
  #allocation32 [shape = 's32[]', space=sflag, size = 0x4, offset = 0, fixed_abs, tag = 'sflag constant byte address 0x0 - dummy sync flag']
  #allocation33 [shape = 's32[]', space=sflag, size = 0x4, offset = 0, fixed_abs, tag = 'sflag constant byte address 0x0 - dummy sync flag']
  #allocation34 [shape = 's32[]', space=sflag, size = 0x4, offset = 0, fixed_abs, tag = 'sflag constant byte address 0x0 - dummy sync flag']
  #allocation35 [shape = 's32[]', space=sflag, size = 0x4, offset = 0, fixed_abs, tag = 'sflag constant byte address 0x0 - dummy sync flag']
  #allocation36 [shape = 's32[]', space=sflag, size = 0x4, offset = 0, fixed_abs, tag = 'sflag constant byte address 0x0 - dummy sync flag']
  #allocation37 [shape = 's32[]', space=sflag, size = 0x4, offset = 0, fixed_abs, tag = 'sflag constant byte address 0x0 - dummy sync flag']
  #allocation38 [shape = 's32[]', space=sflag, size = 0x4, offset = 0, fixed_abs, tag = 'sflag constant byte address 0x0 - dummy sync flag']
  #allocation39 [shape = 's32[]', space=sflag, size = 0x4, offset = 0, fixed_abs, tag = 'sflag constant byte address 0x0 - dummy sync flag']
  #allocation40 [shape = 's32[]', space=sflag, size = 0x4, offset = 0, fixed_abs, tag = 'sflag constant byte address 0x0 - dummy sync flag']
  #allocation41 [shape = 's32[]', space=sflag, size = 0x4, offset = 0, fixed_abs, tag = 'sflag constant byte address 0x0 - dummy sync flag']
  #allocation42 [shape = 's32[]', space=sflag, size = 0x4, offset = 0, fixed_abs, tag = 'sflag constant byte address 0x0 - dummy sync flag']
  #allocation43 [shape = 's32[]', space=sflag, size = 0x4, offset = 0, fixed_abs, tag = 'sflag constant byte address 0x0 - dummy sync flag']
  #allocation44 [shape = 's32[]', space=sflag, size = 0x4, offset = 0, fixed_abs, tag = 'sflag constant byte address 0x0 - dummy sync flag']
  #allocation45 [shape = 's32[]', space=sflag, size = 0x4, offset = 0, fixed_abs, tag = 'sflag constant byte address 0x0 - dummy sync flag']
  #allocation46 [shape = 's32[]', space=sflag, size = 0x4, offset = 0, fixed_abs, tag = 'sflag constant byte address 0x0 - dummy sync flag']
  #allocation47 [shape = 's32[]', space=sflag, size = 0x4, offset = 0, fixed_abs, tag = 'sflag constant byte address 0x0 - dummy sync flag']
  #allocation48 [shape = 's32[]', space=sflag, size = 0x4, offset = 0, fixed_abs, tag = 'sflag constant byte address 0x0 - dummy sync flag']
  #allocation49 [shape = 's32[]', space=sflag, size = 0x4, offset = 0, fixed_abs, tag = 'sflag constant byte address 0x0 - dummy sync flag']
  #allocation50 [shape = 's32[]', space=sflag, size = 0x4, offset = 0, fixed_abs, tag = 'sflag constant byte address 0x0 - dummy sync flag']
  #allocation51 [shape = 's32[]', space=sflag, size = 0x4, offset = 0, fixed_abs, tag = 'sflag constant byte address 0x0 - dummy sync flag']
  #allocation52 [shape = 's32[]', space=sflag, size = 0x4, offset = 0, fixed_abs, tag = 'sflag constant byte address 0x0 - dummy sync flag']
  #allocation53 [shape = 's32[]', space=sflag, size = 0x4, offset = 0, fixed_abs, tag = 'sflag constant byte address 0x0 - dummy sync flag']
  #allocation54 [shape = 's32[]', space=sflag, size = 0x4, offset = 0, fixed_abs, tag = 'sflag constant byte address 0x0 - dummy sync flag']
  #allocation55 [shape = 's32[]', space=sflag, size = 0x4, offset = 0, fixed_abs, tag = 'sflag constant byte address 0x0 - dummy sync flag']
  #allocation56 [shape = 's32[]', space=sflag, size = 0x4, offset = 0, fixed_abs, tag = 'sflag constant byte address 0x0 - dummy sync flag']
  #allocation57 [shape = 's32[]', space=sflag, size = 0x4, offset = 0, fixed_abs, tag = 'sflag constant byte address 0x0 - dummy sync flag']
  #allocation58 [shape = 's32[]', space=sflag, size = 0x4, offset = 0, fixed_abs, tag = 'sflag constant byte address 0x0 - dummy sync flag']
  #allocation59 [shape = 's32[]', space=sflag, size = 0x4, offset = 0, fixed_abs, tag = 'sflag constant byte address 0x0 - dummy sync flag']
  #allocation60 [shape = 's32[]', space=sflag, size = 0x4, offset = 0, fixed_abs, tag = 'sflag constant byte address 0x0 - dummy sync flag']
  #allocation61 [shape = 's32[]', space=sflag, size = 0x4, offset = 0, fixed_abs, tag = 'sflag constant byte address 0x0 - dummy sync flag']
  #allocation62 [shape = 's32[]', space=sflag, size = 0x4, offset = 0, fixed_abs, tag = 'sflag constant byte address 0x0 - dummy sync flag']
  #allocation63 [shape = 's32[]', space=sflag, size = 0x4, offset = 0, fixed_abs, tag = 'sflag constant byte address 0x0 - dummy sync flag']
  #allocation64 [shape = 's32[]', space=sflag, size = 0x4, offset = 0, fixed_abs, tag = 'sflag constant byte address 0x0 - dummy sync flag']
  #allocation65 [shape = 's32[]', space=sflag, size = 0x4, offset = 0, fixed_abs, tag = 'sflag constant byte address 0x0 - dummy sync flag']
  #allocation66 [shape = 's32[]', space=sflag, size = 0x4, offset = 0, fixed_abs, tag = 'sflag constant byte address 0x0 - dummy sync flag']
  #allocation67 [shape = 's32[]', space=sflag, size = 0x4, offset = 0, fixed_abs, tag = 'sflag constant byte address 0x0 - dummy sync flag']
  #allocation68 [shape = 's32[]', space=sflag, size = 0x4, offset = 0, fixed_abs, tag = 'sflag constant byte address 0x0 - dummy sync flag']
  #allocation69 [shape = 's32[]', space=sflag, size = 0x4, offset = 0, fixed_abs, tag = 'sflag constant byte address 0x0 - dummy sync flag']
  #allocation70 [shape = 's32[]', space=sflag, size = 0x4, offset = 0, fixed_abs, tag = 'sflag constant byte address 0x0 - dummy sync flag']
  #allocation71 [shape = 's32[]', space=sflag, size = 0x4, offset = 0, fixed_abs, tag = 'sflag constant byte address 0x0 - dummy sync flag']
  %s0 = inlined_call_operand.vmem [shape: s32[8,4], index: 0, kind: input, shape index: {}]
  %s1 = inlined_call_operand.vmem [shape: s32[8,1], index: 1, kind: input, shape index: {}]
  %s2 = inlined_call_operand.hbm [shape: f32[5,16,128], index: 2, kind: input, shape index: {}]
  %s3 = inlined_call_operand.vmem [shape: f32[8,4], index: 3, kind: output, shape index: {}]
  %s4 = sld [smem:[#allocation0]]
  $region142: #{tpu_custom_call.1} parent=0
    _
  %s6 = ssub.s32 1, %s4
  %s7 = scalar_select 0, %s6, %s4
  %s8 = sshll.u32 %s0, 4
  %s9 = int_to_ptr.vmem [resolvable:$true] %s8
  %11 = dma.vmem_to_smem %s9, 128, [#allocation5], [#allocation4]
  %12 = dma.done [#allocation4], 128
  %13 = sfence
  // Predicated region
  $region2: #{tpu_custom_call.1} parent=0 // pred_check
    _
  $region3: #{tpu_custom_call.1} parent=0 // pred_check_branch
    %15 = sbr.rel (0) target = $region5
  $region4: #{tpu_custom_call.1} parent=0 // pred_region
    _
  $region5: #{tpu_custom_call.1} parent=0 // pred_fallthru
    _
  %s16 = smul.u32 0, 8
  %p17 = scmp.lt.s32.totalorder %s16, 4
  %s18 = scalar_select %p17, %s16, 4
  %s19 = smul.u32 %s16, 128
  %s20 = sld [smem:[#allocation5 + %s19]]
  %s21 = smul.u32 %s18, 16
  %s22 = sadd.s32 %s20, %s21
  %s23 = smul.addr %s22, 16
  %s24 = scalar_lea.hbm %s2, %s23
  // Predicated region
  $region6: #{tpu_custom_call.1} parent=0 // pred_check
    _
  $region7: #{tpu_custom_call.1} parent=0 // pred_check_branch
    %26 = sbr.rel target = $region9
  $region8: #{tpu_custom_call.1} parent=0 // pred_region
    %27 = sst [smem:[#allocation8]] [#allocation7]
    %28 = sst [smem:[#allocation9]] [#allocation6]
  $region9: #{tpu_custom_call.1} parent=0 // pred_fallthru
    _
  %30 = shalt.err (0)
  %s32 = sshll.u32 [#allocation2], 4
  %s33 = int_to_ptr.vmem [resolvable:$true] %s32
  %35 = dma.hbm_to_vmem [thread:$0]  %s24, 16, %s33, [#allocation3]
  %s36 = sadd.s32 %s19, 1
  %s37 = sld [smem:[#allocation5 + %s36]]
  %s38 = sadd.s32 %s37, %s21
  %s39 = smul.addr %s38, 16
  %s40 = scalar_lea.hbm %s2, %s39
  %s41 = scalar_lea.vmem [#allocation2], 1
  %s42 = scalar_lea.sflag [#allocation3], 1
  // Predicated region
  $region10: #{tpu_custom_call.1} parent=0 // pred_check
    _
  $region11: #{tpu_custom_call.1} parent=0 // pred_check_branch
    %44 = sbr.rel target = $region13
  $region12: #{tpu_custom_call.1} parent=0 // pred_region
    %45 = sst [smem:[#allocation8]] [#allocation11]
    %46 = sst [smem:[#allocation9]] [#allocation10]
  $region13: #{tpu_custom_call.1} parent=0 // pred_fallthru
    _
  %48 = shalt.err (0)
  %s50 = sshll.u32 %s41, 4
  %s51 = int_to_ptr.vmem [resolvable:$true] %s50
  %53 = dma.hbm_to_vmem [thread:$0]  %s40, 16, %s51, %s42
  %s54 = sadd.s32 %s19, 2
  %s55 = sld [smem:[#allocation5 + %s54]]
  %s56 = sadd.s32 %s55, %s21
  %s57 = smul.addr %s56, 16
  %s58 = scalar_lea.hbm %s2, %s57
  %s59 = scalar_lea.vmem [#allocation2], 2
  %s60 = scalar_lea.sflag [#allocation3], 2
  // Predicated region
  $region14: #{tpu_custom_call.1} parent=0 // pred_check
    _
  $region15: #{tpu_custom_call.1} parent=0 // pred_check_branch
    %62 = sbr.rel target = $region17
  $region16: #{tpu_custom_call.1} parent=0 // pred_region
    %63 = sst [smem:[#allocation8]] [#allocation13]
    %64 = sst [smem:[#allocation9]] [#allocation12]
  $region17: #{tpu_custom_call.1} parent=0 // pred_fallthru
    _
  %66 = shalt.err (0)
  %s68 = sshll.u32 %s59, 4
  %s69 = int_to_ptr.vmem [resolvable:$true] %s68
  %71 = dma.hbm_to_vmem [thread:$0]  %s58, 16, %s69, %s60
  %s72 = sadd.s32 %s19, 3
  %s73 = sld [smem:[#allocation5 + %s72]]
  %s74 = sadd.s32 %s73, %s21
  %s75 = smul.addr %s74, 16
  %s76 = scalar_lea.hbm %s2, %s75
  %s77 = scalar_lea.vmem [#allocation2], 3
  %s78 = scalar_lea.sflag [#allocation3], 3
  // Predicated region
  $region18: #{tpu_custom_call.1} parent=0 // pred_check
    _
  $region19: #{tpu_custom_call.1} parent=0 // pred_check_branch
    %80 = sbr.rel target = $region21
  $region20: #{tpu_custom_call.1} parent=0 // pred_region
    %81 = sst [smem:[#allocation8]] [#allocation15]
    %82 = sst [smem:[#allocation9]] [#allocation14]
  $region21: #{tpu_custom_call.1} parent=0 // pred_fallthru
    _
  %84 = shalt.err (0)
  %s86 = sshll.u32 %s77, 4
  %s87 = int_to_ptr.vmem [resolvable:$true] %s86
  %89 = dma.hbm_to_vmem [thread:$0]  %s76, 16, %s87, %s78
  %s90 = sadd.s32 %s16, 1
  %p91 = scmp.lt.s32.totalorder %s90, 4
  %s92 = scalar_select %p91, %s90, 4
  %s93 = smul.u32 %s90, 128
  %s94 = sld [smem:[#allocation5 + %s93]]
  %s95 = smul.u32 %s92, 16
  %s96 = sadd.s32 %s94, %s95
  %s97 = smul.addr %s96, 16
  %s98 = scalar_lea.hbm %s2, %s97
  %s99 = scalar_lea.vmem [#allocation2], 4
  %s100 = scalar_lea.sflag [#allocation3], 4
  // Predicated region
  $region22: #{tpu_custom_call.1} parent=0 // pred_check
    _
  $region23: #{tpu_custom_call.1} parent=0 // pred_check_branch
    %102 = sbr.rel target = $region25
  $region24: #{tpu_custom_call.1} parent=0 // pred_region
    %103 = sst [smem:[#allocation8]] [#allocation17]
    %104 = sst [smem:[#allocation9]] [#allocation16]
  $region25: #{tpu_custom_call.1} parent=0 // pred_fallthru
    _
  %106 = shalt.err (0)
  %s108 = sshll.u32 %s99, 4
  %s109 = int_to_ptr.vmem [resolvable:$true] %s108
  %111 = dma.hbm_to_vmem [thread:$0]  %s98, 16, %s109, %s100
  %s112 = sadd.s32 %s93, 1
  %s113 = sld [smem:[#allocation5 + %s112]]
  %s114 = sadd.s32 %s113, %s95
  %s115 = smul.addr %s114, 16
  %s116 = scalar_lea.hbm %s2, %s115
  %s117 = scalar_lea.vmem [#allocation2], 5
  %s118 = scalar_lea.sflag [#allocation3], 5
  // Predicated region
  $region26: #{tpu_custom_call.1} parent=0 // pred_check
    _
  $region27: #{tpu_custom_call.1} parent=0 // pred_check_branch
    %120 = sbr.rel target = $region29
  $region28: #{tpu_custom_call.1} parent=0 // pred_region
    %121 = sst [smem:[#allocation8]] [#allocation19]
    %122 = sst [smem:[#allocation9]] [#allocation18]
  $region29: #{tpu_custom_call.1} parent=0 // pred_fallthru
    _
  %124 = shalt.err (0)
  %s126 = sshll.u32 %s117, 4
  %s127 = int_to_ptr.vmem [resolvable:$true] %s126
  %129 = dma.hbm_to_vmem [thread:$0]  %s116, 16, %s127, %s118
  %s130 = sadd.s32 %s93, 2
  %s131 = sld [smem:[#allocation5 + %s130]]
  %s132 = sadd.s32 %s131, %s95
  %s133 = smul.addr %s132, 16
  %s134 = scalar_lea.hbm %s2, %s133
  %s135 = scalar_lea.vmem [#allocation2], 6
  %s136 = scalar_lea.sflag [#allocation3], 6
  // Predicated region
  $region30: #{tpu_custom_call.1} parent=0 // pred_check
    _
  $region31: #{tpu_custom_call.1} parent=0 // pred_check_branch
    %138 = sbr.rel target = $region33
  $region32: #{tpu_custom_call.1} parent=0 // pred_region
    %139 = sst [smem:[#allocation8]] [#allocation21]
    %140 = sst [smem:[#allocation9]] [#allocation20]
  $region33: #{tpu_custom_call.1} parent=0 // pred_fallthru
    _
  %142 = shalt.err (0)
  %s144 = sshll.u32 %s135, 4
  %s145 = int_to_ptr.vmem [resolvable:$true] %s144
  %147 = dma.hbm_to_vmem [thread:$0]  %s134, 16, %s145, %s136
  %s148 = sadd.s32 %s93, 3
  %s149 = sld [smem:[#allocation5 + %s148]]
  %s150 = sadd.s32 %s149, %s95
  %s151 = smul.addr %s150, 16
  %s152 = scalar_lea.hbm %s2, %s151
  %s153 = scalar_lea.vmem [#allocation2], 7
  %s154 = scalar_lea.sflag [#allocation3], 7
  // Predicated region
  $region34: #{tpu_custom_call.1} parent=0 // pred_check
    _
  $region35: #{tpu_custom_call.1} parent=0 // pred_check_branch
    %156 = sbr.rel target = $region37
  $region36: #{tpu_custom_call.1} parent=0 // pred_region
    %157 = sst [smem:[#allocation8]] [#allocation23]
    %158 = sst [smem:[#allocation9]] [#allocation22]
  $region37: #{tpu_custom_call.1} parent=0 // pred_fallthru
    _
  %160 = shalt.err (0)
  %s162 = sshll.u32 %s153, 4
  %s163 = int_to_ptr.vmem [resolvable:$true] %s162
  %165 = dma.hbm_to_vmem [thread:$0]  %s152, 16, %s163, %s154
  %s166 = sadd.s32 %s16, 2
  %p167 = scmp.lt.s32.totalorder %s166, 4
  %s168 = scalar_select %p167, %s166, 4
  %s169 = smul.u32 %s166, 128
  %s170 = sld [smem:[#allocation5 + %s169]]
  %s171 = smul.u32 %s168, 16
  %s172 = sadd.s32 %s170, %s171
  %s173 = smul.addr %s172, 16
  %s174 = scalar_lea.hbm %s2, %s173
  %s175 = scalar_lea.vmem [#allocation2], 8
  %s176 = scalar_lea.sflag [#allocation3], 8
  // Predicated region
  $region38: #{tpu_custom_call.1} parent=0 // pred_check
    _
  $region39: #{tpu_custom_call.1} parent=0 // pred_check_branch
    %178 = sbr.rel target = $region41
  $region40: #{tpu_custom_call.1} parent=0 // pred_region
    %179 = sst [smem:[#allocation8]] [#allocation25]
    %180 = sst [smem:[#allocation9]] [#allocation24]
  $region41: #{tpu_custom_call.1} parent=0 // pred_fallthru
    _
  %182 = shalt.err (0)
  %s184 = sshll.u32 %s175, 4
  %s185 = int_to_ptr.vmem [resolvable:$true] %s184
  %187 = dma.hbm_to_vmem [thread:$0]  %s174, 16, %s185, %s176
  %s188 = sadd.s32 %s169, 1
  %s189 = sld [smem:[#allocation5 + %s188]]
  %s190 = sadd.s32 %s189, %s171
  %s191 = smul.addr %s190, 16
  %s192 = scalar_lea.hbm %s2, %s191
  %s193 = scalar_lea.vmem [#allocation2], 9
  %s194 = scalar_lea.sflag [#allocation3], 9
  // Predicated region
  $region42: #{tpu_custom_call.1} parent=0 // pred_check
    _
  $region43: #{tpu_custom_call.1} parent=0 // pred_check_branch
    %196 = sbr.rel target = $region45
  $region44: #{tpu_custom_call.1} parent=0 // pred_region
    %197 = sst [smem:[#allocation8]] [#allocation27]
    %198 = sst [smem:[#allocation9]] [#allocation26]
  $region45: #{tpu_custom_call.1} parent=0 // pred_fallthru
    _
  %200 = shalt.err (0)
  %s202 = sshll.u32 %s193, 4
  %s203 = int_to_ptr.vmem [resolvable:$true] %s202
  %205 = dma.hbm_to_vmem [thread:$0]  %s192, 16, %s203, %s194
  %s206 = sadd.s32 %s169, 2
  %s207 = sld [smem:[#allocation5 + %s206]]
  %s208 = sadd.s32 %s207, %s171
  %s209 = smul.addr %s208, 16
  %s210 = scalar_lea.hbm %s2, %s209
  %s211 = scalar_lea.vmem [#allocation2], 10
  %s212 = scalar_lea.sflag [#allocation3], 10
  // Predicated region
  $region46: #{tpu_custom_call.1} parent=0 // pred_check
    _
  $region47: #{tpu_custom_call.1} parent=0 // pred_check_branch
    %214 = sbr.rel target = $region49
  $region48: #{tpu_custom_call.1} parent=0 // pred_region
    %215 = sst [smem:[#allocation8]] [#allocation29]
    %216 = sst [smem:[#allocation9]] [#allocation28]
  $region49: #{tpu_custom_call.1} parent=0 // pred_fallthru
    _
  %218 = shalt.err (0)
  %s220 = sshll.u32 %s211, 4
  %s221 = int_to_ptr.vmem [resolvable:$true] %s220
  %223 = dma.hbm_to_vmem [thread:$0]  %s210, 16, %s221, %s212
  %s224 = sadd.s32 %s169, 3
  %s225 = sld [smem:[#allocation5 + %s224]]
  %s226 = sadd.s32 %s225, %s171
  %s227 = smul.addr %s226, 16
  %s228 = scalar_lea.hbm %s2, %s227
  %s229 = scalar_lea.vmem [#allocation2], 11
  %s230 = scalar_lea.sflag [#allocation3], 11
  // Predicated region
  $region50: #{tpu_custom_call.1} parent=0 // pred_check
    _
  $region51: #{tpu_custom_call.1} parent=0 // pred_check_branch
    %232 = sbr.rel target = $region53
  $region52: #{tpu_custom_call.1} parent=0 // pred_region
    %233 = sst [smem:[#allocation8]] [#allocation31]
    %234 = sst [smem:[#allocation9]] [#allocation30]
  $region53: #{tpu_custom_call.1} parent=0 // pred_fallthru
    _
  %236 = shalt.err (0)
  %s238 = sshll.u32 %s229, 4
  %s239 = int_to_ptr.vmem [resolvable:$true] %s238
  %241 = dma.hbm_to_vmem [thread:$0]  %s228, 16, %s239, %s230
  %s242 = sadd.s32 %s16, 3
  %p243 = scmp.lt.s32.totalorder %s242, 4
  %s244 = scalar_select %p243, %s242, 4
  %s245 = smul.u32 %s242, 128
  %s246 = sld [smem:[#allocation5 + %s245]]
  %s247 = smul.u32 %s244, 16
  %s248 = sadd.s32 %s246, %s247
  %s249 = smul.addr %s248, 16
  %s250 = scalar_lea.hbm %s2, %s249
  %s251 = scalar_lea.vmem [#allocation2], 12
  %s252 = scalar_lea.sflag [#allocation3], 12
  // Predicated region
  $region54: #{tpu_custom_call.1} parent=0 // pred_check
    _
  $region55: #{tpu_custom_call.1} parent=0 // pred_check_branch
    %254 = sbr.rel target = $region57
  $region56: #{tpu_custom_call.1} parent=0 // pred_region
    %255 = sst [smem:[#allocation8]] [#allocation33]
    %256 = sst [smem:[#allocation9]] [#allocation32]
  $region57: #{tpu_custom_call.1} parent=0 // pred_fallthru
    _
  %258 = shalt.err (0)
  %s260 = sshll.u32 %s251, 4
  %s261 = int_to_ptr.vmem [resolvable:$true] %s260
  %263 = dma.hbm_to_vmem [thread:$0]  %s250, 16, %s261, %s252
  %s264 = sadd.s32 %s245, 1
  %s265 = sld [smem:[#allocation5 + %s264]]
  %s266 = sadd.s32 %s265, %s247
  %s267 = smul.addr %s266, 16
  %s268 = scalar_lea.hbm %s2, %s267
  %s269 = scalar_lea.vmem [#allocation2], 13
  %s270 = scalar_lea.sflag [#allocation3], 13
  // Predicated region
  $region58: #{tpu_custom_call.1} parent=0 // pred_check
    _
  $region59: #{tpu_custom_call.1} parent=0 // pred_check_branch
    %272 = sbr.rel target = $region61
  $region60: #{tpu_custom_call.1} parent=0 // pred_region
    %273 = sst [smem:[#allocation8]] [#allocation35]
    %274 = sst [smem:[#allocation9]] [#allocation34]
  $region61: #{tpu_custom_call.1} parent=0 // pred_fallthru
    _
  %276 = shalt.err (0)
  %s278 = sshll.u32 %s269, 4
  %s279 = int_to_ptr.vmem [resolvable:$true] %s278
  %281 = dma.hbm_to_vmem [thread:$0]  %s268, 16, %s279, %s270
  %s282 = sadd.s32 %s245, 2
  %s283 = sld [smem:[#allocation5 + %s282]]
  %s284 = sadd.s32 %s283, %s247
  %s285 = smul.addr %s284, 16
  %s286 = scalar_lea.hbm %s2, %s285
  %s287 = scalar_lea.vmem [#allocation2], 14
  %s288 = scalar_lea.sflag [#allocation3], 14
  // Predicated region
  $region62: #{tpu_custom_call.1} parent=0 // pred_check
    _
  $region63: #{tpu_custom_call.1} parent=0 // pred_check_branch
    %290 = sbr.rel target = $region65
  $region64: #{tpu_custom_call.1} parent=0 // pred_region
    %291 = sst [smem:[#allocation8]] [#allocation37]
    %292 = sst [smem:[#allocation9]] [#allocation36]
  $region65: #{tpu_custom_call.1} parent=0 // pred_fallthru
    _
  %294 = shalt.err (0)
  %s296 = sshll.u32 %s287, 4
  %s297 = int_to_ptr.vmem [resolvable:$true] %s296
  %299 = dma.hbm_to_vmem [thread:$0]  %s286, 16, %s297, %s288
  %s300 = sadd.s32 %s245, 3
  %s301 = sld [smem:[#allocation5 + %s300]]
  %s302 = sadd.s32 %s301, %s247
  %s303 = smul.addr %s302, 16
  %s304 = scalar_lea.hbm %s2, %s303
  %s305 = scalar_lea.vmem [#allocation2], 15
  %s306 = scalar_lea.sflag [#allocation3], 15
  // Predicated region
  $region66: #{tpu_custom_call.1} parent=0 // pred_check
    _
  $region67: #{tpu_custom_call.1} parent=0 // pred_check_branch
    %308 = sbr.rel target = $region69
  $region68: #{tpu_custom_call.1} parent=0 // pred_region
    %309 = sst [smem:[#allocation8]] [#allocation39]
    %310 = sst [smem:[#allocation9]] [#allocation38]
  $region69: #{tpu_custom_call.1} parent=0 // pred_fallthru
    _
  %312 = shalt.err (0)
  %s314 = sshll.u32 %s305, 4
  %s315 = int_to_ptr.vmem [resolvable:$true] %s314
  %317 = dma.hbm_to_vmem [thread:$0]  %s304, 16, %s315, %s306
  %s318 = sadd.s32 %s16, 4
  %p319 = scmp.lt.s32.totalorder %s318, 4
  %s320 = scalar_select %p319, %s318, 4
  %s321 = smul.u32 %s318, 128
  %s322 = sld [smem:[#allocation5 + %s321]]
  %s323 = smul.u32 %s320, 16
  %s324 = sadd.s32 %s322, %s323
  %s325 = smul.addr %s324, 16
  %s326 = scalar_lea.hbm %s2, %s325
  %s327 = scalar_lea.vmem [#allocation2], 16
  %s328 = scalar_lea.sflag [#allocation3], 16
  // Predicated region
  $region70: #{tpu_custom_call.1} parent=0 // pred_check
    _
  $region71: #{tpu_custom_call.1} parent=0 // pred_check_branch
    %330 = sbr.rel target = $region73
  $region72: #{tpu_custom_call.1} parent=0 // pred_region
    %331 = sst [smem:[#allocation8]] [#allocation41]
    %332 = sst [smem:[#allocation9]] [#allocation40]
  $region73: #{tpu_custom_call.1} parent=0 // pred_fallthru
    _
  %334 = shalt.err (0)
  %s336 = sshll.u32 %s327, 4
  %s337 = int_to_ptr.vmem [resolvable:$true] %s336
  %339 = dma.hbm_to_vmem [thread:$0]  %s326, 16, %s337, %s328
  %s340 = sadd.s32 %s321, 1
  %s341 = sld [smem:[#allocation5 + %s340]]
  %s342 = sadd.s32 %s341, %s323
  %s343 = smul.addr %s342, 16
  %s344 = scalar_lea.hbm %s2, %s343
  %s345 = scalar_lea.vmem [#allocation2], 17
  %s346 = scalar_lea.sflag [#allocation3], 17
  // Predicated region
  $region74: #{tpu_custom_call.1} parent=0 // pred_check
    _
  $region75: #{tpu_custom_call.1} parent=0 // pred_check_branch
    %348 = sbr.rel target = $region77
  $region76: #{tpu_custom_call.1} parent=0 // pred_region
    %349 = sst [smem:[#allocation8]] [#allocation43]
    %350 = sst [smem:[#allocation9]] [#allocation42]
  $region77: #{tpu_custom_call.1} parent=0 // pred_fallthru
    _
  %352 = shalt.err (0)
  %s354 = sshll.u32 %s345, 4
  %s355 = int_to_ptr.vmem [resolvable:$true] %s354
  %357 = dma.hbm_to_vmem [thread:$0]  %s344, 16, %s355, %s346
  %s358 = sadd.s32 %s321, 2
  %s359 = sld [smem:[#allocation5 + %s358]]
  %s360 = sadd.s32 %s359, %s323
  %s361 = smul.addr %s360, 16
  %s362 = scalar_lea.hbm %s2, %s361
  %s363 = scalar_lea.vmem [#allocation2], 18
  %s364 = scalar_lea.sflag [#allocation3], 18
  // Predicated region
  $region78: #{tpu_custom_call.1} parent=0 // pred_check
    _
  $region79: #{tpu_custom_call.1} parent=0 // pred_check_branch
    %366 = sbr.rel target = $region81
  $region80: #{tpu_custom_call.1} parent=0 // pred_region
    %367 = sst [smem:[#allocation8]] [#allocation45]
    %368 = sst [smem:[#allocation9]] [#allocation44]
  $region81: #{tpu_custom_call.1} parent=0 // pred_fallthru
    _
  %370 = shalt.err (0)
  %s372 = sshll.u32 %s363, 4
  %s373 = int_to_ptr.vmem [resolvable:$true] %s372
  %375 = dma.hbm_to_vmem [thread:$0]  %s362, 16, %s373, %s364
  %s376 = sadd.s32 %s321, 3
  %s377 = sld [smem:[#allocation5 + %s376]]
  %s378 = sadd.s32 %s377, %s323
  %s379 = smul.addr %s378, 16
  %s380 = scalar_lea.hbm %s2, %s379
  %s381 = scalar_lea.vmem [#allocation2], 19
  %s382 = scalar_lea.sflag [#allocation3], 19
  // Predicated region
  $region82: #{tpu_custom_call.1} parent=0 // pred_check
    _
  $region83: #{tpu_custom_call.1} parent=0 // pred_check_branch
    %384 = sbr.rel target = $region85
  $region84: #{tpu_custom_call.1} parent=0 // pred_region
    %385 = sst [smem:[#allocation8]] [#allocation47]
    %386 = sst [smem:[#allocation9]] [#allocation46]
  $region85: #{tpu_custom_call.1} parent=0 // pred_fallthru
    _
  %388 = shalt.err (0)
  %s390 = sshll.u32 %s381, 4
  %s391 = int_to_ptr.vmem [resolvable:$true] %s390
  %393 = dma.hbm_to_vmem [thread:$0]  %s380, 16, %s391, %s382
  %s394 = sadd.s32 %s16, 5
  %p395 = scmp.lt.s32.totalorder %s394, 4
  %s396 = scalar_select %p395, %s394, 4
  %s397 = smul.u32 %s394, 128
  %s398 = sld [smem:[#allocation5 + %s397]]
  %s399 = smul.u32 %s396, 16
  %s400 = sadd.s32 %s398, %s399
  %s401 = smul.addr %s400, 16
  %s402 = scalar_lea.hbm %s2, %s401
  %s403 = scalar_lea.vmem [#allocation2], 20
  %s404 = scalar_lea.sflag [#allocation3], 20
  // Predicated region
  $region86: #{tpu_custom_call.1} parent=0 // pred_check
    _
  $region87: #{tpu_custom_call.1} parent=0 // pred_check_branch
    %406 = sbr.rel target = $region89
  $region88: #{tpu_custom_call.1} parent=0 // pred_region
    %407 = sst [smem:[#allocation8]] [#allocation49]
    %408 = sst [smem:[#allocation9]] [#allocation48]
  $region89: #{tpu_custom_call.1} parent=0 // pred_fallthru
    _
  %410 = shalt.err (0)
  %s412 = sshll.u32 %s403, 4
  %s413 = int_to_ptr.vmem [resolvable:$true] %s412
  %415 = dma.hbm_to_vmem [thread:$0]  %s402, 16, %s413, %s404
  %s416 = sadd.s32 %s397, 1
  %s417 = sld [smem:[#allocation5 + %s416]]
  %s418 = sadd.s32 %s417, %s399
  %s419 = smul.addr %s418, 16
  %s420 = scalar_lea.hbm %s2, %s419
  %s421 = scalar_lea.vmem [#allocation2], 21
  %s422 = scalar_lea.sflag [#allocation3], 21
  // Predicated region
  $region90: #{tpu_custom_call.1} parent=0 // pred_check
    _
  $region91: #{tpu_custom_call.1} parent=0 // pred_check_branch
    %424 = sbr.rel target = $region93
  $region92: #{tpu_custom_call.1} parent=0 // pred_region
    %425 = sst [smem:[#allocation8]] [#allocation51]
    %426 = sst [smem:[#allocation9]] [#allocation50]
  $region93: #{tpu_custom_call.1} parent=0 // pred_fallthru
    _
  %428 = shalt.err (0)
  %s430 = sshll.u32 %s421, 4
  %s431 = int_to_ptr.vmem [resolvable:$true] %s430
  %433 = dma.hbm_to_vmem [thread:$0]  %s420, 16, %s431, %s422
  %s434 = sadd.s32 %s397, 2
  %s435 = sld [smem:[#allocation5 + %s434]]
  %s436 = sadd.s32 %s435, %s399
  %s437 = smul.addr %s436, 16
  %s438 = scalar_lea.hbm %s2, %s437
  %s439 = scalar_lea.vmem [#allocation2], 22
  %s440 = scalar_lea.sflag [#allocation3], 22
  // Predicated region
  $region94: #{tpu_custom_call.1} parent=0 // pred_check
    _
  $region95: #{tpu_custom_call.1} parent=0 // pred_check_branch
    %442 = sbr.rel target = $region97
  $region96: #{tpu_custom_call.1} parent=0 // pred_region
    %443 = sst [smem:[#allocation8]] [#allocation53]
    %444 = sst [smem:[#allocation9]] [#allocation52]
  $region97: #{tpu_custom_call.1} parent=0 // pred_fallthru
    _
  %446 = shalt.err (0)
  %s448 = sshll.u32 %s439, 4
  %s449 = int_to_ptr.vmem [resolvable:$true] %s448
  %451 = dma.hbm_to_vmem [thread:$0]  %s438, 16, %s449, %s440
  %s452 = sadd.s32 %s397, 3
  %s453 = sld [smem:[#allocation5 + %s452]]
  %s454 = sadd.s32 %s453, %s399
  %s455 = smul.addr %s454, 16
  %s456 = scalar_lea.hbm %s2, %s455
  %s457 = scalar_lea.vmem [#allocation2], 23
  %s458 = scalar_lea.sflag [#allocation3], 23
  // Predicated region
  $region98: #{tpu_custom_call.1} parent=0 // pred_check
    _
  $region99: #{tpu_custom_call.1} parent=0 // pred_check_branch
    %460 = sbr.rel target = $region101
  $region100: #{tpu_custom_call.1} parent=0 // pred_region
    %461 = sst [smem:[#allocation8]] [#allocation55]
    %462 = sst [smem:[#allocation9]] [#allocation54]
  $region101: #{tpu_custom_call.1} parent=0 // pred_fallthru
    _
  %464 = shalt.err (0)
  %s466 = sshll.u32 %s457, 4
  %s467 = int_to_ptr.vmem [resolvable:$true] %s466
  %469 = dma.hbm_to_vmem [thread:$0]  %s456, 16, %s467, %s458
  %s470 = sadd.s32 %s16, 6
  %p471 = scmp.lt.s32.totalorder %s470, 4
  %s472 = scalar_select %p471, %s470, 4
  %s473 = smul.u32 %s470, 128
  %s474 = sld [smem:[#allocation5 + %s473]]
  %s475 = smul.u32 %s472, 16
  %s476 = sadd.s32 %s474, %s475
  %s477 = smul.addr %s476, 16
  %s478 = scalar_lea.hbm %s2, %s477
  %s479 = scalar_lea.vmem [#allocation2], 24
  %s480 = scalar_lea.sflag [#allocation3], 24
  // Predicated region
  $region102: #{tpu_custom_call.1} parent=0 // pred_check
    _
  $region103: #{tpu_custom_call.1} parent=0 // pred_check_branch
    %482 = sbr.rel target = $region105
  $region104: #{tpu_custom_call.1} parent=0 // pred_region
    %483 = sst [smem:[#allocation8]] [#allocation57]
    %484 = sst [smem:[#allocation9]] [#allocation56]
  $region105: #{tpu_custom_call.1} parent=0 // pred_fallthru
    _
  %486 = shalt.err (0)
  %s488 = sshll.u32 %s479, 4
  %s489 = int_to_ptr.vmem [resolvable:$true] %s488
  %491 = dma.hbm_to_vmem [thread:$0]  %s478, 16, %s489, %s480
  %s492 = sadd.s32 %s473, 1
  %s493 = sld [smem:[#allocation5 + %s492]]
  %s494 = sadd.s32 %s493, %s475
  %s495 = smul.addr %s494, 16
  %s496 = scalar_lea.hbm %s2, %s495
  %s497 = scalar_lea.vmem [#allocation2], 25
  %s498 = scalar_lea.sflag [#allocation3], 25
  // Predicated region
  $region106: #{tpu_custom_call.1} parent=0 // pred_check
    _
  $region107: #{tpu_custom_call.1} parent=0 // pred_check_branch
    %500 = sbr.rel target = $region109
  $region108: #{tpu_custom_call.1} parent=0 // pred_region
    %501 = sst [smem:[#allocation8]] [#allocation59]
    %502 = sst [smem:[#allocation9]] [#allocation58]
  $region109: #{tpu_custom_call.1} parent=0 // pred_fallthru
    _
  %504 = shalt.err (0)
  %s506 = sshll.u32 %s497, 4
  %s507 = int_to_ptr.vmem [resolvable:$true] %s506
  %509 = dma.hbm_to_vmem [thread:$0]  %s496, 16, %s507, %s498
  %s510 = sadd.s32 %s473, 2
  %s511 = sld [smem:[#allocation5 + %s510]]
  %s512 = sadd.s32 %s511, %s475
  %s513 = smul.addr %s512, 16
  %s514 = scalar_lea.hbm %s2, %s513
  %s515 = scalar_lea.vmem [#allocation2], 26
  %s516 = scalar_lea.sflag [#allocation3], 26
  // Predicated region
  $region110: #{tpu_custom_call.1} parent=0 // pred_check
    _
  $region111: #{tpu_custom_call.1} parent=0 // pred_check_branch
    %518 = sbr.rel target = $region113
  $region112: #{tpu_custom_call.1} parent=0 // pred_region
    %519 = sst [smem:[#allocation8]] [#allocation61]
    %520 = sst [smem:[#allocation9]] [#allocation60]
  $region113: #{tpu_custom_call.1} parent=0 // pred_fallthru
    _
  %522 = shalt.err (0)
  %s524 = sshll.u32 %s515, 4
  %s525 = int_to_ptr.vmem [resolvable:$true] %s524
  %527 = dma.hbm_to_vmem [thread:$0]  %s514, 16, %s525, %s516
  %s528 = sadd.s32 %s473, 3
  %s529 = sld [smem:[#allocation5 + %s528]]
  %s530 = sadd.s32 %s529, %s475
  %s531 = smul.addr %s530, 16
  %s532 = scalar_lea.hbm %s2, %s531
  %s533 = scalar_lea.vmem [#allocation2], 27
  %s534 = scalar_lea.sflag [#allocation3], 27
  // Predicated region
  $region114: #{tpu_custom_call.1} parent=0 // pred_check
    _
  $region115: #{tpu_custom_call.1} parent=0 // pred_check_branch
    %536 = sbr.rel target = $region117
  $region116: #{tpu_custom_call.1} parent=0 // pred_region
    %537 = sst [smem:[#allocation8]] [#allocation63]
    %538 = sst [smem:[#allocation9]] [#allocation62]
  $region117: #{tpu_custom_call.1} parent=0 // pred_fallthru
    _
  %540 = shalt.err (0)
  %s542 = sshll.u32 %s533, 4
  %s543 = int_to_ptr.vmem [resolvable:$true] %s542
  %545 = dma.hbm_to_vmem [thread:$0]  %s532, 16, %s543, %s534
  %s546 = sadd.s32 %s16, 7
  %p547 = scmp.lt.s32.totalorder %s546, 4
  %s548 = scalar_select %p547, %s546, 4
  %s549 = smul.u32 %s546, 128
  %s550 = sld [smem:[#allocation5 + %s549]]
  %s551 = smul.u32 %s548, 16
  %s552 = sadd.s32 %s550, %s551
  %s553 = smul.addr %s552, 16
  %s554 = scalar_lea.hbm %s2, %s553
  %s555 = scalar_lea.vmem [#allocation2], 28
  %s556 = scalar_lea.sflag [#allocation3], 28
  // Predicated region
  $region118: #{tpu_custom_call.1} parent=0 // pred_check
    _
  $region119: #{tpu_custom_call.1} parent=0 // pred_check_branch
    %558 = sbr.rel target = $region121
  $region120: #{tpu_custom_call.1} parent=0 // pred_region
    %559 = sst [smem:[#allocation8]] [#allocation65]
    %560 = sst [smem:[#allocation9]] [#allocation64]
  $region121: #{tpu_custom_call.1} parent=0 // pred_fallthru
    _
  %562 = shalt.err (0)
  %s564 = sshll.u32 %s555, 4
  %s565 = int_to_ptr.vmem [resolvable:$true] %s564
  %567 = dma.hbm_to_vmem [thread:$0]  %s554, 16, %s565, %s556
  %s568 = sadd.s32 %s549, 1
  %s569 = sld [smem:[#allocation5 + %s568]]
  %s570 = sadd.s32 %s569, %s551
  %s571 = smul.addr %s570, 16
  %s572 = scalar_lea.hbm %s2, %s571
  %s573 = scalar_lea.vmem [#allocation2], 29
  %s574 = scalar_lea.sflag [#allocation3], 29
  // Predicated region
  $region122: #{tpu_custom_call.1} parent=0 // pred_check
    _
  $region123: #{tpu_custom_call.1} parent=0 // pred_check_branch
    %576 = sbr.rel target = $region125
  $region124: #{tpu_custom_call.1} parent=0 // pred_region
    %577 = sst [smem:[#allocation8]] [#allocation67]
    %578 = sst [smem:[#allocation9]] [#allocation66]
  $region125: #{tpu_custom_call.1} parent=0 // pred_fallthru
    _
  %580 = shalt.err (0)
  %s582 = sshll.u32 %s573, 4
  %s583 = int_to_ptr.vmem [resolvable:$true] %s582
  %585 = dma.hbm_to_vmem [thread:$0]  %s572, 16, %s583, %s574
  %s586 = sadd.s32 %s549, 2
  %s587 = sld [smem:[#allocation5 + %s586]]
  %s588 = sadd.s32 %s587, %s551
  %s589 = smul.addr %s588, 16
  %s590 = scalar_lea.hbm %s2, %s589
  %s591 = scalar_lea.vmem [#allocation2], 30
  %s592 = scalar_lea.sflag [#allocation3], 30
  // Predicated region
  $region126: #{tpu_custom_call.1} parent=0 // pred_check
    _
  $region127: #{tpu_custom_call.1} parent=0 // pred_check_branch
    %594 = sbr.rel target = $region129
  $region128: #{tpu_custom_call.1} parent=0 // pred_region
    %595 = sst [smem:[#allocation8]] [#allocation69]
    %596 = sst [smem:[#allocation9]] [#allocation68]
  $region129: #{tpu_custom_call.1} parent=0 // pred_fallthru
    _
  %598 = shalt.err (0)
  %s600 = sshll.u32 %s591, 4
  %s601 = int_to_ptr.vmem [resolvable:$true] %s600
  %603 = dma.hbm_to_vmem [thread:$0]  %s590, 16, %s601, %s592
  %s604 = sadd.s32 %s549, 3
  %s605 = sld [smem:[#allocation5 + %s604]]
  %s606 = sadd.s32 %s605, %s551
  %s607 = smul.addr %s606, 16
  %s608 = scalar_lea.hbm %s2, %s607
  %s609 = scalar_lea.vmem [#allocation2], 31
  %s610 = scalar_lea.sflag [#allocation3], 31
  // Predicated region
  $region130: #{tpu_custom_call.1} parent=0 // pred_check
    _
  $region131: #{tpu_custom_call.1} parent=0 // pred_check_branch
    %612 = sbr.rel target = $region133
  $region132: #{tpu_custom_call.1} parent=0 // pred_region
    %613 = sst [smem:[#allocation8]] [#allocation71]
    %614 = sst [smem:[#allocation9]] [#allocation70]
  $region133: #{tpu_custom_call.1} parent=0 // pred_fallthru
    _
  %616 = shalt.err (0)
  %s618 = sshll.u32 %s609, 4
  %s619 = int_to_ptr.vmem [resolvable:$true] %s618
  %621 = dma.hbm_to_vmem [thread:$0]  %s608, 16, %s619, %s610
  %s622 = smul.u32 1, 1
  %s623 = sshll.u32 %s622, 4
  %624 = dma.done [#allocation3], %s623
  %s625 = sshll.u32 %s622, 4
  %626 = dma.done %s42, %s625
  %s627 = sshll.u32 %s622, 4
  %628 = dma.done %s60, %s627
  %s629 = sshll.u32 %s622, 4
  %630 = dma.done %s78, %s629
  %s631 = sshll.u32 %s622, 4
  %632 = dma.done %s100, %s631
  %s633 = sshll.u32 %s622, 4
  %634 = dma.done %s118, %s633
  %s635 = sshll.u32 %s622, 4
  %636 = dma.done %s136, %s635
  %s637 = sshll.u32 %s622, 4
  %638 = dma.done %s154, %s637
  %s639 = sshll.u32 %s622, 4
  %640 = dma.done %s176, %s639
  %s641 = sshll.u32 %s622, 4
  %642 = dma.done %s194, %s641
  %s643 = sshll.u32 %s622, 4
  %644 = dma.done %s212, %s643
  %s645 = sshll.u32 %s622, 4
  %646 = dma.done %s230, %s645
  %s647 = sshll.u32 %s622, 4
  %648 = dma.done %s252, %s647
  %s649 = sshll.u32 %s622, 4
  %650 = dma.done %s270, %s649
  %s651 = sshll.u32 %s622, 4
  %652 = dma.done %s288, %s651
  %s653 = sshll.u32 %s622, 4
  %654 = dma.done %s306, %s653
  %s655 = sshll.u32 %s622, 4
  %656 = dma.done %s328, %s655
  %s657 = sshll.u32 %s622, 4
  %658 = dma.done %s346, %s657
  %s659 = sshll.u32 %s622, 4
  %660 = dma.done %s364, %s659
  %s661 = sshll.u32 %s622, 4
  %662 = dma.done %s382, %s661
  %s663 = sshll.u32 %s622, 4
  %664 = dma.done %s404, %s663
  %s665 = sshll.u32 %s622, 4
  %666 = dma.done %s422, %s665
  %s667 = sshll.u32 %s622, 4
  %668 = dma.done %s440, %s667
  %s669 = sshll.u32 %s622, 4
  %670 = dma.done %s458, %s669
  %s671 = sshll.u32 %s622, 4
  %672 = dma.done %s480, %s671
  %s673 = sshll.u32 %s622, 4
  %674 = dma.done %s498, %s673
  %s675 = sshll.u32 %s622, 4
  %676 = dma.done %s516, %s675
  %s677 = sshll.u32 %s622, 4
  %678 = dma.done %s534, %s677
  %s679 = sshll.u32 %s622, 4
  %680 = dma.done %s556, %s679
  %s681 = sshll.u32 %s622, 4
  %682 = dma.done %s574, %s681
  %s683 = sshll.u32 %s622, 4
  %684 = dma.done %s592, %s683
  %s685 = sshll.u32 %s622, 4
  %686 = dma.done %s610, %s685
  %v687 = vld [vmem:[#allocation2] sm:$0xf]
  %v688 = vld [vmem:[#allocation2 + $0x4] sm:$0xf]
  %v689 = vld [vmem:[#allocation2 + $0x8] sm:$0xf]
  %v690 = vld [vmem:[#allocation2 + $0xc] sm:$0xf]
  %v691 = vld [vmem:[#allocation2 + $0x10] sm:$0xf]
  %v692 = vld [vmem:[#allocation2 + $0x14] sm:$0xf]
  %v693 = vld [vmem:[#allocation2 + $0x18] sm:$0xf]
  %v694 = vld [vmem:[#allocation2 + $0x1c] sm:$0xf]
  %v695 = vlaneseq
  %v696 = vshrl.u32 %v695, 7
  %v697 = vsub.s32 0, %v696
  %v698 = vrot.slane %v687, %v697
  %v699 = vlaneseq
  %v700 = vshrl.u32 %v699, 7
  %v701 = vsub.s32 0, %v700
  %v702 = vrot.slane %v688, %v701
  %v703 = vlaneseq
  %v704 = vshrl.u32 %v703, 7
  %v705 = vsub.s32 0, %v704
  %v706 = vrot.slane %v689, %v705
  %v707 = vlaneseq
  %v708 = vshrl.u32 %v707, 7
  %v709 = vsub.s32 0, %v708
  %v710 = vrot.slane %v690, %v709
  %v711 = vlaneseq
  %v712 = vshrl.u32 %v711, 7
  %v713 = vsub.s32 0, %v712
  %v714 = vrot.slane %v691, %v713
  %v715 = vlaneseq
  %v716 = vshrl.u32 %v715, 7
  %v717 = vsub.s32 0, %v716
  %v718 = vrot.slane %v692, %v717
  %v719 = vlaneseq
  %v720 = vshrl.u32 %v719, 7
  %v721 = vsub.s32 0, %v720
  %v722 = vrot.slane %v693, %v721
  %v723 = vlaneseq
  %v724 = vshrl.u32 %v723, 7
  %v725 = vsub.s32 0, %v724
  %v726 = vrot.slane %v694, %v725
  %v727 = vmul.f32 %v687, %v698
  %v728 = vmul.f32 %v688, %v702
  %v729 = vmul.f32 %v689, %v706
  %v730 = vmul.f32 %v690, %v710
  %v731 = vmul.f32 %v691, %v714
  %v732 = vmul.f32 %v692, %v718
  %v733 = vmul.f32 %v693, %v722
  %v734 = vmul.f32 %v694, %v726
  %vm735 = vcmask 1043457
  %v736 = vsel %vm735, %v727, 0.0
  %737 = vadd.xlane.f32.xlu0 %v736
  %v738 = vpop.xlane.xlu0 %737
  %v739 = vsel %vm735, %v728, 0.0
  %740 = vadd.xlane.f32.xlu0 %v739
  %v741 = vpop.xlane.xlu0 %740
  %v742 = vsel %vm735, %v729, 0.0
  %743 = vadd.xlane.f32.xlu0 %v742
  %v744 = vpop.xlane.xlu0 %743
  %v745 = vsel %vm735, %v730, 0.0
  %746 = vadd.xlane.f32.xlu0 %v745
  %v747 = vpop.xlane.xlu0 %746
  %v748 = vsel %vm735, %v731, 0.0
  %749 = vadd.xlane.f32.xlu0 %v748
  %v750 = vpop.xlane.xlu0 %749
  %v751 = vsel %vm735, %v732, 0.0
  %752 = vadd.xlane.f32.xlu0 %v751
  %v753 = vpop.xlane.xlu0 %752
  %v754 = vsel %vm735, %v733, 0.0
  %755 = vadd.xlane.f32.xlu0 %v754
  %v756 = vpop.xlane.xlu0 %755
  %v757 = vsel %vm735, %v734, 0.0
  %758 = vadd.xlane.f32.xlu0 %v757
  %v759 = vpop.xlane.xlu0 %758
  %v760 = vmul.f32 %v687, %v687
  %v761 = vmul.f32 %v688, %v688
  %v762 = vmul.f32 %v689, %v689
  %v763 = vmul.f32 %v690, %v690
  %v764 = vmul.f32 %v691, %v691
  %v765 = vmul.f32 %v692, %v692
  %v766 = vmul.f32 %v693, %v693
  %v767 = vmul.f32 %v694, %v694
  %v768 = vsel %vm735, %v760, 0.0
  %769 = vadd.xlane.f32.xlu0 %v768
  %v770 = vpop.xlane.xlu0 %769
  %v771 = vsel %vm735, %v761, 0.0
  %772 = vadd.xlane.f32.xlu0 %v771
  %v773 = vpop.xlane.xlu0 %772
  %v774 = vsel %vm735, %v762, 0.0
  %775 = vadd.xlane.f32.xlu0 %v774
  %v776 = vpop.xlane.xlu0 %775
  %v777 = vsel %vm735, %v763, 0.0
  %778 = vadd.xlane.f32.xlu0 %v777
  %v779 = vpop.xlane.xlu0 %778
  %v780 = vsel %vm735, %v764, 0.0
  %781 = vadd.xlane.f32.xlu0 %v780
  %v782 = vpop.xlane.xlu0 %781
  %v783 = vsel %vm735, %v765, 0.0
  %784 = vadd.xlane.f32.xlu0 %v783
  %v785 = vpop.xlane.xlu0 %784
  %v786 = vsel %vm735, %v766, 0.0
  %787 = vadd.xlane.f32.xlu0 %v786
  %v788 = vpop.xlane.xlu0 %787
  %v789 = vsel %vm735, %v767, 0.0
  %790 = vadd.xlane.f32.xlu0 %v789
  %v791 = vpop.xlane.xlu0 %790
  %vm792 = vcmask 1040384
  %v793 = vsel %vm792, %v760, 0.0
  %794 = vadd.xlane.f32.xlu0 %v793
  %v795 = vpop.xlane.xlu0 %794
  %v796 = vsel %vm792, %v761, 0.0
  %797 = vadd.xlane.f32.xlu0 %v796
  %v798 = vpop.xlane.xlu0 %797
  %v799 = vsel %vm792, %v762, 0.0
  %800 = vadd.xlane.f32.xlu0 %v799
  %v801 = vpop.xlane.xlu0 %800
  %v802 = vsel %vm792, %v763, 0.0
  %803 = vadd.xlane.f32.xlu0 %v802
  %v804 = vpop.xlane.xlu0 %803
  %v805 = vsel %vm792, %v764, 0.0
  %806 = vadd.xlane.f32.xlu0 %v805
  %v807 = vpop.xlane.xlu0 %806
  %v808 = vsel %vm792, %v765, 0.0
  %809 = vadd.xlane.f32.xlu0 %v808
  %v810 = vpop.xlane.xlu0 %809
  %v811 = vsel %vm792, %v766, 0.0
  %812 = vadd.xlane.f32.xlu0 %v811
  %v813 = vpop.xlane.xlu0 %812
  %v814 = vsel %vm792, %v767, 0.0
  %815 = vadd.xlane.f32.xlu0 %v814
  %v816 = vpop.xlane.xlu0 %815
  %v817 = vmax.f32 %v770, 1e-12
  %v818 = vmax.f32 %v773, 1e-12
  %v819 = vmax.f32 %v776, 1e-12
  %v820 = vmax.f32 %v779, 1e-12
  %v821 = vmax.f32 %v782, 1e-12
  %v822 = vmax.f32 %v785, 1e-12
  %v823 = vmax.f32 %v788, 1e-12
  %v824 = vmax.f32 %v791, 1e-12
  %v825 = vmax.f32 %v795, 1e-12
  %v826 = vmax.f32 %v798, 1e-12
  %v827 = vmax.f32 %v801, 1e-12
  %v828 = vmax.f32 %v804, 1e-12
  %v829 = vmax.f32 %v807, 1e-12
  %v830 = vmax.f32 %v810, 1e-12
  %v831 = vmax.f32 %v813, 1e-12
  %v832 = vmax.f32 %v816, 1e-12
  %v833 = vlaneseq
  %v834 = vshrl.u32 %v833, 7
  %v835 = vsub.s32 0, %v834
  %v836 = vrot.slane %v825, %v835
  %v837 = vlaneseq
  %v838 = vshrl.u32 %v837, 7
  %v839 = vsub.s32 0, %v838
  %v840 = vrot.slane %v826, %v839
  %v841 = vlaneseq
  %v842 = vshrl.u32 %v841, 7
  %v843 = vsub.s32 0, %v842
  %v844 = vrot.slane %v827, %v843
  %v845 = vlaneseq
  %v846 = vshrl.u32 %v845, 7
  %v847 = vsub.s32 0, %v846
  %v848 = vrot.slane %v828, %v847
  %v849 = vlaneseq
  %v850 = vshrl.u32 %v849, 7
  %v851 = vsub.s32 0, %v850
  %v852 = vrot.slane %v829, %v851
  %v853 = vlaneseq
  %v854 = vshrl.u32 %v853, 7
  %v855 = vsub.s32 0, %v854
  %v856 = vrot.slane %v830, %v855
  %v857 = vlaneseq
  %v858 = vshrl.u32 %v857, 7
  %v859 = vsub.s32 0, %v858
  %v860 = vrot.slane %v831, %v859
  %v861 = vlaneseq
  %v862 = vshrl.u32 %v861, 7
  %v863 = vsub.s32 0, %v862
  %v864 = vrot.slane %v832, %v863
  %v865 = vmul.f32 %v817, %v836
  %v866 = vmul.f32 %v818, %v840
  %v867 = vmul.f32 %v819, %v844
  %v868 = vmul.f32 %v820, %v848
  %v869 = vmul.f32 %v821, %v852
  %v870 = vmul.f32 %v822, %v856
  %v871 = vmul.f32 %v823, %v860
  %v872 = vmul.f32 %v824, %v864
  %v873 = vrsqrt.pop %v865
  %v874 = vrsqrt.pop %v866
  %v875 = vrsqrt.pop %v867
  %v876 = vrsqrt.pop %v868
  %v877 = vrsqrt.pop %v869
  %v878 = vrsqrt.pop %v870
  %v879 = vrsqrt.pop %v871
  %v880 = vrsqrt.pop %v872
  %v881 = vmul.f32 %v738, %v873
  %v882 = vmul.f32 %v741, %v874
  %v883 = vmul.f32 %v744, %v875
  %v884 = vmul.f32 %v747, %v876
  %v885 = vmul.f32 %v750, %v877
  %v886 = vmul.f32 %v753, %v878
  %v887 = vmul.f32 %v756, %v879
  %v888 = vmul.f32 %v759, %v880
  %v889 = vld [vmem:[%s1] sm:$0xff]
  %v898 = vlaneseq
  %v899 = vand.u32 %v898, 127
  %v900 = vlaneseq
  %v901 = vshrl.u32 %v900, 7
  %v902 = vsub.s32 %v899, %v901
  %v903 = vrot.slane %v881, %v902
  %v904 = vlaneseq
  %v905 = vshrl.u32 %v904, 7
  %v906 = vsub.s32 %v899, %v905
  %v907 = vrot.slane %v882, %v906
  %v908 = vlaneseq
  %v909 = vshrl.u32 %v908, 7
  %v910 = vsub.s32 %v899, %v909
  %v911 = vrot.slane %v883, %v910
  %v912 = vlaneseq
  %v913 = vshrl.u32 %v912, 7
  %v914 = vsub.s32 %v899, %v913
  %v915 = vrot.slane %v884, %v914
  %v916 = vlaneseq
  %v917 = vshrl.u32 %v916, 7
  %v918 = vsub.s32 %v899, %v917
  %v919 = vrot.slane %v885, %v918
  %v920 = vlaneseq
  %v921 = vshrl.u32 %v920, 7
  %v922 = vsub.s32 %v899, %v921
  %v923 = vrot.slane %v886, %v922
  %v924 = vlaneseq
  %v925 = vshrl.u32 %v924, 7
  %v926 = vsub.s32 %v899, %v925
  %v927 = vrot.slane %v887, %v926
  %v928 = vlaneseq
  %v929 = vshrl.u32 %v928, 7
  %v930 = vsub.s32 %v899, %v929
  %v931 = vrot.slane %v888, %v930
  %vm932 = vcmask 1041409
  %v933 = vsel %vm932, %v907, %v903
  %vm934 = vcmask 1042434
  %v935 = vsel %vm934, %v911, %v933
  %vm936 = vcmask 1043459
  %v937 = vsel %vm936, %v915, %v935
  %vm938 = vcmask 1044484
  %v939 = vsel %vm938, %v919, %v937
  %vm940 = vcmask 1045509
  %v941 = vsel %vm940, %v923, %v939
  %vm942 = vcmask 1046534
  %v943 = vsel %vm942, %v927, %v941
  %vm944 = vcmask 1047559
  %v945 = vsel %vm944, %v931, %v943
  %vm947 = vcmask 31752
  %v948 = vsel %vm947, %v945, -inf
  %949 = vmax.xlane.f32.xlu0 %v948
  %v950 = vpop.xlane.xlu0 %949
  %v952 = vlaneseq
  %v953 = vshrl.u32 %v952, 7
  %v954 = vsub.s32 0, %v953
  %v955 = vrot.slane %v950, %v954
  %v956 = vlaneseq
  %v957 = vshrl.u32 %v956, 7
  %v958 = vsub.s32 1, %v957
  %v959 = vrot.slane %v950, %v958
  %v960 = vlaneseq
  %v961 = vshrl.u32 %v960, 7
  %v962 = vsub.s32 2, %v961
  %v963 = vrot.slane %v950, %v962
  %v964 = vlaneseq
  %v965 = vshrl.u32 %v964, 7
  %v966 = vsub.s32 3, %v965
  %v967 = vrot.slane %v950, %v966
  %v968 = vlaneseq
  %v969 = vshrl.u32 %v968, 7
  %v970 = vsub.s32 4, %v969
  %v971 = vrot.slane %v950, %v970
  %v972 = vlaneseq
  %v973 = vshrl.u32 %v972, 7
  %v974 = vsub.s32 5, %v973
  %v975 = vrot.slane %v950, %v974
  %v976 = vlaneseq
  %v977 = vshrl.u32 %v976, 7
  %v978 = vsub.s32 6, %v977
  %v979 = vrot.slane %v950, %v978
  %v980 = vlaneseq
  %v981 = vshrl.u32 %v980, 7
  %v982 = vsub.s32 7, %v981
  %v983 = vrot.slane %v950, %v982
  %v992 = vsub.f32 %v881, %v955
  %v993 = vsub.f32 %v882, %v959
  %v994 = vsub.f32 %v883, %v963
  %v995 = vsub.f32 %v884, %v967
  %v996 = vsub.f32 %v885, %v971
  %v997 = vsub.f32 %v886, %v975
  %v998 = vsub.f32 %v887, %v979
  %v999 = vsub.f32 %v888, %v983
  %v1000 = vmul.f32 %v992, 1.442695
  %v1001 = vpow.pop %v1000
  %v1002 = vmul.f32 %v993, 1.442695
  %v1003 = vpow.pop %v1002
  %v1004 = vmul.f32 %v994, 1.442695
  %v1005 = vpow.pop %v1004
  %v1006 = vmul.f32 %v995, 1.442695
  %v1007 = vpow.pop %v1006
  %v1008 = vmul.f32 %v996, 1.442695
  %v1009 = vpow.pop %v1008
  %v1010 = vmul.f32 %v997, 1.442695
  %v1011 = vpow.pop %v1010
  %v1012 = vmul.f32 %v998, 1.442695
  %v1013 = vpow.pop %v1012
  %v1014 = vmul.f32 %v999, 1.442695
  %v1015 = vpow.pop %v1014
  %1024 = vset.pattern.permute.xlu0 0
  %1025 = vperm.xlu0 %1024, %v1001
  %v1026 = vpop.permute.xlu0 %1025
  %1027 = vset.pattern.permute.xlu0 0
  %1028 = vperm.xlu0 %1027, %v1003
  %v1029 = vpop.permute.xlu0 %1028
  %1030 = vset.pattern.permute.xlu0 0
  %1031 = vperm.xlu0 %1030, %v1005
  %v1032 = vpop.permute.xlu0 %1031
  %1033 = vset.pattern.permute.xlu0 0
  %1034 = vperm.xlu0 %1033, %v1007
  %v1035 = vpop.permute.xlu0 %1034
  %1036 = vset.pattern.permute.xlu0 0
  %1037 = vperm.xlu0 %1036, %v1009
  %v1038 = vpop.permute.xlu0 %1037
  %1039 = vset.pattern.permute.xlu0 0
  %1040 = vperm.xlu0 %1039, %v1011
  %v1041 = vpop.permute.xlu0 %1040
  %1042 = vset.pattern.permute.xlu0 0
  %1043 = vperm.xlu0 %1042, %v1013
  %v1044 = vpop.permute.xlu0 %1043
  %1045 = vset.pattern.permute.xlu0 0
  %1046 = vperm.xlu0 %1045, %v1015
  %v1047 = vpop.permute.xlu0 %1046
  %v1048 = vadd.s32 %v899, 1
  %v1049 = vlaneseq
  %v1050 = vshrl.u32 %v1049, 7
  %v1051 = vsub.s32 %v1048, %v1050
  %v1052 = vrot.slane %v1026, %v1051
  %v1053 = vlaneseq
  %v1054 = vshrl.u32 %v1053, 7
  %v1055 = vsub.s32 %v1048, %v1054
  %v1056 = vrot.slane %v1029, %v1055
  %v1057 = vlaneseq
  %v1058 = vshrl.u32 %v1057, 7
  %v1059 = vsub.s32 %v1048, %v1058
  %v1060 = vrot.slane %v1032, %v1059
  %v1061 = vlaneseq
  %v1062 = vshrl.u32 %v1061, 7
  %v1063 = vsub.s32 %v1048, %v1062
  %v1064 = vrot.slane %v1035, %v1063
  %v1065 = vlaneseq
  %v1066 = vshrl.u32 %v1065, 7
  %v1067 = vsub.s32 %v1048, %v1066
  %v1068 = vrot.slane %v1038, %v1067
  %v1069 = vlaneseq
  %v1070 = vshrl.u32 %v1069, 7
  %v1071 = vsub.s32 %v1048, %v1070
  %v1072 = vrot.slane %v1041, %v1071
  %v1073 = vlaneseq
  %v1074 = vshrl.u32 %v1073, 7
  %v1075 = vsub.s32 %v1048, %v1074
  %v1076 = vrot.slane %v1044, %v1075
  %v1077 = vlaneseq
  %v1078 = vshrl.u32 %v1077, 7
  %v1079 = vsub.s32 %v1048, %v1078
  %v1080 = vrot.slane %v1047, %v1079
  %v1081 = vsel %vm932, %v1056, %v1052
  %v1082 = vsel %vm934, %v1060, %v1081
  %v1083 = vsel %vm936, %v1064, %v1082
  %v1084 = vsel %vm938, %v1068, %v1083
  %v1085 = vsel %vm940, %v1072, %v1084
  %v1086 = vsel %vm942, %v1076, %v1085
  %v1087 = vsel %vm944, %v1080, %v1086
  %vm1089 = vcmask 23552
  %v1090 = vsel %vm1089, %v1087, 0.0
  %1091 = vadd.xlane.f32.xlu0 %v1090
  %v1092 = vpop.xlane.xlu0 %1091
  %v1093 = vlog2.pop %v1092
  %v1094 = vmul.f32 %v1093, 0.6931472
  %v1095 = vadd.f32 %v950, %v1094
  %1096 = vset.pattern.permute.xlu0 0
  %1097 = vperm.xlu0 %1096, %v889
  %v1098 = vpop.permute.xlu0 %1097
  %vm1099 = vcmp.eq.s32.totalorder %v899, %v1098
  %v1100 = vlaneseq
  %v1101 = vshrl.u32 %v1100, 7
  %v1102 = vsub.s32 %v1048, %v1101
  %v1103 = vrot.slane %v881, %v1102
  %v1104 = vlaneseq
  %v1105 = vshrl.u32 %v1104, 7
  %v1106 = vsub.s32 %v1048, %v1105
  %v1107 = vrot.slane %v882, %v1106
  %v1108 = vlaneseq
  %v1109 = vshrl.u32 %v1108, 7
  %v1110 = vsub.s32 %v1048, %v1109
  %v1111 = vrot.slane %v883, %v1110
  %v1112 = vlaneseq
  %v1113 = vshrl.u32 %v1112, 7
  %v1114 = vsub.s32 %v1048, %v1113
  %v1115 = vrot.slane %v884, %v1114
  %v1116 = vlaneseq
  %v1117 = vshrl.u32 %v1116, 7
  %v1118 = vsub.s32 %v1048, %v1117
  %v1119 = vrot.slane %v885, %v1118
  %v1120 = vlaneseq
  %v1121 = vshrl.u32 %v1120, 7
  %v1122 = vsub.s32 %v1048, %v1121
  %v1123 = vrot.slane %v886, %v1122
  %v1124 = vlaneseq
  %v1125 = vshrl.u32 %v1124, 7
  %v1126 = vsub.s32 %v1048, %v1125
  %v1127 = vrot.slane %v887, %v1126
  %v1128 = vlaneseq
  %v1129 = vshrl.u32 %v1128, 7
  %v1130 = vsub.s32 %v1048, %v1129
  %v1131 = vrot.slane %v888, %v1130
  %v1132 = vsel %vm932, %v1107, %v1103
  %v1133 = vsel %vm934, %v1111, %v1132
  %v1134 = vsel %vm936, %v1115, %v1133
  %v1135 = vsel %vm938, %v1119, %v1134
  %v1136 = vsel %vm940, %v1123, %v1135
  %v1137 = vsel %vm942, %v1127, %v1136
  %v1138 = vsel %vm944, %v1131, %v1137
  %v1140 = vsel %vm1099, %v1138, 0.0
  %v1141 = vsel %vm1089, %v1140, 0.0
  %1142 = vadd.xlane.f32.xlu0 %v1141
  %v1143 = vpop.xlane.xlu0 %1142
  %v1144 = vsub.f32 %v1095, %v1143
  %v1145 = vsel %vm934, %v1107, %v1103
  %v1146 = vsel %vm936, %v1111, %v1145
  %v1147 = vsel %vm938, %v1115, %v1146
  %v1148 = vsel %vm940, %v1119, %v1147
  %v1149 = vsel %vm942, %v1123, %v1148
  %v1150 = vsel %vm944, %v1127, %v1149
  %vm1153 = vcmask 23553
  %1154 = vst.msk [vmem:[%s3 - $0x1] sm:$0xfe] %vm1153, %v1150
  %vm1155 = vcmask 16384
  %1156 = vst.msk [vmem:[%s3 + $0x7] sm:$0x1] %vm1155, %v1131
  %vm1157 = vcmask 31768
  %1158 = vst.msk [vmem:[%s3] sm:$0xff] %vm1157, %v1144
  // Predicated region
  $region134: #{tpu_custom_call.1} parent=0 // pred_check
    _
  $region135: #{tpu_custom_call.1} parent=0 // pred_check_branch
    %1160 = sbr.rel (0) target = $region137
  $region136: #{tpu_custom_call.1} parent=0 // pred_region
    _
  $region137: #{tpu_custom_call.1} parent=0 // pred_fallthru
    _
  // Predicated region
  $region138: #{tpu_custom_call.1} parent=0 // pred_check
    _
  $region139: #{tpu_custom_call.1} parent=0 // pred_check_branch
    %1162 = sbr.rel (0) target = $region141
  $region140: #{tpu_custom_call.1} parent=0 // pred_region
    _
  $region141: #{tpu_custom_call.1} parent=0 // pred_fallthru
    _
  %1163 = vsyncmov [#allocation3]
  %s1164 = vpop.sfrf %1163
  %p1165 = scmp.eq.s32.totalorder %s1164, 0
  %p1166 = pneg %p1165
  %1168 = shalt.err (%p1166)
  %s1169 = scalar_lea.sflag [#allocation3], 1
  %1170 = vsyncmov %s1169
  %s1171 = vpop.sfrf %1170
  %p1172 = scmp.eq.s32.totalorder %s1171, 0
  %p1173 = pneg %p1172
  %1175 = shalt.err (%p1173)
  %s1176 = scalar_lea.sflag [#allocation3], 2
  %1177 = vsyncmov %s1176
  %s1178 = vpop.sfrf %1177
  %p1179 = scmp.eq.s32.totalorder %s1178, 0
  %p1180 = pneg %p1179
  %1182 = shalt.err (%p1180)
  %s1183 = scalar_lea.sflag [#allocation3], 3
  %1184 = vsyncmov %s1183
  %s1185 = vpop.sfrf %1184
  %p1186 = scmp.eq.s32.totalorder %s1185, 0
  %p1187 = pneg %p1186
  %1189 = shalt.err (%p1187)
  %s1190 = scalar_lea.sflag [#allocation3], 4
  %1191 = vsyncmov %s1190
  %s1192 = vpop.sfrf %1191
  %p1193 = scmp.eq.s32.totalorder %s1192, 0
  %p1194 = pneg %p1193
  %1196 = shalt.err (%p1194)
  %s1197 = scalar_lea.sflag [#allocation3], 5
  %1198 = vsyncmov %s1197
  %s1199 = vpop.sfrf %1198
  %p1200 = scmp.eq.s32.totalorder %s1199, 0
  %p1201 = pneg %p1200
  %1203 = shalt.err (%p1201)
  %s1204 = scalar_lea.sflag [#allocation3], 6
  %1205 = vsyncmov %s1204
  %s1206 = vpop.sfrf %1205
  %p1207 = scmp.eq.s32.totalorder %s1206, 0
  %p1208 = pneg %p1207
  %1210 = shalt.err (%p1208)
  %s1211 = scalar_lea.sflag [#allocation3], 7
  %1212 = vsyncmov %s1211
  %s1213 = vpop.sfrf %1212
  %p1214 = scmp.eq.s32.totalorder %s1213, 0
  %p1215 = pneg %p1214
  %1217 = shalt.err (%p1215)
  %s1218 = scalar_lea.sflag [#allocation3], 8
  %1219 = vsyncmov %s1218
  %s1220 = vpop.sfrf %1219
  %p1221 = scmp.eq.s32.totalorder %s1220, 0
  %p1222 = pneg %p1221
  %1224 = shalt.err (%p1222)
  %s1225 = scalar_lea.sflag [#allocation3], 9
  %1226 = vsyncmov %s1225
  %s1227 = vpop.sfrf %1226
  %p1228 = scmp.eq.s32.totalorder %s1227, 0
  %p1229 = pneg %p1228
  %1231 = shalt.err (%p1229)
  %s1232 = scalar_lea.sflag [#allocation3], 10
  %1233 = vsyncmov %s1232
  %s1234 = vpop.sfrf %1233
  %p1235 = scmp.eq.s32.totalorder %s1234, 0
  %p1236 = pneg %p1235
  %1238 = shalt.err (%p1236)
  %s1239 = scalar_lea.sflag [#allocation3], 11
  %1240 = vsyncmov %s1239
  %s1241 = vpop.sfrf %1240
  %p1242 = scmp.eq.s32.totalorder %s1241, 0
  %p1243 = pneg %p1242
  %1245 = shalt.err (%p1243)
  %s1246 = scalar_lea.sflag [#allocation3], 12
  %1247 = vsyncmov %s1246
  %s1248 = vpop.sfrf %1247
  %p1249 = scmp.eq.s32.totalorder %s1248, 0
  %p1250 = pneg %p1249
  %1252 = shalt.err (%p1250)
  %s1253 = scalar_lea.sflag [#allocation3], 13
  %1254 = vsyncmov %s1253
  %s1255 = vpop.sfrf %1254
  %p1256 = scmp.eq.s32.totalorder %s1255, 0
  %p1257 = pneg %p1256
  %1259 = shalt.err (%p1257)
  %s1260 = scalar_lea.sflag [#allocation3], 14
  %1261 = vsyncmov %s1260
  %s1262 = vpop.sfrf %1261
  %p1263 = scmp.eq.s32.totalorder %s1262, 0
  %p1264 = pneg %p1263
  %1266 = shalt.err (%p1264)
  %s1267 = scalar_lea.sflag [#allocation3], 15
  %1268 = vsyncmov %s1267
  %s1269 = vpop.sfrf %1268
  %p1270 = scmp.eq.s32.totalorder %s1269, 0
  %p1271 = pneg %p1270
  %1273 = shalt.err (%p1271)
  %s1274 = scalar_lea.sflag [#allocation3], 16
  %1275 = vsyncmov %s1274
  %s1276 = vpop.sfrf %1275
  %p1277 = scmp.eq.s32.totalorder %s1276, 0
  %p1278 = pneg %p1277
  %1280 = shalt.err (%p1278)
  %s1281 = scalar_lea.sflag [#allocation3], 17
  %1282 = vsyncmov %s1281
  %s1283 = vpop.sfrf %1282
  %p1284 = scmp.eq.s32.totalorder %s1283, 0
  %p1285 = pneg %p1284
  %1287 = shalt.err (%p1285)
  %s1288 = scalar_lea.sflag [#allocation3], 18
  %1289 = vsyncmov %s1288
  %s1290 = vpop.sfrf %1289
  %p1291 = scmp.eq.s32.totalorder %s1290, 0
  %p1292 = pneg %p1291
  %1294 = shalt.err (%p1292)
  %s1295 = scalar_lea.sflag [#allocation3], 19
  %1296 = vsyncmov %s1295
  %s1297 = vpop.sfrf %1296
  %p1298 = scmp.eq.s32.totalorder %s1297, 0
  %p1299 = pneg %p1298
  %1301 = shalt.err (%p1299)
  %s1302 = scalar_lea.sflag [#allocation3], 20
  %1303 = vsyncmov %s1302
  %s1304 = vpop.sfrf %1303
  %p1305 = scmp.eq.s32.totalorder %s1304, 0
  %p1306 = pneg %p1305
  %1308 = shalt.err (%p1306)
  %s1309 = scalar_lea.sflag [#allocation3], 21
  %1310 = vsyncmov %s1309
  %s1311 = vpop.sfrf %1310
  %p1312 = scmp.eq.s32.totalorder %s1311, 0
  %p1313 = pneg %p1312
  %1315 = shalt.err (%p1313)
  %s1316 = scalar_lea.sflag [#allocation3], 22
  %1317 = vsyncmov %s1316
  %s1318 = vpop.sfrf %1317
  %p1319 = scmp.eq.s32.totalorder %s1318, 0
  %p1320 = pneg %p1319
  %1322 = shalt.err (%p1320)
  %s1323 = scalar_lea.sflag [#allocation3], 23
  %1324 = vsyncmov %s1323
  %s1325 = vpop.sfrf %1324
  %p1326 = scmp.eq.s32.totalorder %s1325, 0
  %p1327 = pneg %p1326
  %1329 = shalt.err (%p1327)
  %s1330 = scalar_lea.sflag [#allocation3], 24
  %1331 = vsyncmov %s1330
  %s1332 = vpop.sfrf %1331
  %p1333 = scmp.eq.s32.totalorder %s1332, 0
  %p1334 = pneg %p1333
  %1336 = shalt.err (%p1334)
  %s1337 = scalar_lea.sflag [#allocation3], 25
  %1338 = vsyncmov %s1337
  %s1339 = vpop.sfrf %1338
  %p1340 = scmp.eq.s32.totalorder %s1339, 0
  %p1341 = pneg %p1340
  %1343 = shalt.err (%p1341)
  %s1344 = scalar_lea.sflag [#allocation3], 26
  %1345 = vsyncmov %s1344
  %s1346 = vpop.sfrf %1345
  %p1347 = scmp.eq.s32.totalorder %s1346, 0
  %p1348 = pneg %p1347
  %1350 = shalt.err (%p1348)
  %s1351 = scalar_lea.sflag [#allocation3], 27
  %1352 = vsyncmov %s1351
  %s1353 = vpop.sfrf %1352
  %p1354 = scmp.eq.s32.totalorder %s1353, 0
  %p1355 = pneg %p1354
  %1357 = shalt.err (%p1355)
  %s1358 = scalar_lea.sflag [#allocation3], 28
  %1359 = vsyncmov %s1358
  %s1360 = vpop.sfrf %1359
  %p1361 = scmp.eq.s32.totalorder %s1360, 0
  %p1362 = pneg %p1361
  %1364 = shalt.err (%p1362)
  %s1365 = scalar_lea.sflag [#allocation3], 29
  %1366 = vsyncmov %s1365
  %s1367 = vpop.sfrf %1366
  %p1368 = scmp.eq.s32.totalorder %s1367, 0
  %p1369 = pneg %p1368
  %1371 = shalt.err (%p1369)
  %s1372 = scalar_lea.sflag [#allocation3], 30
  %1373 = vsyncmov %s1372
  %s1374 = vpop.sfrf %1373
  %p1375 = scmp.eq.s32.totalorder %s1374, 0
  %p1376 = pneg %p1375
  %1378 = shalt.err (%p1376)
  %s1379 = scalar_lea.sflag [#allocation3], 31
  %1380 = vsyncmov %s1379
  %s1381 = vpop.sfrf %1380
  %p1382 = scmp.eq.s32.totalorder %s1381, 0
  %p1383 = pneg %p1382
  %1385 = shalt.err (%p1383)

</llo_original>
